<compile_context>
chip_gen: v7x
topology: tpu7x:2x2x1
jax: 0.10.0
libtpu: 0.0.40
codegen_flags: <defaults>
</compile_context>

<pallas_src>
import numpy as np
import jax
import jax.numpy as jnp
from jax import lax
from jax.experimental import pallas as pl
from jax.experimental.pallas import tpu as pltpu


# ------------------------- Shared stage math (jnp) -------------------------- #

def _stage(src, h, a_even, a_odd, lat, bias):
    """One fused FPN stage on batch-folded row slabs.

    src:    (N*h, w*Cin)        conv source (batch blocks of h rows each)
    a_even: (2*w*Cin, 2w*Cout)  bf16  [a0; a1] row maps for even output rows
    a_odd:  (2*w*Cin, 2w*Cout)  bf16  [a2; a3] row maps for odd output rows
    lat:    (N*2h, 2w*Cout)     f32   pre-projected lateral feature
    bias:   (1, 2w*Cout)        f32   combined BN bias tiled across the row
    returns (N*2h, 2w*Cout) f32
    """
    M, K = src.shape
    d = a_even.shape[-1]

    # Single cast to bf16; row-shifted copies are built from the bf16 slab.
    sb = src.astype(jnp.bfloat16)
    zero = jnp.zeros((1, K), jnp.bfloat16)
    s_up = jnp.concatenate([zero, sb[:M - 1]], axis=0)   # s_up[i] = src[i-1]
    s_dn = jnp.concatenate([sb[1:], zero], axis=0)       # s_dn[i] = src[i+1]

    # Per-batch conv boundaries: row r of each h-row batch block must not read
    # rows from the neighbouring batch element.
    row = lax.broadcasted_iota(jnp.int32, (M, 1), 0)
    s_up = jnp.where(row % h == 0, 0.0, s_up)
    s_dn = jnp.where(row % h == (h - 1), 0.0, s_dn)

    # K-concatenated parity dots: 2 MXU dots per stage, f32 accumulation.
    even = jnp.dot(jnp.concatenate([s_up, sb], axis=1), a_even,
                   preferred_element_type=jnp.float32)
    odd = jnp.dot(jnp.concatenate([sb, s_dn], axis=1), a_odd,
                  preferred_element_type=jnp.float32)

    # Interleave even/odd output rows -> (2M, d); batch blocks stay contiguous.
    conv = jnp.stack([even, odd], axis=1).reshape(2 * M, d)
    return jnp.maximum(conv + lat + bias, 0.0)


def _project_laterals(x3, x2, x1, kp):
    """Compact (Cl, wide) lateral 1x1+BN projections, done outside the kernel."""
    def proj(x, w):
        y = jnp.einsum("nhwc,cd->nhwd", x.astype(jnp.bfloat16), w,
                       preferred_element_type=jnp.float32)
        n, h, ww, c = y.shape
        return y.reshape(n * h, ww * c)            # batch-folded row slab
    return proj(x3, kp["p3w"]), proj(x2, kp["p2w"]), proj(x1, kp["p1w"])


# ------------------------------ Pallas wrapper ------------------------------ #

def fpn_forward(x1, x2, x3, x4, kp):
    """x1..x4 are NHWC features; returns o2 in NHWC (N, H1, W1, wide)."""
    N, H1, W1, _ = x1.shape
    H4 = x4.shape[1]
    wide = kp["b2"].shape[-1] // W1

    # Lateral projections with compact weights (tiny XLA einsums).
    l3, l2, l1 = _project_laterals(x3, x2, x1, kp)

    # Batch-folded, lane-dense row slab of the conv source; cast to bf16 once.
    x4s = x4.reshape(N * H4, x4.shape[2] * x4.shape[3]).astype(jnp.bfloat16)

    operands = (x4s, l3, l2, l1,
                kp["a4e"], kp["a4o"], kp["a3e"], kp["a3o"],
                kp["a2e"], kp["a2o"],
                kp["b4"], kp["b3"], kp["b2"])

    # Advisory cost hint: 6 MXU dots + all operand/output bytes.
    flops = 0
    for m, ae in ((N * H4, kp["a4e"]), (N * 2 * H4, kp["a3e"]),
                  (N * 4 * H4, kp["a2e"])):
        flops += 2 * 2 * m * ae.shape[0] * ae.shape[1]
    bytes_accessed = N * H1 * W1 * wide * 4 + sum(
        int(np.prod(o.shape)) * o.dtype.itemsize for o in operands)

    def kernel(x4_ref, l3_ref, l2_ref, l1_ref,
               a4e_ref, a4o_ref, a3e_ref, a3o_ref, a2e_ref, a2o_ref,
               b4_ref, b3_ref, b2_ref, o_ref):
        # All three stages fused; o4/o3 stay in VMEM.
        o4 = _stage(x4_ref[...], H4, a4e_ref[...], a4o_ref[...],
                    l3_ref[...], b4_ref[...])                     # (N*4,  128)
        o3 = _stage(o4, 2 * H4, a3e_ref[...], a3o_ref[...],
                    l2_ref[...], b3_ref[...])                     # (N*8,  256)
        o2 = _stage(o3, 4 * H4, a2e_ref[...], a2o_ref[...],
                    l1_ref[...], b2_ref[...])                     # (N*16, 512)
        o_ref[...] = o2                                           # lane-dense store

    out = pl.pallas_call(
        kernel,
        out_shape=jax.ShapeDtypeStruct((N * H1, W1 * wide), jnp.float32),
        cost_estimate=pl.CostEstimate(flops=int(flops), transcendentals=0,
                                      bytes_accessed=int(bytes_accessed)),
    )(*operands)
    return out.reshape(N, H1, W1, wide)


# ---------------------- Parameter folding / preprocessing ------------------ #

def _bn_fold(key, c, eps=1e-5):
    k1, k2, k3, k4 = jax.random.split(key, 4)
    gamma = 1.0 + 0.1 * jax.random.normal(k1, (c,), jnp.float32)
    beta = 0.1 * jax.random.normal(k2, (c,), jnp.float32)
    mean = 0.1 * jax.random.normal(k3, (c,), jnp.float32)
    var = 1.0 + 0.2 * jnp.abs(jax.random.normal(k4, (c,), jnp.float32))
    scale = gamma / jnp.sqrt(var + eps)
    bias = beta - mean * scale
    return scale, bias


def _conv_w(key, kh, kw, cin, cout):
    fan_in = kh * kw * cin
    return (jax.random.normal(key, (kh, kw, cin, cout), jnp.float32)
            / np.sqrt(fan_in))


def _row_map_matrix(wrow, w):
    """wrow: (3, Cin, Cout) column taps -> row-map matrix (w*Cin, 2w*Cout)."""
    wrow = np.asarray(wrow)
    _, cin, cout = wrow.shape
    w0, w1, w2 = wrow[0], wrow[1], wrow[2]
    a = np.zeros((w, cin, 2 * w, cout), np.float32)
    for j in range(w):
        a[j, :, 2 * j, :] += w1 + w2           # even out col <- same src col
        if j - 1 >= 0:
            a[j - 1, :, 2 * j, :] += w0        # even out col <- left src col
        a[j, :, 2 * j + 1, :] += w0 + w1       # odd out col  <- same src col
        if j + 1 < w:
            a[j + 1, :, 2 * j + 1, :] += w2    # odd out col  <- right src col
    return jnp.asarray(a.reshape(w * cin, 2 * w * cout))


def _row_maps_packed(w3, w):
    """w3: (3,3,Cin,Cout) BN-folded conv weights ->
    a_even, a_odd each (2*w*Cin, 2w*Cout), K-concatenated per output-row parity."""
    a_even = jnp.concatenate([
        _row_map_matrix(w3[0], w),             # even output rows, top source row
        _row_map_matrix(w3[1] + w3[2], w),     # even output rows, bottom source row
    ], axis=0)
    a_odd = jnp.concatenate([
        _row_map_matrix(w3[0] + w3[1], w),     # odd output rows, top source row
        _row_map_matrix(w3[2], w),             # odd output rows, bottom source row
    ], axis=0)
    return a_even, a_odd


def init_params(key, wide):
    """BN-folded FPN parameters (f32), used by the reference implementation."""
    ks = jax.random.split(key, 12)
    u4_w = _conv_w(ks[0], 3, 3, 320, wide); s_u4, b_u4 = _bn_fold(ks[1], wide)
    u3_w = _conv_w(ks[2], 3, 3, wide, wide); s_u3, b_u3 = _bn_fold(ks[3], wide)
    u2_w = _conv_w(ks[4], 3, 3, wide, wide); s_u2, b_u2 = _bn_fold(ks[5], wide)
    p3_w = _conv_w(ks[6], 1, 1, 96, wide)[0, 0]; s_p3, b_p3 = _bn_fold(ks[7], wide)
    p2_w = _conv_w(ks[8], 1, 1, 32, wide)[0, 0]; s_p2, b_p2 = _bn_fold(ks[9], wide)
    p1_w = _conv_w(ks[10], 1, 1, 24, wide)[0, 0]; s_p1, b_p1 = _bn_fold(ks[11], wide)

    return {
        "u4_w": u4_w * s_u4, "u3_w": u3_w * s_u3, "u2_w": u2_w * s_u2,
        "p3_w": p3_w * s_p3[None, :], "p2_w": p2_w * s_p2[None, :],
        "p1_w": p1_w * s_p1[None, :],
        "b4": b_u4 + b_p3, "b3": b_u3 + b_p2, "b2": b_u2 + b_p1,
    }


def pack_params(raw):
    """Fold upsample+pad+conv3x3 into K-concatenated per-parity row maps, keep
    the lateral 1x1 weights compact (projected outside the kernel), tile the
    biases, and cast MXU operands to bf16 (biases stay f32)."""
    bf = lambda x: x.astype(jnp.bfloat16)
    a4e, a4o = _row_maps_packed(raw["u4_w"], 2)   # x4 is 2 wide
    a3e, a3o = _row_maps_packed(raw["u3_w"], 4)   # o4 is 4 wide
    a2e, a2o = _row_maps_packed(raw["u2_w"], 8)   # o3 is 8 wide
    return {
        "a4e": bf(a4e), "a4o": bf(a4o),
        "a3e": bf(a3e), "a3o": bf(a3o),
        "a2e": bf(a2e), "a2o": bf(a2o),
        "p3w": bf(raw["p3_w"]), "p2w": bf(raw["p2_w"]), "p1w": bf(raw["p1_w"]),
        # output widths of the three stages: 4, 8, 16.
        "b4": jnp.tile(raw["b4"], 4)[None, :],
        "b3": jnp.tile(raw["b3"], 8)[None, :],
        "b2": jnp.tile(raw["b2"], 16)[None, :],
    }


# ------------------------------ References --------------------------------- #

def ref_forward_f32(x1, x2, x3, x4, raw):
    """True module semantics (upsample -> conv3x3 -> BN, 1x1 -> BN, add, ReLU)."""
    def stage(src, w3, lat, wl, b):
        up = jnp.repeat(jnp.repeat(src, 2, axis=1), 2, axis=2)
        c = lax.conv_general_dilated(
            up, w3, window_strides=(1, 1), padding="SAME",
            dimension_numbers=("NHWC", "HWIO", "NHWC"))
        l = jnp.einsum("nhwc,cd->nhwd", lat, wl)
        return jax.nn.relu(c + l + b)

    o4 = stage(x4, raw["u4_w"], x3, raw["p3_w"], raw["b4"])
    o3 = stage(o4, raw["u3_w"], x2, raw["p2_w"], raw["b3"])
    o2 = stage(o3, raw["u2_w"], x1, raw["p1_w"], raw["b2"])
    return o2


def ref_forward_packed(x1, x2, x3, x4, kp):
    """Exact same batch-folded row-map math and bf16/f32 precision as the
    kernel path, but in plain JAX (shares _stage / _project_laterals)."""
    N, H1, W1, _ = x1.shape
    H4 = x4.shape[1]
    l3, l2, l1 = _project_laterals(x3, x2, x1, kp)
    x4s = x4.reshape(N * H4, -1).astype(jnp.bfloat16)
    o4 = _stage(x4s, H4, kp["a4e"], kp["a4o"], l3, kp["b4"])
    o3 = _stage(o4, 2 * H4, kp["a3e"], kp["a3o"], l2, kp["b3"])
    o2 = _stage(o3, 4 * H4, kp["a2e"], kp["a2o"], l1, kp["b2"])
    return o2.reshape(N, H1, W1, -1)


# ---------------------------------- Main ------------------------------------ #

if __name__ == "__main__":
    key = jax.random.PRNGKey(0)
    k_in, k_p = jax.random.split(key)
    k1, k2, k3, k4 = jax.random.split(k_in, 4)

    N, wide = 2, 32
    # PyTorch-layout (NCHW) example inputs matching FPN's channel counts and
    # the x4 -> x3 -> x2 -> x1 2x spatial ladder.
    x1_nchw = jax.random.normal(k1, (N, 24, 16, 16), jnp.float32)
    x2_nchw = jax.random.normal(k2, (N, 32, 8, 8), jnp.float32)
    x3_nchw = jax.random.normal(k3, (N, 96, 4, 4), jnp.float32)
    x4_nchw = jax.random.normal(k4, (N, 320, 2, 2), jnp.float32)

    to_nhwc = lambda x: jnp.transpose(x, (0, 2, 3, 1))
    x1, x2, x3, x4 = map(to_nhwc, (x1_nchw, x2_nchw, x3_nchw, x4_nchw))

    raw = init_params(k_p, wide)
    kp = pack_params(raw)

    fwd = jax.jit(fpn_forward)
    out = jax.block_until_ready(fwd(x1, x2, x3, x4, kp))
    assert out.shape == (N, 16, 16, wide)

    # Check 1 (tight): identical math & precision (bf16 MXU operands, f32
    # accumulation/epilogue, same batch folding) in plain JAX -> validates the
    # Pallas kernel plumbing and layouts.
    ref_p = jax.block_until_ready(ref_forward_packed(x1, x2, x3, x4, kp))
    np.testing.assert_allclose(np.asarray(out), np.asarray(ref_p),
                               rtol=2e-3, atol=2e-3)

    # Check 2 (semantic): true f32 module forward (upsample2x -> conv3x3 -> BN,
    # 1x1 lateral -> BN, add, ReLU) -> validates BN folding and the row-map
    # weight construction; tolerance sized for bf16 operands.
    ref_f = jax.block_until_ready(ref_forward_f32(x1, x2, x3, x4, raw))
    np.testing.assert_allclose(np.asarray(out), np.asarray(ref_f),
                               rtol=5e-2, atol=5e-2)

    print("KERNEL_OK")
</pallas_src>

<mosaic_0001>
module attributes {stable_mosaic.version = 11 : i64} {
  func.func @kernel(%arg0: memref<4x640xbf16, #tpu.memory_space<vmem>>, %arg1: memref<8x128xf32, #tpu.memory_space<vmem>>, %arg2: memref<16x256xf32, #tpu.memory_space<vmem>>, %arg3: memref<32x512xf32, #tpu.memory_space<vmem>>, %arg4: memref<1280x128xbf16, #tpu.memory_space<vmem>>, %arg5: memref<1280x128xbf16, #tpu.memory_space<vmem>>, %arg6: memref<256x256xbf16, #tpu.memory_space<vmem>>, %arg7: memref<256x256xbf16, #tpu.memory_space<vmem>>, %arg8: memref<512x512xbf16, #tpu.memory_space<vmem>>, %arg9: memref<512x512xbf16, #tpu.memory_space<vmem>>, %arg10: memref<1x128xf32, #tpu.memory_space<vmem>>, %arg11: memref<1x256xf32, #tpu.memory_space<vmem>>, %arg12: memref<1x512xf32, #tpu.memory_space<vmem>>, %arg13: memref<32x512xf32, #tpu.memory_space<vmem>>) attributes {dimension_semantics = [], scalar_prefetch = 0 : i64, scratch_operands = 0 : i64, tpu.core_type = #tpu.core_type<tc>} {
    %c0 = arith.constant 0 : index
    %c0_0 = arith.constant 0 : index
    %0 = vector.load %arg0[%c0, %c0_0] : memref<4x640xbf16, #tpu.memory_space<vmem>>, vector<4x640xbf16>
    %c0_1 = arith.constant 0 : index
    %c0_2 = arith.constant 0 : index
    %1 = vector.load %arg4[%c0_1, %c0_2] : memref<1280x128xbf16, #tpu.memory_space<vmem>>, vector<1280x128xbf16>
    %c0_3 = arith.constant 0 : index
    %c0_4 = arith.constant 0 : index
    %2 = vector.load %arg5[%c0_3, %c0_4] : memref<1280x128xbf16, #tpu.memory_space<vmem>>, vector<1280x128xbf16>
    %c0_5 = arith.constant 0 : index
    %c0_6 = arith.constant 0 : index
    %3 = vector.load %arg1[%c0_5, %c0_6] : memref<8x128xf32, #tpu.memory_space<vmem>>, vector<8x128xf32>
    %c0_7 = arith.constant 0 : index
    %c0_8 = arith.constant 0 : index
    %4 = vector.load %arg10[%c0_7, %c0_8] : memref<1x128xf32, #tpu.memory_space<vmem>>, vector<1x128xf32>
    %cst = arith.constant 0.000000e+00 : bf16
    %5 = vector.broadcast %cst : bf16 to vector<1x640xbf16>
    %6 = vector.extract_strided_slice %0 {offsets = [0, 0], sizes = [3, 640], strides = [1, 1]} : vector<4x640xbf16> to vector<3x640xbf16>
    %7 = tpu.concatenate %5, %6 in 0 : vector<1x640xbf16>, vector<3x640xbf16> -> vector<4x640xbf16>
    %8 = vector.extract_strided_slice %0 {offsets = [1, 0], sizes = [3, 640], strides = [1, 1]} : vector<4x640xbf16> to vector<3x640xbf16>
    %9 = tpu.concatenate %8, %5 in 0 : vector<3x640xbf16>, vector<1x640xbf16> -> vector<4x640xbf16>
    %10 = tpu.iota {dimensions = array<i32: 0>} : vector<4x1xi32>
    %c2_i32 = arith.constant 2 : i32
    %c0_i32 = arith.constant 0 : i32
    %11 = arith.cmpi eq, %c2_i32, %c0_i32 : i32
    %c1_i32 = arith.constant 1 : i32
    %12 = arith.select %11, %c1_i32, %c2_i32 : i32
    %13 = vector.broadcast %12 : i32 to vector<4x1xi32>
    %14 = arith.remsi %10, %13 : vector<4x1xi32>
    %c0_i32_9 = arith.constant 0 : i32
    %15 = vector.broadcast %c0_i32_9 : i32 to vector<4x1xi32>
    %16 = arith.cmpi ne, %14, %15 : vector<4x1xi32>
    %c0_i32_10 = arith.constant 0 : i32
    %17 = vector.broadcast %c0_i32_10 : i32 to vector<4x1xi32>
    %18 = arith.cmpi slt, %14, %17 : vector<4x1xi32>
    %c0_i32_11 = arith.constant 0 : i32
    %19 = arith.cmpi slt, %12, %c0_i32_11 : i32
    %20 = vector.broadcast %19 : i1 to vector<4x1xi1>
    %21 = vector.broadcast %20 : vector<4x1xi1> to vector<4x1xi1>
    %22 = arith.xori %18, %21 : vector<4x1xi1>
    %23 = arith.andi %22, %16 : vector<4x1xi1>
    %24 = vector.broadcast %12 : i32 to vector<4x1xi32>
    %25 = arith.addi %14, %24 : vector<4x1xi32>
    %26 = arith.select %23, %25, %14 : vector<4x1xi1>, vector<4x1xi32>
    %c0_i32_12 = arith.constant 0 : i32
    %27 = vector.broadcast %c0_i32_12 : i32 to vector<4x1xi32>
    %28 = arith.cmpi eq, %26, %27 : vector<4x1xi32>
    %cst_13 = arith.constant 0.000000e+00 : f32
    %29 = arith.truncf %cst_13 : f32 to bf16
    %30 = vector.shape_cast %28 : vector<4x1xi1> to vector<4x1xi1>
    %31 = vector.broadcast %30 : vector<4x1xi1> to vector<4x640xi1>
    %32 = vector.broadcast %29 : bf16 to vector<4x640xbf16>
    %33 = arith.select %31, %32, %7 : vector<4x640xi1>, vector<4x640xbf16>
    %c2_i32_14 = arith.constant 2 : i32
    %c0_i32_15 = arith.constant 0 : i32
    %34 = arith.cmpi eq, %c2_i32_14, %c0_i32_15 : i32
    %c1_i32_16 = arith.constant 1 : i32
    %35 = arith.select %34, %c1_i32_16, %c2_i32_14 : i32
    %36 = vector.broadcast %35 : i32 to vector<4x1xi32>
    %37 = arith.remsi %10, %36 : vector<4x1xi32>
    %c0_i32_17 = arith.constant 0 : i32
    %38 = vector.broadcast %c0_i32_17 : i32 to vector<4x1xi32>
    %39 = arith.cmpi ne, %37, %38 : vector<4x1xi32>
    %c0_i32_18 = arith.constant 0 : i32
    %40 = vector.broadcast %c0_i32_18 : i32 to vector<4x1xi32>
    %41 = arith.cmpi slt, %37, %40 : vector<4x1xi32>
    %c0_i32_19 = arith.constant 0 : i32
    %42 = arith.cmpi slt, %35, %c0_i32_19 : i32
    %43 = vector.broadcast %42 : i1 to vector<4x1xi1>
    %44 = vector.broadcast %43 : vector<4x1xi1> to vector<4x1xi1>
    %45 = arith.xori %41, %44 : vector<4x1xi1>
    %46 = arith.andi %45, %39 : vector<4x1xi1>
    %47 = vector.broadcast %35 : i32 to vector<4x1xi32>
    %48 = arith.addi %37, %47 : vector<4x1xi32>
    %49 = arith.select %46, %48, %37 : vector<4x1xi1>, vector<4x1xi32>
    %c1_i32_20 = arith.constant 1 : i32
    %50 = vector.broadcast %c1_i32_20 : i32 to vector<4x1xi32>
    %51 = arith.cmpi eq, %49, %50 : vector<4x1xi32>
    %cst_21 = arith.constant 0.000000e+00 : f32
    %52 = arith.truncf %cst_21 : f32 to bf16
    %53 = vector.shape_cast %51 : vector<4x1xi1> to vector<4x1xi1>
    %54 = vector.broadcast %53 : vector<4x1xi1> to vector<4x640xi1>
    %55 = vector.broadcast %52 : bf16 to vector<4x640xbf16>
    %56 = arith.select %54, %55, %9 : vector<4x640xi1>, vector<4x640xbf16>
    %57 = tpu.concatenate %33, %0 in 1 : vector<4x640xbf16>, vector<4x640xbf16> -> vector<4x1280xbf16>
    %cst_22 = arith.constant dense<0.000000e+00> : vector<4x128xf32>
    %58 = tpu.matmul %57, %1, %cst_22 {dimension_numbers = #tpu.dot_dimension_numbers<[1], [0], [0], [1], [0, 0, 1, 1], [], []>} : vector<4x1280xbf16>, vector<1280x128xbf16>, vector<4x128xf32> -> vector<4x128xf32>
    %59 = tpu.concatenate %0, %56 in 1 : vector<4x640xbf16>, vector<4x640xbf16> -> vector<4x1280xbf16>
    %cst_23 = arith.constant dense<0.000000e+00> : vector<4x128xf32>
    %60 = tpu.matmul %59, %2, %cst_23 {dimension_numbers = #tpu.dot_dimension_numbers<[1], [0], [0], [1], [0, 0, 1, 1], [], []>} : vector<4x1280xbf16>, vector<1280x128xbf16>, vector<4x128xf32> -> vector<4x128xf32>
    %61 = vector.shape_cast %58 : vector<4x128xf32> to vector<4x1x128xf32>
    %62 = vector.shape_cast %60 : vector<4x128xf32> to vector<4x1x128xf32>
    %63 = tpu.concatenate %61, %62 in 1 : vector<4x1x128xf32>, vector<4x1x128xf32> -> vector<4x2x128xf32>
    %64 = vector.shape_cast %63 : vector<4x2x128xf32> to vector<8x128xf32>
    %65 = arith.addf %64, %3 : vector<8x128xf32>
    %66 = vector.broadcast %4 : vector<1x128xf32> to vector<8x128xf32>
    %67 = arith.addf %65, %66 : vector<8x128xf32>
    %cst_24 = arith.constant 0.000000e+00 : f32
    %68 = vector.broadcast %cst_24 : f32 to vector<8x128xf32>
    %69 = arith.maximumf %67, %68 : vector<8x128xf32>
    %c0_25 = arith.constant 0 : index
    %c0_26 = arith.constant 0 : index
    %70 = vector.load %arg6[%c0_25, %c0_26] : memref<256x256xbf16, #tpu.memory_space<vmem>>, vector<256x256xbf16>
    %c0_27 = arith.constant 0 : index
    %c0_28 = arith.constant 0 : index
    %71 = vector.load %arg7[%c0_27, %c0_28] : memref<256x256xbf16, #tpu.memory_space<vmem>>, vector<256x256xbf16>
    %c0_29 = arith.constant 0 : index
    %c0_30 = arith.constant 0 : index
    %72 = vector.load %arg2[%c0_29, %c0_30] : memref<16x256xf32, #tpu.memory_space<vmem>>, vector<16x256xf32>
    %c0_31 = arith.constant 0 : index
    %c0_32 = arith.constant 0 : index
    %73 = vector.load %arg11[%c0_31, %c0_32] : memref<1x256xf32, #tpu.memory_space<vmem>>, vector<1x256xf32>
    %74 = arith.truncf %69 : vector<8x128xf32> to vector<8x128xbf16>
    %cst_33 = arith.constant 0.000000e+00 : bf16
    %75 = vector.broadcast %cst_33 : bf16 to vector<1x128xbf16>
    %76 = vector.extract_strided_slice %74 {offsets = [0, 0], sizes = [7, 128], strides = [1, 1]} : vector<8x128xbf16> to vector<7x128xbf16>
    %77 = tpu.concatenate %75, %76 in 0 : vector<1x128xbf16>, vector<7x128xbf16> -> vector<8x128xbf16>
    %78 = vector.extract_strided_slice %74 {offsets = [1, 0], sizes = [7, 128], strides = [1, 1]} : vector<8x128xbf16> to vector<7x128xbf16>
    %79 = tpu.concatenate %78, %75 in 0 : vector<7x128xbf16>, vector<1x128xbf16> -> vector<8x128xbf16>
    %80 = tpu.iota {dimensions = array<i32: 0>} : vector<8x1xi32>
    %c4_i32 = arith.constant 4 : i32
    %c0_i32_34 = arith.constant 0 : i32
    %81 = arith.cmpi eq, %c4_i32, %c0_i32_34 : i32
    %c1_i32_35 = arith.constant 1 : i32
    %82 = arith.select %81, %c1_i32_35, %c4_i32 : i32
    %83 = vector.broadcast %82 : i32 to vector<8x1xi32>
    %84 = arith.remsi %80, %83 : vector<8x1xi32>
    %c0_i32_36 = arith.constant 0 : i32
    %85 = vector.broadcast %c0_i32_36 : i32 to vector<8x1xi32>
    %86 = arith.cmpi ne, %84, %85 : vector<8x1xi32>
    %c0_i32_37 = arith.constant 0 : i32
    %87 = vector.broadcast %c0_i32_37 : i32 to vector<8x1xi32>
    %88 = arith.cmpi slt, %84, %87 : vector<8x1xi32>
    %c0_i32_38 = arith.constant 0 : i32
    %89 = arith.cmpi slt, %82, %c0_i32_38 : i32
    %90 = vector.broadcast %89 : i1 to vector<8x1xi1>
    %91 = vector.broadcast %90 : vector<8x1xi1> to vector<8x1xi1>
    %92 = arith.xori %88, %91 : vector<8x1xi1>
    %93 = arith.andi %92, %86 : vector<8x1xi1>
    %94 = vector.broadcast %82 : i32 to vector<8x1xi32>
    %95 = arith.addi %84, %94 : vector<8x1xi32>
    %96 = arith.select %93, %95, %84 : vector<8x1xi1>, vector<8x1xi32>
    %c0_i32_39 = arith.constant 0 : i32
    %97 = vector.broadcast %c0_i32_39 : i32 to vector<8x1xi32>
    %98 = arith.cmpi eq, %96, %97 : vector<8x1xi32>
    %cst_40 = arith.constant 0.000000e+00 : f32
    %99 = arith.truncf %cst_40 : f32 to bf16
    %100 = vector.shape_cast %98 : vector<8x1xi1> to vector<8x1xi1>
    %101 = vector.broadcast %100 : vector<8x1xi1> to vector<8x128xi1>
    %102 = vector.broadcast %99 : bf16 to vector<8x128xbf16>
    %103 = arith.select %101, %102, %77 : vector<8x128xi1>, vector<8x128xbf16>
    %c4_i32_41 = arith.constant 4 : i32
    %c0_i32_42 = arith.constant 0 : i32
    %104 = arith.cmpi eq, %c4_i32_41, %c0_i32_42 : i32
    %c1_i32_43 = arith.constant 1 : i32
    %105 = arith.select %104, %c1_i32_43, %c4_i32_41 : i32
    %106 = vector.broadcast %105 : i32 to vector<8x1xi32>
    %107 = arith.remsi %80, %106 : vector<8x1xi32>
    %c0_i32_44 = arith.constant 0 : i32
    %108 = vector.broadcast %c0_i32_44 : i32 to vector<8x1xi32>
    %109 = arith.cmpi ne, %107, %108 : vector<8x1xi32>
    %c0_i32_45 = arith.constant 0 : i32
    %110 = vector.broadcast %c0_i32_45 : i32 to vector<8x1xi32>
    %111 = arith.cmpi slt, %107, %110 : vector<8x1xi32>
    %c0_i32_46 = arith.constant 0 : i32
    %112 = arith.cmpi slt, %105, %c0_i32_46 : i32
    %113 = vector.broadcast %112 : i1 to vector<8x1xi1>
    %114 = vector.broadcast %113 : vector<8x1xi1> to vector<8x1xi1>
    %115 = arith.xori %111, %114 : vector<8x1xi1>
    %116 = arith.andi %115, %109 : vector<8x1xi1>
    %117 = vector.broadcast %105 : i32 to vector<8x1xi32>
    %118 = arith.addi %107, %117 : vector<8x1xi32>
    %119 = arith.select %116, %118, %107 : vector<8x1xi1>, vector<8x1xi32>
    %c3_i32 = arith.constant 3 : i32
    %120 = vector.broadcast %c3_i32 : i32 to vector<8x1xi32>
    %121 = arith.cmpi eq, %119, %120 : vector<8x1xi32>
    %cst_47 = arith.constant 0.000000e+00 : f32
    %122 = arith.truncf %cst_47 : f32 to bf16
    %123 = vector.shape_cast %121 : vector<8x1xi1> to vector<8x1xi1>
    %124 = vector.broadcast %123 : vector<8x1xi1> to vector<8x128xi1>
    %125 = vector.broadcast %122 : bf16 to vector<8x128xbf16>
    %126 = arith.select %124, %125, %79 : vector<8x128xi1>, vector<8x128xbf16>
    %127 = tpu.concatenate %103, %74 in 1 : vector<8x128xbf16>, vector<8x128xbf16> -> vector<8x256xbf16>
    %cst_48 = arith.constant dense<0.000000e+00> : vector<8x256xf32>
    %128 = tpu.matmul %127, %70, %cst_48 {dimension_numbers = #tpu.dot_dimension_numbers<[1], [0], [0], [1], [0, 0, 1, 1], [], []>} : vector<8x256xbf16>, vector<256x256xbf16>, vector<8x256xf32> -> vector<8x256xf32>
    %129 = tpu.concatenate %74, %126 in 1 : vector<8x128xbf16>, vector<8x128xbf16> -> vector<8x256xbf16>
    %cst_49 = arith.constant dense<0.000000e+00> : vector<8x256xf32>
    %130 = tpu.matmul %129, %71, %cst_49 {dimension_numbers = #tpu.dot_dimension_numbers<[1], [0], [0], [1], [0, 0, 1, 1], [], []>} : vector<8x256xbf16>, vector<256x256xbf16>, vector<8x256xf32> -> vector<8x256xf32>
    %131 = vector.shape_cast %128 : vector<8x256xf32> to vector<8x1x256xf32>
    %132 = vector.shape_cast %130 : vector<8x256xf32> to vector<8x1x256xf32>
    %133 = tpu.concatenate %131, %132 in 1 : vector<8x1x256xf32>, vector<8x1x256xf32> -> vector<8x2x256xf32>
    %134 = vector.shape_cast %133 : vector<8x2x256xf32> to vector<16x256xf32>
    %135 = arith.addf %134, %72 : vector<16x256xf32>
    %136 = vector.broadcast %73 : vector<1x256xf32> to vector<16x256xf32>
    %137 = arith.addf %135, %136 : vector<16x256xf32>
    %cst_50 = arith.constant 0.000000e+00 : f32
    %138 = vector.broadcast %cst_50 : f32 to vector<16x256xf32>
    %139 = arith.maximumf %137, %138 : vector<16x256xf32>
    %c0_51 = arith.constant 0 : index
    %c0_52 = arith.constant 0 : index
    %140 = vector.load %arg8[%c0_51, %c0_52] : memref<512x512xbf16, #tpu.memory_space<vmem>>, vector<512x512xbf16>
    %c0_53 = arith.constant 0 : index
    %c0_54 = arith.constant 0 : index
    %141 = vector.load %arg9[%c0_53, %c0_54] : memref<512x512xbf16, #tpu.memory_space<vmem>>, vector<512x512xbf16>
    %c0_55 = arith.constant 0 : index
    %c0_56 = arith.constant 0 : index
    %142 = vector.load %arg3[%c0_55, %c0_56] : memref<32x512xf32, #tpu.memory_space<vmem>>, vector<32x512xf32>
    %c0_57 = arith.constant 0 : index
    %c0_58 = arith.constant 0 : index
    %143 = vector.load %arg12[%c0_57, %c0_58] : memref<1x512xf32, #tpu.memory_space<vmem>>, vector<1x512xf32>
    %144 = arith.truncf %139 : vector<16x256xf32> to vector<16x256xbf16>
    %cst_59 = arith.constant 0.000000e+00 : bf16
    %145 = vector.broadcast %cst_59 : bf16 to vector<1x256xbf16>
    %146 = vector.extract_strided_slice %144 {offsets = [0, 0], sizes = [15, 256], strides = [1, 1]} : vector<16x256xbf16> to vector<15x256xbf16>
    %147 = tpu.concatenate %145, %146 in 0 : vector<1x256xbf16>, vector<15x256xbf16> -> vector<16x256xbf16>
    %148 = vector.extract_strided_slice %144 {offsets = [1, 0], sizes = [15, 256], strides = [1, 1]} : vector<16x256xbf16> to vector<15x256xbf16>
    %149 = tpu.concatenate %148, %145 in 0 : vector<15x256xbf16>, vector<1x256xbf16> -> vector<16x256xbf16>
    %150 = tpu.iota {dimensions = array<i32: 0>} : vector<16x1xi32>
    %c8_i32 = arith.constant 8 : i32
    %c0_i32_60 = arith.constant 0 : i32
    %151 = arith.cmpi eq, %c8_i32, %c0_i32_60 : i32
    %c1_i32_61 = arith.constant 1 : i32
    %152 = arith.select %151, %c1_i32_61, %c8_i32 : i32
    %153 = vector.broadcast %152 : i32 to vector<16x1xi32>
    %154 = arith.remsi %150, %153 : vector<16x1xi32>
    %c0_i32_62 = arith.constant 0 : i32
    %155 = vector.broadcast %c0_i32_62 : i32 to vector<16x1xi32>
    %156 = arith.cmpi ne, %154, %155 : vector<16x1xi32>
    %c0_i32_63 = arith.constant 0 : i32
    %157 = vector.broadcast %c0_i32_63 : i32 to vector<16x1xi32>
    %158 = arith.cmpi slt, %154, %157 : vector<16x1xi32>
    %c0_i32_64 = arith.constant 0 : i32
    %159 = arith.cmpi slt, %152, %c0_i32_64 : i32
    %160 = vector.broadcast %159 : i1 to vector<16x1xi1>
    %161 = vector.broadcast %160 : vector<16x1xi1> to vector<16x1xi1>
    %162 = arith.xori %158, %161 : vector<16x1xi1>
    %163 = arith.andi %162, %156 : vector<16x1xi1>
    %164 = vector.broadcast %152 : i32 to vector<16x1xi32>
    %165 = arith.addi %154, %164 : vector<16x1xi32>
    %166 = arith.select %163, %165, %154 : vector<16x1xi1>, vector<16x1xi32>
    %c0_i32_65 = arith.constant 0 : i32
    %167 = vector.broadcast %c0_i32_65 : i32 to vector<16x1xi32>
    %168 = arith.cmpi eq, %166, %167 : vector<16x1xi32>
    %cst_66 = arith.constant 0.000000e+00 : f32
    %169 = arith.truncf %cst_66 : f32 to bf16
    %170 = vector.shape_cast %168 : vector<16x1xi1> to vector<16x1xi1>
    %171 = vector.broadcast %170 : vector<16x1xi1> to vector<16x256xi1>
    %172 = vector.broadcast %169 : bf16 to vector<16x256xbf16>
    %173 = arith.select %171, %172, %147 : vector<16x256xi1>, vector<16x256xbf16>
    %c8_i32_67 = arith.constant 8 : i32
    %c0_i32_68 = arith.constant 0 : i32
    %174 = arith.cmpi eq, %c8_i32_67, %c0_i32_68 : i32
    %c1_i32_69 = arith.constant 1 : i32
    %175 = arith.select %174, %c1_i32_69, %c8_i32_67 : i32
    %176 = vector.broadcast %175 : i32 to vector<16x1xi32>
    %177 = arith.remsi %150, %176 : vector<16x1xi32>
    %c0_i32_70 = arith.constant 0 : i32
    %178 = vector.broadcast %c0_i32_70 : i32 to vector<16x1xi32>
    %179 = arith.cmpi ne, %177, %178 : vector<16x1xi32>
    %c0_i32_71 = arith.constant 0 : i32
    %180 = vector.broadcast %c0_i32_71 : i32 to vector<16x1xi32>
    %181 = arith.cmpi slt, %177, %180 : vector<16x1xi32>
    %c0_i32_72 = arith.constant 0 : i32
    %182 = arith.cmpi slt, %175, %c0_i32_72 : i32
    %183 = vector.broadcast %182 : i1 to vector<16x1xi1>
    %184 = vector.broadcast %183 : vector<16x1xi1> to vector<16x1xi1>
    %185 = arith.xori %181, %184 : vector<16x1xi1>
    %186 = arith.andi %185, %179 : vector<16x1xi1>
    %187 = vector.broadcast %175 : i32 to vector<16x1xi32>
    %188 = arith.addi %177, %187 : vector<16x1xi32>
    %189 = arith.select %186, %188, %177 : vector<16x1xi1>, vector<16x1xi32>
    %c7_i32 = arith.constant 7 : i32
    %190 = vector.broadcast %c7_i32 : i32 to vector<16x1xi32>
    %191 = arith.cmpi eq, %189, %190 : vector<16x1xi32>
    %cst_73 = arith.constant 0.000000e+00 : f32
    %192 = arith.truncf %cst_73 : f32 to bf16
    %193 = vector.shape_cast %191 : vector<16x1xi1> to vector<16x1xi1>
    %194 = vector.broadcast %193 : vector<16x1xi1> to vector<16x256xi1>
    %195 = vector.broadcast %192 : bf16 to vector<16x256xbf16>
    %196 = arith.select %194, %195, %149 : vector<16x256xi1>, vector<16x256xbf16>
    %197 = tpu.concatenate %173, %144 in 1 : vector<16x256xbf16>, vector<16x256xbf16> -> vector<16x512xbf16>
    %cst_74 = arith.constant dense<0.000000e+00> : vector<16x512xf32>
    %198 = tpu.matmul %197, %140, %cst_74 {dimension_numbers = #tpu.dot_dimension_numbers<[1], [0], [0], [1], [0, 0, 1, 1], [], []>} : vector<16x512xbf16>, vector<512x512xbf16>, vector<16x512xf32> -> vector<16x512xf32>
    %199 = tpu.concatenate %144, %196 in 1 : vector<16x256xbf16>, vector<16x256xbf16> -> vector<16x512xbf16>
    %cst_75 = arith.constant dense<0.000000e+00> : vector<16x512xf32>
    %200 = tpu.matmul %199, %141, %cst_75 {dimension_numbers = #tpu.dot_dimension_numbers<[1], [0], [0], [1], [0, 0, 1, 1], [], []>} : vector<16x512xbf16>, vector<512x512xbf16>, vector<16x512xf32> -> vector<16x512xf32>
    %201 = vector.shape_cast %198 : vector<16x512xf32> to vector<16x1x512xf32>
    %202 = vector.shape_cast %200 : vector<16x512xf32> to vector<16x1x512xf32>
    %203 = tpu.concatenate %201, %202 in 1 : vector<16x1x512xf32>, vector<16x1x512xf32> -> vector<16x2x512xf32>
    %204 = vector.shape_cast %203 : vector<16x2x512xf32> to vector<32x512xf32>
    %205 = arith.addf %204, %142 : vector<32x512xf32>
    %206 = vector.broadcast %143 : vector<1x512xf32> to vector<32x512xf32>
    %207 = arith.addf %205, %206 : vector<32x512xf32>
    %cst_76 = arith.constant 0.000000e+00 : f32
    %208 = vector.broadcast %cst_76 : f32 to vector<32x512xf32>
    %209 = arith.maximumf %207, %208 : vector<32x512xf32>
    %c0_77 = arith.constant 0 : index
    %c0_78 = arith.constant 0 : index
    %210 = vector.load %arg13[%c0_77, %c0_78] : memref<32x512xf32, #tpu.memory_space<vmem>>, vector<32x512xf32>
    tpu.vector_store %arg13[%c0_77, %c0_78], %209 {strides = array<i32>} : memref<32x512xf32, #tpu.memory_space<vmem>>, vector<32x512xf32>,
    return
  }
}

</mosaic_0001>

<llo_original>
// kernel: fpn_forward.1
$region0: #{fpn_forward.1}
  #allocation0 [shape = 'u32[]', space=smem, size = 0x4, offset = 0x4, fixed_abs, tag = 'smem constant byte address 0x4 - core index']
  #allocation1 [shape = 'u32[144,128]{1,0:T(1,128)}', space=vmem, size = 0x12000, scoped, tag = 'internal scratch']
  %s0 = inlined_call_operand.vmem [shape: bf16[4,640], index: 0, kind: input, shape index: {}]
  %s1 = inlined_call_operand.vmem [shape: f32[8,128], index: 1, kind: input, shape index: {}]
  %s2 = inlined_call_operand.vmem [shape: f32[16,256], index: 2, kind: input, shape index: {}]
  %s3 = inlined_call_operand.vmem [shape: f32[32,512], index: 3, kind: input, shape index: {}]
  %s4 = inlined_call_operand.hbm [shape: bf16[1280,128], index: 4, kind: input, shape index: {}]
  %s5 = inlined_call_operand.hbm [shape: bf16[1280,128], index: 5, kind: input, shape index: {}]
  %s6 = inlined_call_operand.hbm [shape: bf16[256,256], index: 6, kind: input, shape index: {}]
  %s7 = inlined_call_operand.hbm [shape: bf16[256,256], index: 7, kind: input, shape index: {}]
  %s8 = inlined_call_operand.vmem [shape: bf16[512,512], index: 8, kind: input, shape index: {}]
  %s9 = inlined_call_operand.vmem [shape: bf16[512,512], index: 9, kind: input, shape index: {}]
  %s10 = inlined_call_operand.vmem [shape: f32[1,128], index: 10, kind: input, shape index: {}]
  %s11 = inlined_call_operand.vmem [shape: f32[1,256], index: 11, kind: input, shape index: {}]
  %s12 = inlined_call_operand.vmem [shape: f32[1,512], index: 12, kind: input, shape index: {}]
  %s13 = inlined_call_operand.vmem [shape: f32[32,512], index: 13, kind: output, shape index: {}]
  %s14 = sld [smem:[#allocation0]]
  $region78: #{fpn_forward.1} parent=0
    _
  %s16 = ssub.s32 1, %s14
  %s17 = scalar_select 0, %s16, %s14
  $region1: #{fpn_forward.1} parent=0
    #allocation2 [shape = 'u8[327680]{0}', space=vmem, size = 0x50000, scoped, tag = 'input window, operand 4, single buffered']
    #allocation3 [shape = 's32[1]{0}', space=sflag, size = 0x4, scoped, tag = 'scoped memory for fpn_forward.1']
    #allocation4 [shape = 'u8[327680]{0}', space=vmem, size = 0x50000, scoped, tag = 'input window, operand 5, single buffered']
    #allocation5 [shape = 's32[1]{0}', space=sflag, size = 0x4, scoped, tag = 'scoped memory for fpn_forward.1']
    #allocation6 [shape = 'u8[131072]{0}', space=vmem, size = 0x20000, scoped, tag = 'input window, operand 6, single buffered']
    #allocation7 [shape = 'u8[131072]{0}', space=vmem, size = 0x20000, scoped, tag = 'input window, operand 7, single buffered']
    #allocation8 [shape = 's32[1]{0}', space=sflag, size = 0x4, scoped, tag = 'scoped memory for fpn_forward.1']
    %18 = vsyncpa [#allocation3], 0
    %19 = vsyncpa [#allocation5], 0
    %20 = vsyncpa [#allocation8], 0
    // Predicated region
    $region2: #{fpn_forward.1} parent=1 // pred_check
      _
    $region3: #{fpn_forward.1} parent=1 // pred_check_branch
      %22 = sbr.rel (0) target = $region5
    $region4: #{fpn_forward.1} parent=1 // pred_region
      _
    $region5: #{fpn_forward.1} parent=1 // pred_fallthru
      _
    // Predicated region
    $region6: #{fpn_forward.1} parent=1 // pred_check
      _
    $region7: #{fpn_forward.1} parent=1 // pred_check_branch
      %24 = sbr.rel (0) target = $region9
    $region8: #{fpn_forward.1} parent=1 // pred_region
      _
    $region9: #{fpn_forward.1} parent=1 // pred_fallthru
      _
    // Predicated region
    $region10: #{fpn_forward.1} parent=1 // pred_check
      _
    $region11: #{fpn_forward.1} parent=1 // pred_check_branch
      %26 = sbr.rel (0) target = $region13
    $region12: #{fpn_forward.1} parent=1 // pred_region
      _
    $region13: #{fpn_forward.1} parent=1 // pred_fallthru
      _
    // Predicated region
    $region14: #{fpn_forward.1} parent=1 // pred_check
      _
    $region15: #{fpn_forward.1} parent=1 // pred_check_branch
      %28 = sbr.rel (0) target = $region17
    $region16: #{fpn_forward.1} parent=1 // pred_region
      _
    $region17: #{fpn_forward.1} parent=1 // pred_fallthru
      _
    // Predicated region
    $region18: #{fpn_forward.1} parent=1 // pred_check
      _
    $region19: #{fpn_forward.1} parent=1 // pred_check_branch
      %30 = sbr.rel (0) target = $region21
    $region20: #{fpn_forward.1} parent=1 // pred_region
      %s32 = ssub.s32 10240, 10240
      %33 = vsyncadd [#allocation3], %s32
      %s34 = sshll.u32 [#allocation2], 4
      %s35 = int_to_ptr.vmem [resolvable:$true] %s34
      %40 = dma.hbm_to_vmem [thread:$0]  %s4, 10240, %s35, [#allocation3], 64, 64, 4
    $region21: #{fpn_forward.1} parent=1 // pred_fallthru
      _
    // Predicated region
    $region22: #{fpn_forward.1} parent=1 // pred_check
      _
    $region23: #{fpn_forward.1} parent=1 // pred_check_branch
      %42 = sbr.rel (0) target = $region25
    $region24: #{fpn_forward.1} parent=1 // pred_region
      %s44 = ssub.s32 10240, 10240
      %45 = vsyncadd [#allocation5], %s44
      %s46 = sshll.u32 [#allocation4], 4
      %s47 = int_to_ptr.vmem [resolvable:$true] %s46
      %52 = dma.hbm_to_vmem [thread:$0]  %s5, 10240, %s47, [#allocation5], 64, 64, 4
    $region25: #{fpn_forward.1} parent=1 // pred_fallthru
      _
    // Predicated region
    $region26: #{fpn_forward.1} parent=1 // pred_check
      _
    $region27: #{fpn_forward.1} parent=1 // pred_check_branch
      %54 = sbr.rel (0) target = $region29
    $region28: #{fpn_forward.1} parent=1 // pred_region
      %s56 = ssub.s32 4096, 4096
      %57 = vsyncadd [#allocation5], %s56
      %s58 = sshll.u32 [#allocation6], 4
      %s59 = int_to_ptr.vmem [resolvable:$true] %s58
      %64 = dma.hbm_to_vmem [thread:$0]  %s6, 4096, %s59, [#allocation5], 128, 128, 8
    $region29: #{fpn_forward.1} parent=1 // pred_fallthru
      _
    // Predicated region
    $region30: #{fpn_forward.1} parent=1 // pred_check
      _
    $region31: #{fpn_forward.1} parent=1 // pred_check_branch
      %66 = sbr.rel (0) target = $region33
    $region32: #{fpn_forward.1} parent=1 // pred_region
      %s68 = ssub.s32 4096, 4096
      %69 = vsyncadd [#allocation8], %s68
      %s70 = sshll.u32 [#allocation7], 4
      %s71 = int_to_ptr.vmem [resolvable:$true] %s70
      %76 = dma.hbm_to_vmem [thread:$0]  %s7, 4096, %s71, [#allocation8], 128, 128, 8
    $region33: #{fpn_forward.1} parent=1 // pred_fallthru
      _
    // Predicated region
    $region34: #{fpn_forward.1} parent=1 // pred_check
      _
    $region35: #{fpn_forward.1} parent=1 // pred_check_branch
      %78 = sbr.rel (0) target = $region37
    $region36: #{fpn_forward.1} parent=1 // pred_region
      _
    $region37: #{fpn_forward.1} parent=1 // pred_fallthru
      _
    // Predicated region
    $region38: #{fpn_forward.1} parent=1 // pred_check
      _
    $region39: #{fpn_forward.1} parent=1 // pred_check_branch
      %80 = sbr.rel (0) target = $region41
    $region40: #{fpn_forward.1} parent=1 // pred_region
      _
    $region41: #{fpn_forward.1} parent=1 // pred_fallthru
      _
    // Predicated region
    $region42: #{fpn_forward.1} parent=1 // pred_check
      _
    $region43: #{fpn_forward.1} parent=1 // pred_check_branch
      %82 = sbr.rel (0) target = $region45
    $region44: #{fpn_forward.1} parent=1 // pred_region
      _
    $region45: #{fpn_forward.1} parent=1 // pred_fallthru
      _
    // Predicated region
    $region46: #{fpn_forward.1} parent=1 // pred_check
      _
    $region47: #{fpn_forward.1} parent=1 // pred_check_branch
      %84 = sbr.rel (0) target = $region49
    $region48: #{fpn_forward.1} parent=1 // pred_region
      _
    $region49: #{fpn_forward.1} parent=1 // pred_fallthru
      _
    // Predicated region
    $region50: #{fpn_forward.1} parent=1 // pred_check
      _
    $region51: #{fpn_forward.1} parent=1 // pred_check_branch
      %86 = sbr.rel (0) target = $region53
    $region52: #{fpn_forward.1} parent=1 // pred_region
      _
    $region53: #{fpn_forward.1} parent=1 // pred_fallthru
      _
    // Predicated region
    $region54: #{fpn_forward.1} parent=1 // pred_check
      _
    $region55: #{fpn_forward.1} parent=1 // pred_check_branch
      %88 = sbr.rel (0) target = $region57
    $region56: #{fpn_forward.1} parent=1 // pred_region
      %89 = dma.done [#allocation3], 10240
    $region57: #{fpn_forward.1} parent=1 // pred_fallthru
      _
    // Predicated region
    $region58: #{fpn_forward.1} parent=1 // pred_check
      _
    $region59: #{fpn_forward.1} parent=1 // pred_check_branch
      %91 = sbr.rel (0) target = $region61
    $region60: #{fpn_forward.1} parent=1 // pred_region
      %92 = dma.done [#allocation5], 10240
    $region61: #{fpn_forward.1} parent=1 // pred_fallthru
      _
    // Predicated region
    $region62: #{fpn_forward.1} parent=1 // pred_check
      _
    $region63: #{fpn_forward.1} parent=1 // pred_check_branch
      %94 = sbr.rel (0) target = $region65
    $region64: #{fpn_forward.1} parent=1 // pred_region
      %95 = dma.done [#allocation5], 4096
    $region65: #{fpn_forward.1} parent=1 // pred_fallthru
      _
    // Predicated region
    $region66: #{fpn_forward.1} parent=1 // pred_check
      _
    $region67: #{fpn_forward.1} parent=1 // pred_check_branch
      %97 = sbr.rel (0) target = $region69
    $region68: #{fpn_forward.1} parent=1 // pred_region
      %98 = dma.done [#allocation8], 4096
    $region69: #{fpn_forward.1} parent=1 // pred_fallthru
      _
    %v102 = vld [vmem:[%s0] sm:$0xff]
    %v103 = vld [vmem:[%s0 + $0x8] sm:$0x3]
    %v104 = vld [vmem:[#allocation2] sm:$0xf]
    %v105 = vld [vmem:[#allocation2 + $0x4] sm:$0xf]
    %v106 = vld [vmem:[#allocation2 + $0x8] sm:$0xf]
    %v107 = vld [vmem:[#allocation2 + $0xc] sm:$0xf]
    %v108 = vld [vmem:[#allocation2 + $0x10] sm:$0xf]
    %v109 = vld [vmem:[#allocation2 + $0x14] sm:$0xf]
    %v110 = vld [vmem:[#allocation2 + $0x18] sm:$0xf]
    %v111 = vld [vmem:[#allocation2 + $0x1c] sm:$0xf]
    %v112 = vld [vmem:[#allocation2 + $0x20] sm:$0xf]
    %v113 = vld [vmem:[#allocation2 + $0x24] sm:$0xf]
    %v114 = vld [vmem:[#allocation2 + $0x28] sm:$0xf]
    %v115 = vld [vmem:[#allocation2 + $0x2c] sm:$0xf]
    %v116 = vld [vmem:[#allocation2 + $0x30] sm:$0xf]
    %v117 = vld [vmem:[#allocation2 + $0x34] sm:$0xf]
    %v118 = vld [vmem:[#allocation2 + $0x38] sm:$0xf]
    %v119 = vld [vmem:[#allocation2 + $0x3c] sm:$0xf]
    %v120 = vld [vmem:[#allocation2 + $0x40] sm:$0xf]
    %v121 = vld [vmem:[#allocation2 + $0x44] sm:$0xf]
    %v122 = vld [vmem:[#allocation2 + $0x48] sm:$0xf]
    %v123 = vld [vmem:[#allocation2 + $0x4c] sm:$0xf]
    %v124 = vld [vmem:[#allocation2 + $0x50] sm:$0xf]
    %v125 = vld [vmem:[#allocation2 + $0x54] sm:$0xf]
    %v126 = vld [vmem:[#allocation2 + $0x58] sm:$0xf]
    %v127 = vld [vmem:[#allocation2 + $0x5c] sm:$0xf]
    %v128 = vld [vmem:[#allocation2 + $0x60] sm:$0xf]
    %v129 = vld [vmem:[#allocation2 + $0x64] sm:$0xf]
    %v130 = vld [vmem:[#allocation2 + $0x68] sm:$0xf]
    %v131 = vld [vmem:[#allocation2 + $0x6c] sm:$0xf]
    %v132 = vld [vmem:[#allocation2 + $0x70] sm:$0xf]
    %v133 = vld [vmem:[#allocation2 + $0x74] sm:$0xf]
    %v134 = vld [vmem:[#allocation2 + $0x78] sm:$0xf]
    %v135 = vld [vmem:[#allocation2 + $0x7c] sm:$0xf]
    %v136 = vld [vmem:[#allocation2 + $0x80] sm:$0xf]
    %v137 = vld [vmem:[#allocation2 + $0x84] sm:$0xf]
    %v138 = vld [vmem:[#allocation2 + $0x88] sm:$0xf]
    %v139 = vld [vmem:[#allocation2 + $0x8c] sm:$0xf]
    %v140 = vld [vmem:[#allocation2 + $0x90] sm:$0xf]
    %v141 = vld [vmem:[#allocation2 + $0x94] sm:$0xf]
    %v142 = vld [vmem:[#allocation2 + $0x98] sm:$0xf]
    %v143 = vld [vmem:[#allocation2 + $0x9c] sm:$0xf]
    %v144 = vld [vmem:[#allocation2 + $0xa0] sm:$0xf]
    %v145 = vld [vmem:[#allocation2 + $0xa4] sm:$0xf]
    %v146 = vld [vmem:[#allocation2 + $0xa8] sm:$0xf]
    %v147 = vld [vmem:[#allocation2 + $0xac] sm:$0xf]
    %v148 = vld [vmem:[#allocation2 + $0xb0] sm:$0xf]
    %v149 = vld [vmem:[#allocation2 + $0xb4] sm:$0xf]
    %v150 = vld [vmem:[#allocation2 + $0xb8] sm:$0xf]
    %v151 = vld [vmem:[#allocation2 + $0xbc] sm:$0xf]
    %v152 = vld [vmem:[#allocation2 + $0xc0] sm:$0xf]
    %v153 = vld [vmem:[#allocation2 + $0xc4] sm:$0xf]
    %v154 = vld [vmem:[#allocation2 + $0xc8] sm:$0xf]
    %v155 = vld [vmem:[#allocation2 + $0xcc] sm:$0xf]
    %v156 = vld [vmem:[#allocation2 + $0xd0] sm:$0xf]
    %v157 = vld [vmem:[#allocation2 + $0xd4] sm:$0xf]
    %v158 = vld [vmem:[#allocation2 + $0xd8] sm:$0xf]
    %v159 = vld [vmem:[#allocation2 + $0xdc] sm:$0xf]
    %v160 = vld [vmem:[#allocation2 + $0xe0] sm:$0xf]
    %v161 = vld [vmem:[#allocation2 + $0xe4] sm:$0xf]
    %v162 = vld [vmem:[#allocation2 + $0xe8] sm:$0xf]
    %v163 = vld [vmem:[#allocation2 + $0xec] sm:$0xf]
    %v164 = vld [vmem:[#allocation2 + $0xf0] sm:$0xf]
    %v165 = vld [vmem:[#allocation2 + $0xf4] sm:$0xf]
    %v166 = vld [vmem:[#allocation2 + $0xf8] sm:$0xf]
    %v167 = vld [vmem:[#allocation2 + $0xfc] sm:$0xf]
    %v168 = vld [vmem:[#allocation2 + $0x100] sm:$0xf]
    %v169 = vld [vmem:[#allocation2 + $0x104] sm:$0xf]
    %v170 = vld [vmem:[#allocation2 + $0x108] sm:$0xf]
    %v171 = vld [vmem:[#allocation2 + $0x10c] sm:$0xf]
    %v172 = vld [vmem:[#allocation2 + $0x110] sm:$0xf]
    %v173 = vld [vmem:[#allocation2 + $0x114] sm:$0xf]
    %v174 = vld [vmem:[#allocation2 + $0x118] sm:$0xf]
    %v175 = vld [vmem:[#allocation2 + $0x11c] sm:$0xf]
    %v176 = vld [vmem:[#allocation2 + $0x120] sm:$0xf]
    %v177 = vld [vmem:[#allocation2 + $0x124] sm:$0xf]
    %v178 = vld [vmem:[#allocation2 + $0x128] sm:$0xf]
    %v179 = vld [vmem:[#allocation2 + $0x12c] sm:$0xf]
    %v180 = vld [vmem:[#allocation2 + $0x130] sm:$0xf]
    %v181 = vld [vmem:[#allocation2 + $0x134] sm:$0xf]
    %v182 = vld [vmem:[#allocation2 + $0x138] sm:$0xf]
    %v183 = vld [vmem:[#allocation2 + $0x13c] sm:$0xf]
    %v184 = vld [vmem:[#allocation2 + $0x140] sm:$0xf]
    %v185 = vld [vmem:[#allocation2 + $0x144] sm:$0xf]
    %v186 = vld [vmem:[#allocation2 + $0x148] sm:$0xf]
    %v187 = vld [vmem:[#allocation2 + $0x14c] sm:$0xf]
    %v188 = vld [vmem:[#allocation2 + $0x150] sm:$0xf]
    %v189 = vld [vmem:[#allocation2 + $0x154] sm:$0xf]
    %v190 = vld [vmem:[#allocation2 + $0x158] sm:$0xf]
    %v191 = vld [vmem:[#allocation2 + $0x15c] sm:$0xf]
    %v192 = vld [vmem:[#allocation2 + $0x160] sm:$0xf]
    %v193 = vld [vmem:[#allocation2 + $0x164] sm:$0xf]
    %v194 = vld [vmem:[#allocation2 + $0x168] sm:$0xf]
    %v195 = vld [vmem:[#allocation2 + $0x16c] sm:$0xf]
    %v196 = vld [vmem:[#allocation2 + $0x170] sm:$0xf]
    %v197 = vld [vmem:[#allocation2 + $0x174] sm:$0xf]
    %v198 = vld [vmem:[#allocation2 + $0x178] sm:$0xf]
    %v199 = vld [vmem:[#allocation2 + $0x17c] sm:$0xf]
    %v200 = vld [vmem:[#allocation2 + $0x180] sm:$0xf]
    %v201 = vld [vmem:[#allocation2 + $0x184] sm:$0xf]
    %v202 = vld [vmem:[#allocation2 + $0x188] sm:$0xf]
    %v203 = vld [vmem:[#allocation2 + $0x18c] sm:$0xf]
    %v204 = vld [vmem:[#allocation2 + $0x190] sm:$0xf]
    %v205 = vld [vmem:[#allocation2 + $0x194] sm:$0xf]
    %v206 = vld [vmem:[#allocation2 + $0x198] sm:$0xf]
    %v207 = vld [vmem:[#allocation2 + $0x19c] sm:$0xf]
    %v208 = vld [vmem:[#allocation2 + $0x1a0] sm:$0xf]
    %v209 = vld [vmem:[#allocation2 + $0x1a4] sm:$0xf]
    %v210 = vld [vmem:[#allocation2 + $0x1a8] sm:$0xf]
    %v211 = vld [vmem:[#allocation2 + $0x1ac] sm:$0xf]
    %v212 = vld [vmem:[#allocation2 + $0x1b0] sm:$0xf]
    %v213 = vld [vmem:[#allocation2 + $0x1b4] sm:$0xf]
    %v214 = vld [vmem:[#allocation2 + $0x1b8] sm:$0xf]
    %v215 = vld [vmem:[#allocation2 + $0x1bc] sm:$0xf]
    %v216 = vld [vmem:[#allocation2 + $0x1c0] sm:$0xf]
    %v217 = vld [vmem:[#allocation2 + $0x1c4] sm:$0xf]
    %v218 = vld [vmem:[#allocation2 + $0x1c8] sm:$0xf]
    %v219 = vld [vmem:[#allocation2 + $0x1cc] sm:$0xf]
    %v220 = vld [vmem:[#allocation2 + $0x1d0] sm:$0xf]
    %v221 = vld [vmem:[#allocation2 + $0x1d4] sm:$0xf]
    %v222 = vld [vmem:[#allocation2 + $0x1d8] sm:$0xf]
    %v223 = vld [vmem:[#allocation2 + $0x1dc] sm:$0xf]
    %v224 = vld [vmem:[#allocation2 + $0x1e0] sm:$0xf]
    %v225 = vld [vmem:[#allocation2 + $0x1e4] sm:$0xf]
    %v226 = vld [vmem:[#allocation2 + $0x1e8] sm:$0xf]
    %v227 = vld [vmem:[#allocation2 + $0x1ec] sm:$0xf]
    %v228 = vld [vmem:[#allocation2 + $0x1f0] sm:$0xf]
    %v229 = vld [vmem:[#allocation2 + $0x1f4] sm:$0xf]
    %v230 = vld [vmem:[#allocation2 + $0x1f8] sm:$0xf]
    %v231 = vld [vmem:[#allocation2 + $0x1fc] sm:$0xf]
    %v232 = vld [vmem:[#allocation2 + $0x200] sm:$0xf]
    %v233 = vld [vmem:[#allocation2 + $0x204] sm:$0xf]
    %v234 = vld [vmem:[#allocation2 + $0x208] sm:$0xf]
    %v235 = vld [vmem:[#allocation2 + $0x20c] sm:$0xf]
    %v236 = vld [vmem:[#allocation2 + $0x210] sm:$0xf]
    %v237 = vld [vmem:[#allocation2 + $0x214] sm:$0xf]
    %v238 = vld [vmem:[#allocation2 + $0x218] sm:$0xf]
    %v239 = vld [vmem:[#allocation2 + $0x21c] sm:$0xf]
    %v240 = vld [vmem:[#allocation2 + $0x220] sm:$0xf]
    %v241 = vld [vmem:[#allocation2 + $0x224] sm:$0xf]
    %v242 = vld [vmem:[#allocation2 + $0x228] sm:$0xf]
    %v243 = vld [vmem:[#allocation2 + $0x22c] sm:$0xf]
    %v244 = vld [vmem:[#allocation2 + $0x230] sm:$0xf]
    %v245 = vld [vmem:[#allocation2 + $0x234] sm:$0xf]
    %v246 = vld [vmem:[#allocation2 + $0x238] sm:$0xf]
    %v247 = vld [vmem:[#allocation2 + $0x23c] sm:$0xf]
    %v248 = vld [vmem:[#allocation2 + $0x240] sm:$0xf]
    %v249 = vld [vmem:[#allocation2 + $0x244] sm:$0xf]
    %v250 = vld [vmem:[#allocation2 + $0x248] sm:$0xf]
    %v251 = vld [vmem:[#allocation2 + $0x24c] sm:$0xf]
    %v252 = vld [vmem:[#allocation2 + $0x250] sm:$0xf]
    %v253 = vld [vmem:[#allocation2 + $0x254] sm:$0xf]
    %v254 = vld [vmem:[#allocation2 + $0x258] sm:$0xf]
    %v255 = vld [vmem:[#allocation2 + $0x25c] sm:$0xf]
    %v256 = vld [vmem:[#allocation2 + $0x260] sm:$0xf]
    %v257 = vld [vmem:[#allocation2 + $0x264] sm:$0xf]
    %v258 = vld [vmem:[#allocation2 + $0x268] sm:$0xf]
    %v259 = vld [vmem:[#allocation2 + $0x26c] sm:$0xf]
    %v260 = vld [vmem:[#allocation2 + $0x270] sm:$0xf]
    %v261 = vld [vmem:[#allocation2 + $0x274] sm:$0xf]
    %v262 = vld [vmem:[#allocation2 + $0x278] sm:$0xf]
    %v263 = vld [vmem:[#allocation2 + $0x27c] sm:$0xf]
    %v264 = vld [vmem:[#allocation4] sm:$0xf]
    %v265 = vld [vmem:[#allocation4 + $0x4] sm:$0xf]
    %v266 = vld [vmem:[#allocation4 + $0x8] sm:$0xf]
    %v267 = vld [vmem:[#allocation4 + $0xc] sm:$0xf]
    %v268 = vld [vmem:[#allocation4 + $0x10] sm:$0xf]
    %v269 = vld [vmem:[#allocation4 + $0x14] sm:$0xf]
    %v270 = vld [vmem:[#allocation4 + $0x18] sm:$0xf]
    %v271 = vld [vmem:[#allocation4 + $0x1c] sm:$0xf]
    %v272 = vld [vmem:[#allocation4 + $0x20] sm:$0xf]
    %v273 = vld [vmem:[#allocation4 + $0x24] sm:$0xf]
    %v274 = vld [vmem:[#allocation4 + $0x28] sm:$0xf]
    %v275 = vld [vmem:[#allocation4 + $0x2c] sm:$0xf]
    %v276 = vld [vmem:[#allocation4 + $0x30] sm:$0xf]
    %v277 = vld [vmem:[#allocation4 + $0x34] sm:$0xf]
    %v278 = vld [vmem:[#allocation4 + $0x38] sm:$0xf]
    %v279 = vld [vmem:[#allocation4 + $0x3c] sm:$0xf]
    %v280 = vld [vmem:[#allocation4 + $0x40] sm:$0xf]
    %v281 = vld [vmem:[#allocation4 + $0x44] sm:$0xf]
    %v282 = vld [vmem:[#allocation4 + $0x48] sm:$0xf]
    %v283 = vld [vmem:[#allocation4 + $0x4c] sm:$0xf]
    %v284 = vld [vmem:[#allocation4 + $0x50] sm:$0xf]
    %v285 = vld [vmem:[#allocation4 + $0x54] sm:$0xf]
    %v286 = vld [vmem:[#allocation4 + $0x58] sm:$0xf]
    %v287 = vld [vmem:[#allocation4 + $0x5c] sm:$0xf]
    %v288 = vld [vmem:[#allocation4 + $0x60] sm:$0xf]
    %v289 = vld [vmem:[#allocation4 + $0x64] sm:$0xf]
    %v290 = vld [vmem:[#allocation4 + $0x68] sm:$0xf]
    %v291 = vld [vmem:[#allocation4 + $0x6c] sm:$0xf]
    %v292 = vld [vmem:[#allocation4 + $0x70] sm:$0xf]
    %v293 = vld [vmem:[#allocation4 + $0x74] sm:$0xf]
    %v294 = vld [vmem:[#allocation4 + $0x78] sm:$0xf]
    %v295 = vld [vmem:[#allocation4 + $0x7c] sm:$0xf]
    %v296 = vld [vmem:[#allocation4 + $0x80] sm:$0xf]
    %v297 = vld [vmem:[#allocation4 + $0x84] sm:$0xf]
    %v298 = vld [vmem:[#allocation4 + $0x88] sm:$0xf]
    %v299 = vld [vmem:[#allocation4 + $0x8c] sm:$0xf]
    %v300 = vld [vmem:[#allocation4 + $0x90] sm:$0xf]
    %v301 = vld [vmem:[#allocation4 + $0x94] sm:$0xf]
    %v302 = vld [vmem:[#allocation4 + $0x98] sm:$0xf]
    %v303 = vld [vmem:[#allocation4 + $0x9c] sm:$0xf]
    %v304 = vld [vmem:[#allocation4 + $0xa0] sm:$0xf]
    %v305 = vld [vmem:[#allocation4 + $0xa4] sm:$0xf]
    %v306 = vld [vmem:[#allocation4 + $0xa8] sm:$0xf]
    %v307 = vld [vmem:[#allocation4 + $0xac] sm:$0xf]
    %v308 = vld [vmem:[#allocation4 + $0xb0] sm:$0xf]
    %v309 = vld [vmem:[#allocation4 + $0xb4] sm:$0xf]
    %v310 = vld [vmem:[#allocation4 + $0xb8] sm:$0xf]
    %v311 = vld [vmem:[#allocation4 + $0xbc] sm:$0xf]
    %v312 = vld [vmem:[#allocation4 + $0xc0] sm:$0xf]
    %v313 = vld [vmem:[#allocation4 + $0xc4] sm:$0xf]
    %v314 = vld [vmem:[#allocation4 + $0xc8] sm:$0xf]
    %v315 = vld [vmem:[#allocation4 + $0xcc] sm:$0xf]
    %v316 = vld [vmem:[#allocation4 + $0xd0] sm:$0xf]
    %v317 = vld [vmem:[#allocation4 + $0xd4] sm:$0xf]
    %v318 = vld [vmem:[#allocation4 + $0xd8] sm:$0xf]
    %v319 = vld [vmem:[#allocation4 + $0xdc] sm:$0xf]
    %v320 = vld [vmem:[#allocation4 + $0xe0] sm:$0xf]
    %v321 = vld [vmem:[#allocation4 + $0xe4] sm:$0xf]
    %v322 = vld [vmem:[#allocation4 + $0xe8] sm:$0xf]
    %v323 = vld [vmem:[#allocation4 + $0xec] sm:$0xf]
    %v324 = vld [vmem:[#allocation4 + $0xf0] sm:$0xf]
    %v325 = vld [vmem:[#allocation4 + $0xf4] sm:$0xf]
    %v326 = vld [vmem:[#allocation4 + $0xf8] sm:$0xf]
    %v327 = vld [vmem:[#allocation4 + $0xfc] sm:$0xf]
    %v328 = vld [vmem:[#allocation4 + $0x100] sm:$0xf]
    %v329 = vld [vmem:[#allocation4 + $0x104] sm:$0xf]
    %v330 = vld [vmem:[#allocation4 + $0x108] sm:$0xf]
    %v331 = vld [vmem:[#allocation4 + $0x10c] sm:$0xf]
    %v332 = vld [vmem:[#allocation4 + $0x110] sm:$0xf]
    %v333 = vld [vmem:[#allocation4 + $0x114] sm:$0xf]
    %v334 = vld [vmem:[#allocation4 + $0x118] sm:$0xf]
    %v335 = vld [vmem:[#allocation4 + $0x11c] sm:$0xf]
    %v336 = vld [vmem:[#allocation4 + $0x120] sm:$0xf]
    %v337 = vld [vmem:[#allocation4 + $0x124] sm:$0xf]
    %v338 = vld [vmem:[#allocation4 + $0x128] sm:$0xf]
    %v339 = vld [vmem:[#allocation4 + $0x12c] sm:$0xf]
    %v340 = vld [vmem:[#allocation4 + $0x130] sm:$0xf]
    %v341 = vld [vmem:[#allocation4 + $0x134] sm:$0xf]
    %v342 = vld [vmem:[#allocation4 + $0x138] sm:$0xf]
    %v343 = vld [vmem:[#allocation4 + $0x13c] sm:$0xf]
    %v344 = vld [vmem:[#allocation4 + $0x140] sm:$0xf]
    %v345 = vld [vmem:[#allocation4 + $0x144] sm:$0xf]
    %v346 = vld [vmem:[#allocation4 + $0x148] sm:$0xf]
    %v347 = vld [vmem:[#allocation4 + $0x14c] sm:$0xf]
    %v348 = vld [vmem:[#allocation4 + $0x150] sm:$0xf]
    %v349 = vld [vmem:[#allocation4 + $0x154] sm:$0xf]
    %v350 = vld [vmem:[#allocation4 + $0x158] sm:$0xf]
    %v351 = vld [vmem:[#allocation4 + $0x15c] sm:$0xf]
    %v352 = vld [vmem:[#allocation4 + $0x160] sm:$0xf]
    %v353 = vld [vmem:[#allocation4 + $0x164] sm:$0xf]
    %v354 = vld [vmem:[#allocation4 + $0x168] sm:$0xf]
    %v355 = vld [vmem:[#allocation4 + $0x16c] sm:$0xf]
    %v356 = vld [vmem:[#allocation4 + $0x170] sm:$0xf]
    %v357 = vld [vmem:[#allocation4 + $0x174] sm:$0xf]
    %v358 = vld [vmem:[#allocation4 + $0x178] sm:$0xf]
    %v359 = vld [vmem:[#allocation4 + $0x17c] sm:$0xf]
    %v360 = vld [vmem:[#allocation4 + $0x180] sm:$0xf]
    %v361 = vld [vmem:[#allocation4 + $0x184] sm:$0xf]
    %v362 = vld [vmem:[#allocation4 + $0x188] sm:$0xf]
    %v363 = vld [vmem:[#allocation4 + $0x18c] sm:$0xf]
    %v364 = vld [vmem:[#allocation4 + $0x190] sm:$0xf]
    %v365 = vld [vmem:[#allocation4 + $0x194] sm:$0xf]
    %v366 = vld [vmem:[#allocation4 + $0x198] sm:$0xf]
    %v367 = vld [vmem:[#allocation4 + $0x19c] sm:$0xf]
    %v368 = vld [vmem:[#allocation4 + $0x1a0] sm:$0xf]
    %v369 = vld [vmem:[#allocation4 + $0x1a4] sm:$0xf]
    %v370 = vld [vmem:[#allocation4 + $0x1a8] sm:$0xf]
    %v371 = vld [vmem:[#allocation4 + $0x1ac] sm:$0xf]
    %v372 = vld [vmem:[#allocation4 + $0x1b0] sm:$0xf]
    %v373 = vld [vmem:[#allocation4 + $0x1b4] sm:$0xf]
    %v374 = vld [vmem:[#allocation4 + $0x1b8] sm:$0xf]
    %v375 = vld [vmem:[#allocation4 + $0x1bc] sm:$0xf]
    %v376 = vld [vmem:[#allocation4 + $0x1c0] sm:$0xf]
    %v377 = vld [vmem:[#allocation4 + $0x1c4] sm:$0xf]
    %v378 = vld [vmem:[#allocation4 + $0x1c8] sm:$0xf]
    %v379 = vld [vmem:[#allocation4 + $0x1cc] sm:$0xf]
    %v380 = vld [vmem:[#allocation4 + $0x1d0] sm:$0xf]
    %v381 = vld [vmem:[#allocation4 + $0x1d4] sm:$0xf]
    %v382 = vld [vmem:[#allocation4 + $0x1d8] sm:$0xf]
    %v383 = vld [vmem:[#allocation4 + $0x1dc] sm:$0xf]
    %v384 = vld [vmem:[#allocation4 + $0x1e0] sm:$0xf]
    %v385 = vld [vmem:[#allocation4 + $0x1e4] sm:$0xf]
    %v386 = vld [vmem:[#allocation4 + $0x1e8] sm:$0xf]
    %v387 = vld [vmem:[#allocation4 + $0x1ec] sm:$0xf]
    %v388 = vld [vmem:[#allocation4 + $0x1f0] sm:$0xf]
    %v389 = vld [vmem:[#allocation4 + $0x1f4] sm:$0xf]
    %v390 = vld [vmem:[#allocation4 + $0x1f8] sm:$0xf]
    %v391 = vld [vmem:[#allocation4 + $0x1fc] sm:$0xf]
    %v392 = vld [vmem:[#allocation4 + $0x200] sm:$0xf]
    %v393 = vld [vmem:[#allocation4 + $0x204] sm:$0xf]
    %v394 = vld [vmem:[#allocation4 + $0x208] sm:$0xf]
    %v395 = vld [vmem:[#allocation4 + $0x20c] sm:$0xf]
    %v396 = vld [vmem:[#allocation4 + $0x210] sm:$0xf]
    %v397 = vld [vmem:[#allocation4 + $0x214] sm:$0xf]
    %v398 = vld [vmem:[#allocation4 + $0x218] sm:$0xf]
    %v399 = vld [vmem:[#allocation4 + $0x21c] sm:$0xf]
    %v400 = vld [vmem:[#allocation4 + $0x220] sm:$0xf]
    %v401 = vld [vmem:[#allocation4 + $0x224] sm:$0xf]
    %v402 = vld [vmem:[#allocation4 + $0x228] sm:$0xf]
    %v403 = vld [vmem:[#allocation4 + $0x22c] sm:$0xf]
    %v404 = vld [vmem:[#allocation4 + $0x230] sm:$0xf]
    %v405 = vld [vmem:[#allocation4 + $0x234] sm:$0xf]
    %v406 = vld [vmem:[#allocation4 + $0x238] sm:$0xf]
    %v407 = vld [vmem:[#allocation4 + $0x23c] sm:$0xf]
    %v408 = vld [vmem:[#allocation4 + $0x240] sm:$0xf]
    %v409 = vld [vmem:[#allocation4 + $0x244] sm:$0xf]
    %v410 = vld [vmem:[#allocation4 + $0x248] sm:$0xf]
    %v411 = vld [vmem:[#allocation4 + $0x24c] sm:$0xf]
    %v412 = vld [vmem:[#allocation4 + $0x250] sm:$0xf]
    %v413 = vld [vmem:[#allocation4 + $0x254] sm:$0xf]
    %v414 = vld [vmem:[#allocation4 + $0x258] sm:$0xf]
    %v415 = vld [vmem:[#allocation4 + $0x25c] sm:$0xf]
    %v416 = vld [vmem:[#allocation4 + $0x260] sm:$0xf]
    %v417 = vld [vmem:[#allocation4 + $0x264] sm:$0xf]
    %v418 = vld [vmem:[#allocation4 + $0x268] sm:$0xf]
    %v419 = vld [vmem:[#allocation4 + $0x26c] sm:$0xf]
    %v420 = vld [vmem:[#allocation4 + $0x270] sm:$0xf]
    %v421 = vld [vmem:[#allocation4 + $0x274] sm:$0xf]
    %v422 = vld [vmem:[#allocation4 + $0x278] sm:$0xf]
    %v423 = vld [vmem:[#allocation4 + $0x27c] sm:$0xf]
    %v424 = vld [vmem:[%s1] sm:$0xff]
    %v425 = vld [vmem:[%s10] sm:$0x1]
    %v428 = vcombine.high %v102, %v102
    %v430 = vunpack.c.l.s4 1983009808
    %v431 = vunpack.c.0.s8 %v430
    %v432 = vlaneseq
    %v433 = vshrl.u32 %v432, 7
    %v434 = vsub.s32 %v431, %v433
    %v435 = vrot.slane %v102, %v434
    %v437 = vunpack.c.l.s4 1983009808
    %v438 = vunpack.c.0.s8 %v437
    %v439 = vlaneseq
    %v440 = vshrl.u32 %v439, 7
    %v441 = vsub.s32 %v438, %v440
    %v442 = vrot.slane %v428, %v441
    %v443 = vcombine.high %v435, %v435
    %v444 = vcombine.high %v442, %v442
    %v446 = vunpack.c.l.s4 1983009808
    %v447 = vunpack.c.0.s8 %v446
    %v448 = vlaneseq
    %v449 = vshrl.u32 %v448, 7
    %v450 = vsub.s32 %v447, %v449
    %v451 = vrot.slane %v103, %v450
    %v453 = vshrl.u32 %v435, 16
    %v455 = vrot.slane %v453, 7
    %v456 = vshll.u32 %v435, 16
    %v458 = vor.u32 %v455, %v456
    %v460 = vshrl.u32 %v443, 16
    %v462 = vrot.slane %v460, 7
    %v463 = vshll.u32 %v443, 16
    %v465 = vor.u32 %v462, %v463
    %v467 = vshrl.u32 %v442, 16
    %v469 = vrot.slane %v467, 7
    %v470 = vshll.u32 %v442, 16
    %v472 = vor.u32 %v469, %v470
    %v474 = vshrl.u32 %v444, 16
    %v476 = vrot.slane %v474, 7
    %v477 = vshll.u32 %v444, 16
    %v479 = vor.u32 %v476, %v477
    %v481 = vshrl.u32 %v451, 16
    %v483 = vrot.slane %v481, 7
    %v484 = vshll.u32 %v451, 16
    %v486 = vor.u32 %v483, %v484
    %vm492 = vcmask 1040384
    %vm493 = vsmask.f32 256
    %vm494 = vmand %vm492, %vm493
    %v495 = vsel %vm494, 0, %v458
    %v496 = vsel %vm494, 0, %v465
    %v497 = vsel %vm494, 0, %v472
    %v498 = vsel %vm494, 0, %v479
    %v499 = vsel %vm494, 0, %v486
    %v500 = vrot.slane %v456, 1
    %v501 = vor.u32 %v453, %v500
    %v502 = vrot.slane %v463, 1
    %v503 = vor.u32 %v460, %v502
    %v504 = vrot.slane %v470, 1
    %v505 = vor.u32 %v467, %v504
    %v506 = vrot.slane %v477, 1
    %v507 = vor.u32 %v474, %v506
    %v508 = vrot.slane %v484, 1
    %v509 = vor.u32 %v481, %v508
    %vm515 = vcmask 1041408
    %vm516 = vsmask.f32 1280
    %vm517 = vmand %vm515, %vm516
    %v518 = vsel %vm517, %v501, 0
    %v519 = vsel %vm517, %v503, 0
    %v520 = vsel %vm517, %v505, 0
    %v521 = vsel %vm517, %v507, 0
    %v522 = vsel %vm517, %v509, 0
    %v523 = vlaneseq
    %v524 = vshrl.u32 %v523, 7
    %vm525 = vcmp.lt.s32.totalorder %v524, 0
    %v526 = vsub.s32 0, %v524
    %v527 = vsel %vm525, %v526, %v524
    %v528 = vshrl.u32 %v527, 1
    %v529 = vand.u32 %v527, 1
    %v530 = vsub.s32 0, %v529
    %v531 = vsel %vm525, %v530, %v529
    %vm532 = vcmp.ne.s32.totalorder %v531, 0
    %vm533 = vcmp.lt.s32.totalorder %v531, 0
    %vm534 = vmand %vm533, %vm532
    %v535 = vadd.s32 %v531, 2
    %v536 = vsel %vm534, %v535, %v531
    %vm537 = vcmp.eq.s32.totalorder %v536, 0
    %v538 = vsel %vm537, 1, 0
    %vm539 = vcmp.eq.s32.totalorder %v538, 1
    %vm540 = vmpackc.low %vm539, %vm539
    %v541 = vsel %vm540, 65537, 0
    %v542 = vunpack.c.l.b16 %v541
    %v543 = vpack.c.b16 %v542, %v542
    %vm544 = vcmp.ne.s16.totalorder %v543, 0
    %v545 = vsel %vm544, 0, %v495
    %v546 = vsel %vm544, 0, %v496
    %v547 = vsel %vm544, 0, %v497
    %v548 = vsel %vm544, 0, %v498
    %v549 = vsel %vm544, 0, %v499
    %vm550 = vcmp.eq.s32.totalorder %v536, 1
    %v551 = vsel %vm550, 1, 0
    %vm552 = vcmp.eq.s32.totalorder %v551, 1
    %vm553 = vmpackc.low %vm552, %vm552
    %v554 = vsel %vm553, 65537, 0
    %v555 = vunpack.c.l.b16 %v554
    %v556 = vpack.c.b16 %v555, %v555
    %vm557 = vcmp.ne.s16.totalorder %v556, 0
    %v558 = vsel %vm557, 0, %v518
    %v559 = vsel %vm557, 0, %v519
    %v560 = vsel %vm557, 0, %v520
    %v561 = vsel %vm557, 0, %v521
    %v562 = vsel %vm557, 0, %v522
    %v728 = vunpack.c.l.b16 %v104
    %v729 = vunpack.c.l.b16 %v105
    %v730 = vunpack.c.l.b16 %v106
    %v731 = vunpack.c.l.b16 %v107
    %v732 = vunpack.c.l.b16 %v108
    %v733 = vunpack.c.l.b16 %v109
    %v734 = vunpack.c.l.b16 %v110
    %v735 = vunpack.c.l.b16 %v111
    %v736 = vunpack.c.l.b16 %v112
    %v737 = vunpack.c.l.b16 %v113
    %v738 = vunpack.c.l.b16 %v114
    %v739 = vunpack.c.l.b16 %v115
    %v740 = vunpack.c.l.b16 %v116
    %v741 = vunpack.c.l.b16 %v117
    %v742 = vunpack.c.l.b16 %v118
    %v743 = vunpack.c.l.b16 %v119
    %v744 = vunpack.c.l.b16 %v120
    %v745 = vunpack.c.l.b16 %v121
    %v746 = vunpack.c.l.b16 %v122
    %v747 = vunpack.c.l.b16 %v123
    %v748 = vunpack.c.l.b16 %v124
    %v749 = vunpack.c.l.b16 %v125
    %v750 = vunpack.c.l.b16 %v126
    %v751 = vunpack.c.l.b16 %v127
    %v752 = vunpack.c.l.b16 %v128
    %v753 = vunpack.c.l.b16 %v129
    %v754 = vunpack.c.l.b16 %v130
    %v755 = vunpack.c.l.b16 %v131
    %v756 = vunpack.c.l.b16 %v132
    %v757 = vunpack.c.l.b16 %v133
    %v758 = vunpack.c.l.b16 %v134
    %v759 = vunpack.c.l.b16 %v135
    %v760 = vunpack.c.l.b16 %v136
    %v761 = vunpack.c.l.b16 %v137
    %v762 = vunpack.c.l.b16 %v138
    %v763 = vunpack.c.l.b16 %v139
    %v764 = vunpack.c.l.b16 %v140
    %v765 = vunpack.c.l.b16 %v141
    %v766 = vunpack.c.l.b16 %v142
    %v767 = vunpack.c.l.b16 %v143
    %v768 = vunpack.c.l.b16 %v144
    %v769 = vunpack.c.l.b16 %v145
    %v770 = vunpack.c.l.b16 %v146
    %v771 = vunpack.c.l.b16 %v147
    %v772 = vunpack.c.l.b16 %v148
    %v773 = vunpack.c.l.b16 %v149
    %v774 = vunpack.c.l.b16 %v150
    %v775 = vunpack.c.l.b16 %v151
    %v776 = vunpack.c.l.b16 %v152
    %v777 = vunpack.c.l.b16 %v153
    %v778 = vunpack.c.l.b16 %v154
    %v779 = vunpack.c.l.b16 %v155
    %v780 = vunpack.c.l.b16 %v156
    %v781 = vunpack.c.l.b16 %v157
    %v782 = vunpack.c.l.b16 %v158
    %v783 = vunpack.c.l.b16 %v159
    %v784 = vunpack.c.l.b16 %v160
    %v785 = vunpack.c.l.b16 %v161
    %v786 = vunpack.c.l.b16 %v162
    %v787 = vunpack.c.l.b16 %v163
    %v788 = vunpack.c.l.b16 %v164
    %v789 = vunpack.c.l.b16 %v165
    %v790 = vunpack.c.l.b16 %v166
    %v791 = vunpack.c.l.b16 %v167
    %v792 = vunpack.c.l.b16 %v168
    %v793 = vunpack.c.l.b16 %v169
    %v794 = vunpack.c.l.b16 %v170
    %v795 = vunpack.c.l.b16 %v171
    %v796 = vunpack.c.l.b16 %v172
    %v797 = vunpack.c.l.b16 %v173
    %v798 = vunpack.c.l.b16 %v174
    %v799 = vunpack.c.l.b16 %v175
    %v800 = vunpack.c.l.b16 %v176
    %v801 = vunpack.c.l.b16 %v177
    %v802 = vunpack.c.l.b16 %v178
    %v803 = vunpack.c.l.b16 %v179
    %v804 = vunpack.c.l.b16 %v180
    %v805 = vunpack.c.l.b16 %v181
    %v806 = vunpack.c.l.b16 %v182
    %v807 = vunpack.c.l.b16 %v183
    %v808 = vunpack.c.l.b16 %v184
    %v809 = vunpack.c.l.b16 %v185
    %v810 = vunpack.c.l.b16 %v186
    %v811 = vunpack.c.l.b16 %v187
    %v812 = vunpack.c.l.b16 %v188
    %v813 = vunpack.c.l.b16 %v189
    %v814 = vunpack.c.l.b16 %v190
    %v815 = vunpack.c.l.b16 %v191
    %v816 = vunpack.c.l.b16 %v192
    %v817 = vunpack.c.l.b16 %v193
    %v818 = vunpack.c.l.b16 %v194
    %v819 = vunpack.c.l.b16 %v195
    %v820 = vunpack.c.l.b16 %v196
    %v821 = vunpack.c.l.b16 %v197
    %v822 = vunpack.c.l.b16 %v198
    %v823 = vunpack.c.l.b16 %v199
    %v824 = vunpack.c.l.b16 %v200
    %v825 = vunpack.c.l.b16 %v201
    %v826 = vunpack.c.l.b16 %v202
    %v827 = vunpack.c.l.b16 %v203
    %v828 = vunpack.c.l.b16 %v204
    %v829 = vunpack.c.l.b16 %v205
    %v830 = vunpack.c.l.b16 %v206
    %v831 = vunpack.c.l.b16 %v207
    %v832 = vunpack.c.l.b16 %v208
    %v833 = vunpack.c.l.b16 %v209
    %v834 = vunpack.c.l.b16 %v210
    %v835 = vunpack.c.l.b16 %v211
    %v836 = vunpack.c.l.b16 %v212
    %v837 = vunpack.c.l.b16 %v213
    %v838 = vunpack.c.l.b16 %v214
    %v839 = vunpack.c.l.b16 %v215
    %v840 = vunpack.c.l.b16 %v216
    %v841 = vunpack.c.l.b16 %v217
    %v842 = vunpack.c.l.b16 %v218
    %v843 = vunpack.c.l.b16 %v219
    %v844 = vunpack.c.l.b16 %v220
    %v845 = vunpack.c.l.b16 %v221
    %v846 = vunpack.c.l.b16 %v222
    %v847 = vunpack.c.l.b16 %v223
    %v848 = vunpack.c.l.b16 %v224
    %v849 = vunpack.c.l.b16 %v225
    %v850 = vunpack.c.l.b16 %v226
    %v851 = vunpack.c.l.b16 %v227
    %v852 = vunpack.c.l.b16 %v228
    %v853 = vunpack.c.l.b16 %v229
    %v854 = vunpack.c.l.b16 %v230
    %v855 = vunpack.c.l.b16 %v231
    %v856 = vunpack.c.l.b16 %v232
    %v857 = vunpack.c.l.b16 %v233
    %v858 = vunpack.c.l.b16 %v234
    %v859 = vunpack.c.l.b16 %v235
    %v860 = vunpack.c.l.b16 %v236
    %v861 = vunpack.c.l.b16 %v237
    %v862 = vunpack.c.l.b16 %v238
    %v863 = vunpack.c.l.b16 %v239
    %v864 = vunpack.c.l.b16 %v240
    %v865 = vunpack.c.l.b16 %v241
    %v866 = vunpack.c.l.b16 %v242
    %v867 = vunpack.c.l.b16 %v243
    %v868 = vunpack.c.l.b16 %v244
    %v869 = vunpack.c.l.b16 %v245
    %v870 = vunpack.c.l.b16 %v246
    %v871 = vunpack.c.l.b16 %v247
    %v872 = vunpack.c.l.b16 %v248
    %v873 = vunpack.c.l.b16 %v249
    %v874 = vunpack.c.l.b16 %v250
    %v875 = vunpack.c.l.b16 %v251
    %v876 = vunpack.c.l.b16 %v252
    %v877 = vunpack.c.l.b16 %v253
    %v878 = vunpack.c.l.b16 %v254
    %v879 = vunpack.c.l.b16 %v255
    %v880 = vunpack.c.l.b16 %v256
    %v881 = vunpack.c.l.b16 %v257
    %v882 = vunpack.c.l.b16 %v258
    %v883 = vunpack.c.l.b16 %v259
    %v884 = vunpack.c.l.b16 %v260
    %v885 = vunpack.c.l.b16 %v261
    %v886 = vunpack.c.l.b16 %v262
    %v887 = vunpack.c.l.b16 %v263
    %v888 = vpack.c.b16 %v729, %v728
    %v889 = vpack.c.b16 %v731, %v730
    %v890 = vpack.c.b16 %v733, %v732
    %v891 = vpack.c.b16 %v735, %v734
    %v892 = vpack.c.b16 %v737, %v736
    %v893 = vpack.c.b16 %v739, %v738
    %v894 = vpack.c.b16 %v741, %v740
    %v895 = vpack.c.b16 %v743, %v742
    %v896 = vpack.c.b16 %v745, %v744
    %v897 = vpack.c.b16 %v747, %v746
    %v898 = vpack.c.b16 %v749, %v748
    %v899 = vpack.c.b16 %v751, %v750
    %v900 = vpack.c.b16 %v753, %v752
    %v901 = vpack.c.b16 %v755, %v754
    %v902 = vpack.c.b16 %v757, %v756
    %v903 = vpack.c.b16 %v759, %v758
    %v904 = vpack.c.b16 %v761, %v760
    %v905 = vpack.c.b16 %v763, %v762
    %v906 = vpack.c.b16 %v765, %v764
    %v907 = vpack.c.b16 %v767, %v766
    %v908 = vpack.c.b16 %v769, %v768
    %v909 = vpack.c.b16 %v771, %v770
    %v910 = vpack.c.b16 %v773, %v772
    %v911 = vpack.c.b16 %v775, %v774
    %v912 = vpack.c.b16 %v777, %v776
    %v913 = vpack.c.b16 %v779, %v778
    %v914 = vpack.c.b16 %v781, %v780
    %v915 = vpack.c.b16 %v783, %v782
    %v916 = vpack.c.b16 %v785, %v784
    %v917 = vpack.c.b16 %v787, %v786
    %v918 = vpack.c.b16 %v789, %v788
    %v919 = vpack.c.b16 %v791, %v790
    %v920 = vpack.c.b16 %v793, %v792
    %v921 = vpack.c.b16 %v795, %v794
    %v922 = vpack.c.b16 %v797, %v796
    %v923 = vpack.c.b16 %v799, %v798
    %v924 = vpack.c.b16 %v801, %v800
    %v925 = vpack.c.b16 %v803, %v802
    %v926 = vpack.c.b16 %v805, %v804
    %v927 = vpack.c.b16 %v807, %v806
    %v928 = vpack.c.b16 %v809, %v808
    %v929 = vpack.c.b16 %v811, %v810
    %v930 = vpack.c.b16 %v813, %v812
    %v931 = vpack.c.b16 %v815, %v814
    %v932 = vpack.c.b16 %v817, %v816
    %v933 = vpack.c.b16 %v819, %v818
    %v934 = vpack.c.b16 %v821, %v820
    %v935 = vpack.c.b16 %v823, %v822
    %v936 = vpack.c.b16 %v825, %v824
    %v937 = vpack.c.b16 %v827, %v826
    %v938 = vpack.c.b16 %v829, %v828
    %v939 = vpack.c.b16 %v831, %v830
    %v940 = vpack.c.b16 %v833, %v832
    %v941 = vpack.c.b16 %v835, %v834
    %v942 = vpack.c.b16 %v837, %v836
    %v943 = vpack.c.b16 %v839, %v838
    %v944 = vpack.c.b16 %v841, %v840
    %v945 = vpack.c.b16 %v843, %v842
    %v946 = vpack.c.b16 %v845, %v844
    %v947 = vpack.c.b16 %v847, %v846
    %v948 = vpack.c.b16 %v849, %v848
    %v949 = vpack.c.b16 %v851, %v850
    %v950 = vpack.c.b16 %v853, %v852
    %v951 = vpack.c.b16 %v855, %v854
    %v952 = vpack.c.b16 %v857, %v856
    %v953 = vpack.c.b16 %v859, %v858
    %v954 = vpack.c.b16 %v861, %v860
    %v955 = vpack.c.b16 %v863, %v862
    %v956 = vpack.c.b16 %v865, %v864
    %v957 = vpack.c.b16 %v867, %v866
    %v958 = vpack.c.b16 %v869, %v868
    %v959 = vpack.c.b16 %v871, %v870
    %v960 = vpack.c.b16 %v873, %v872
    %v961 = vpack.c.b16 %v875, %v874
    %v962 = vpack.c.b16 %v877, %v876
    %v963 = vpack.c.b16 %v879, %v878
    %v964 = vpack.c.b16 %v881, %v880
    %v965 = vpack.c.b16 %v883, %v882
    %v966 = vpack.c.b16 %v885, %v884
    %v967 = vpack.c.b16 %v887, %v886
    %1048 = vmatprep.subr.bf16.mxu0 0
    %1049 = vmatpush1.bf16.msra.mxu0 %v888
    %1050 = vmatprep.subr.bf16.mxu0 0
    %1051 = vmatpush1.bf16.msra.mxu0 %v889
    %1052 = vmatprep.subr.bf16.mxu0 0
    %1053 = vmatpush1.bf16.msra.mxu0 %v890
    %1054 = vmatprep.subr.bf16.mxu0 0
    %1055 = vmatpush1.bf16.msra.mxu0 %v891
    %1056 = vmatprep.subr.bf16.mxu0 0
    %1057 = vmatpush1.bf16.msra.mxu0 %v892
    %1058 = vmatprep.subr.bf16.mxu0 0
    %1059 = vmatpush1.bf16.msra.mxu0 %v893
    %1060 = vmatprep.subr.bf16.mxu0 0
    %1061 = vmatpush1.bf16.msra.mxu0 %v894
    %1062 = vmatprep.subr.bf16.mxu0 0
    %1063 = vmatpush1.bf16.msra.mxu0 %v895
    %1064 = vmatprep.subr.bf16.mxu0 0
    %1065 = vmatpush1.bf16.msra.mxu0 %v896
    %1066 = vmatprep.subr.bf16.mxu0 0
    %1067 = vmatpush1.bf16.msra.mxu0 %v897
    %1068 = vmatprep.subr.bf16.mxu0 0
    %1069 = vmatpush1.bf16.msra.mxu0 %v898
    %1070 = vmatprep.subr.bf16.mxu0 0
    %1071 = vmatpush1.bf16.msra.mxu0 %v899
    %1072 = vmatprep.subr.bf16.mxu0 0
    %1073 = vmatpush1.bf16.msra.mxu0 %v900
    %1074 = vmatprep.subr.bf16.mxu0 0
    %1075 = vmatpush1.bf16.msra.mxu0 %v901
    %1076 = vmatprep.subr.bf16.mxu0 0
    %1077 = vmatpush1.bf16.msra.mxu0 %v902
    %1078 = vmatprep.subr.bf16.mxu0 0
    %1079 = vmatpush1.bf16.msra.mxu0 %v903
    %1080 = vmatprep.mubr.bf16.mxu0 %v546
    %1081 = vmatmul.mubr.bf16.gmra.mrb[0].mxu0 %v545
    %v1082 = vpop.f32.mrb[0].mxu0
    %v1083 = vadd.f32 0.0, %v1082
    %v1084 = vpop.f32.mrb[0].mxu0
    %v1085 = vpop.f32.mrb[0].mxu0
    %v1086 = vpop.f32.mrb[0].mxu0
    %1087 = vdwg.mxu0
    %1088 = vmatprep.subr.bf16.mxu0 0
    %1089 = vmatpush1.bf16.msra.mxu0 %v904
    %1090 = vmatprep.subr.bf16.mxu0 0
    %1091 = vmatpush1.bf16.msra.mxu0 %v905
    %1092 = vmatprep.subr.bf16.mxu0 0
    %1093 = vmatpush1.bf16.msra.mxu0 %v906
    %1094 = vmatprep.subr.bf16.mxu0 0
    %1095 = vmatpush1.bf16.msra.mxu0 %v907
    %1096 = vmatprep.subr.bf16.mxu0 0
    %1097 = vmatpush1.bf16.msra.mxu0 %v908
    %1098 = vmatprep.subr.bf16.mxu0 0
    %1099 = vmatpush1.bf16.msra.mxu0 %v909
    %1100 = vmatprep.subr.bf16.mxu0 0
    %1101 = vmatpush1.bf16.msra.mxu0 %v910
    %1102 = vmatprep.subr.bf16.mxu0 0
    %1103 = vmatpush1.bf16.msra.mxu0 %v911
    %1104 = vmatprep.subr.bf16.mxu0 0
    %1105 = vmatpush1.bf16.msra.mxu0 %v912
    %1106 = vmatprep.subr.bf16.mxu0 0
    %1107 = vmatpush1.bf16.msra.mxu0 %v913
    %1108 = vmatprep.subr.bf16.mxu0 0
    %1109 = vmatpush1.bf16.msra.mxu0 %v914
    %1110 = vmatprep.subr.bf16.mxu0 0
    %1111 = vmatpush1.bf16.msra.mxu0 %v915
    %1112 = vmatprep.subr.bf16.mxu0 0
    %1113 = vmatpush1.bf16.msra.mxu0 %v916
    %1114 = vmatprep.subr.bf16.mxu0 0
    %1115 = vmatpush1.bf16.msra.mxu0 %v917
    %1116 = vmatprep.subr.bf16.mxu0 0
    %1117 = vmatpush1.bf16.msra.mxu0 %v918
    %1118 = vmatprep.subr.bf16.mxu0 0
    %1119 = vmatpush1.bf16.msra.mxu0 %v919
    %1120 = vmatprep.mubr.bf16.mxu0 %v548
    %1121 = vmatmul.mubr.bf16.gmra.mrb[0].mxu0 %v547
    %v1122 = vpop.f32.mrb[0].mxu0
    %v1123 = vadd.f32 %v1083, %v1122
    %v1124 = vpop.f32.mrb[0].mxu0
    %v1125 = vpop.f32.mrb[0].mxu0
    %v1126 = vpop.f32.mrb[0].mxu0
    %1127 = vdwg.mxu0
    %1128 = vmatprep.subr.bf16.mxu0 0
    %1129 = vmatpush1.bf16.msra.mxu0 %v920
    %1130 = vmatprep.subr.bf16.mxu0 0
    %1131 = vmatpush1.bf16.msra.mxu0 %v921
    %1132 = vmatprep.subr.bf16.mxu0 0
    %1133 = vmatpush1.bf16.msra.mxu0 %v922
    %1134 = vmatprep.subr.bf16.mxu0 0
    %1135 = vmatpush1.bf16.msra.mxu0 %v923
    %1136 = vmatprep.subr.bf16.mxu0 0
    %1137 = vmatpush1.bf16.msra.mxu0 %v924
    %1138 = vmatprep.subr.bf16.mxu0 0
    %1139 = vmatpush1.bf16.msra.mxu0 %v925
    %1140 = vmatprep.subr.bf16.mxu0 0
    %1141 = vmatpush1.bf16.msra.mxu0 %v926
    %1142 = vmatprep.subr.bf16.mxu0 0
    %1143 = vmatpush1.bf16.msra.mxu0 %v927
    %1144 = vmatprep.subr.bf16.mxu0 0
    %1145 = vmatpush1.bf16.msra.mxu0 %v928
    %1146 = vmatprep.subr.bf16.mxu0 0
    %1147 = vmatpush1.bf16.msra.mxu0 %v929
    %1148 = vmatprep.subr.bf16.mxu0 0
    %1149 = vmatpush1.bf16.msra.mxu0 %v930
    %1150 = vmatprep.subr.bf16.mxu0 0
    %1151 = vmatpush1.bf16.msra.mxu0 %v931
    %1152 = vmatprep.subr.bf16.mxu0 0
    %1153 = vmatpush1.bf16.msra.mxu0 %v932
    %1154 = vmatprep.subr.bf16.mxu0 0
    %1155 = vmatpush1.bf16.msra.mxu0 %v933
    %1156 = vmatprep.subr.bf16.mxu0 0
    %1157 = vmatpush1.bf16.msra.mxu0 %v934
    %1158 = vmatprep.subr.bf16.mxu0 0
    %1159 = vmatpush1.bf16.msra.mxu0 %v935
    %1160 = vmatprep.mubr.bf16.mxu0 %v435
    %1161 = vmatmul.mubr.bf16.gmra.mrb[0].mxu0 %v549
    %v1162 = vpop.f32.mrb[0].mxu0
    %v1163 = vadd.f32 %v1123, %v1162
    %v1164 = vpop.f32.mrb[0].mxu0
    %v1165 = vpop.f32.mrb[0].mxu0
    %v1166 = vpop.f32.mrb[0].mxu0
    %1167 = vdwg.mxu0
    %1168 = vmatprep.subr.bf16.mxu0 0
    %1169 = vmatpush1.bf16.msra.mxu0 %v936
    %1170 = vmatprep.subr.bf16.mxu0 0
    %1171 = vmatpush1.bf16.msra.mxu0 %v937
    %1172 = vmatprep.subr.bf16.mxu0 0
    %1173 = vmatpush1.bf16.msra.mxu0 %v938
    %1174 = vmatprep.subr.bf16.mxu0 0
    %1175 = vmatpush1.bf16.msra.mxu0 %v939
    %1176 = vmatprep.subr.bf16.mxu0 0
    %1177 = vmatpush1.bf16.msra.mxu0 %v940
    %1178 = vmatprep.subr.bf16.mxu0 0
    %1179 = vmatpush1.bf16.msra.mxu0 %v941
    %1180 = vmatprep.subr.bf16.mxu0 0
    %1181 = vmatpush1.bf16.msra.mxu0 %v942
    %1182 = vmatprep.subr.bf16.mxu0 0
    %1183 = vmatpush1.bf16.msra.mxu0 %v943
    %1184 = vmatprep.subr.bf16.mxu0 0
    %1185 = vmatpush1.bf16.msra.mxu0 %v944
    %1186 = vmatprep.subr.bf16.mxu0 0
    %1187 = vmatpush1.bf16.msra.mxu0 %v945
    %1188 = vmatprep.subr.bf16.mxu0 0
    %1189 = vmatpush1.bf16.msra.mxu0 %v946
    %1190 = vmatprep.subr.bf16.mxu0 0
    %1191 = vmatpush1.bf16.msra.mxu0 %v947
    %1192 = vmatprep.subr.bf16.mxu0 0
    %1193 = vmatpush1.bf16.msra.mxu0 %v948
    %1194 = vmatprep.subr.bf16.mxu0 0
    %1195 = vmatpush1.bf16.msra.mxu0 %v949
    %1196 = vmatprep.subr.bf16.mxu0 0
    %1197 = vmatpush1.bf16.msra.mxu0 %v950
    %1198 = vmatprep.subr.bf16.mxu0 0
    %1199 = vmatpush1.bf16.msra.mxu0 %v951
    %1200 = vmatprep.mubr.bf16.mxu0 %v442
    %1201 = vmatmul.mubr.bf16.gmra.mrb[0].mxu0 %v443
    %v1202 = vpop.f32.mrb[0].mxu0
    %v1203 = vadd.f32 %v1163, %v1202
    %v1204 = vpop.f32.mrb[0].mxu0
    %v1205 = vpop.f32.mrb[0].mxu0
    %v1206 = vpop.f32.mrb[0].mxu0
    %1207 = vdwg.mxu0
    %1208 = vmatprep.subr.bf16.mxu0 0
    %1209 = vmatpush1.bf16.msra.mxu0 %v952
    %1210 = vmatprep.subr.bf16.mxu0 0
    %1211 = vmatpush1.bf16.msra.mxu0 %v953
    %1212 = vmatprep.subr.bf16.mxu0 0
    %1213 = vmatpush1.bf16.msra.mxu0 %v954
    %1214 = vmatprep.subr.bf16.mxu0 0
    %1215 = vmatpush1.bf16.msra.mxu0 %v955
    %1216 = vmatprep.subr.bf16.mxu0 0
    %1217 = vmatpush1.bf16.msra.mxu0 %v956
    %1218 = vmatprep.subr.bf16.mxu0 0
    %1219 = vmatpush1.bf16.msra.mxu0 %v957
    %1220 = vmatprep.subr.bf16.mxu0 0
    %1221 = vmatpush1.bf16.msra.mxu0 %v958
    %1222 = vmatprep.subr.bf16.mxu0 0
    %1223 = vmatpush1.bf16.msra.mxu0 %v959
    %1224 = vmatprep.subr.bf16.mxu0 0
    %1225 = vmatpush1.bf16.msra.mxu0 %v960
    %1226 = vmatprep.subr.bf16.mxu0 0
    %1227 = vmatpush1.bf16.msra.mxu0 %v961
    %1228 = vmatprep.subr.bf16.mxu0 0
    %1229 = vmatpush1.bf16.msra.mxu0 %v962
    %1230 = vmatprep.subr.bf16.mxu0 0
    %1231 = vmatpush1.bf16.msra.mxu0 %v963
    %1232 = vmatprep.subr.bf16.mxu0 0
    %1233 = vmatpush1.bf16.msra.mxu0 %v964
    %1234 = vmatprep.subr.bf16.mxu0 0
    %1235 = vmatpush1.bf16.msra.mxu0 %v965
    %1236 = vmatprep.subr.bf16.mxu0 0
    %1237 = vmatpush1.bf16.msra.mxu0 %v966
    %1238 = vmatprep.subr.bf16.mxu0 0
    %1239 = vmatpush1.bf16.msra.mxu0 %v967
    %1240 = vmatprep.mubr.bf16.mxu0 %v451
    %1241 = vmatmul.mubr.bf16.gmra.mrb[0].mxu0 %v444
    %v1242 = vpop.f32.mrb[0].mxu0
    %v1243 = vadd.f32 %v1203, %v1242
    %v1244 = vpop.f32.mrb[0].mxu0
    %v1245 = vpop.f32.mrb[0].mxu0
    %v1246 = vpop.f32.mrb[0].mxu0
    %1247 = vdwg.mxu0
    %v1408 = vunpack.c.l.b16 %v264
    %v1409 = vunpack.c.l.b16 %v265
    %v1410 = vunpack.c.l.b16 %v266
    %v1411 = vunpack.c.l.b16 %v267
    %v1412 = vunpack.c.l.b16 %v268
    %v1413 = vunpack.c.l.b16 %v269
    %v1414 = vunpack.c.l.b16 %v270
    %v1415 = vunpack.c.l.b16 %v271
    %v1416 = vunpack.c.l.b16 %v272
    %v1417 = vunpack.c.l.b16 %v273
    %v1418 = vunpack.c.l.b16 %v274
    %v1419 = vunpack.c.l.b16 %v275
    %v1420 = vunpack.c.l.b16 %v276
    %v1421 = vunpack.c.l.b16 %v277
    %v1422 = vunpack.c.l.b16 %v278
    %v1423 = vunpack.c.l.b16 %v279
    %v1424 = vunpack.c.l.b16 %v280
    %v1425 = vunpack.c.l.b16 %v281
    %v1426 = vunpack.c.l.b16 %v282
    %v1427 = vunpack.c.l.b16 %v283
    %v1428 = vunpack.c.l.b16 %v284
    %v1429 = vunpack.c.l.b16 %v285
    %v1430 = vunpack.c.l.b16 %v286
    %v1431 = vunpack.c.l.b16 %v287
    %v1432 = vunpack.c.l.b16 %v288
    %v1433 = vunpack.c.l.b16 %v289
    %v1434 = vunpack.c.l.b16 %v290
    %v1435 = vunpack.c.l.b16 %v291
    %v1436 = vunpack.c.l.b16 %v292
    %v1437 = vunpack.c.l.b16 %v293
    %v1438 = vunpack.c.l.b16 %v294
    %v1439 = vunpack.c.l.b16 %v295
    %v1440 = vunpack.c.l.b16 %v296
    %v1441 = vunpack.c.l.b16 %v297
    %v1442 = vunpack.c.l.b16 %v298
    %v1443 = vunpack.c.l.b16 %v299
    %v1444 = vunpack.c.l.b16 %v300
    %v1445 = vunpack.c.l.b16 %v301
    %v1446 = vunpack.c.l.b16 %v302
    %v1447 = vunpack.c.l.b16 %v303
    %v1448 = vunpack.c.l.b16 %v304
    %v1449 = vunpack.c.l.b16 %v305
    %v1450 = vunpack.c.l.b16 %v306
    %v1451 = vunpack.c.l.b16 %v307
    %v1452 = vunpack.c.l.b16 %v308
    %v1453 = vunpack.c.l.b16 %v309
    %v1454 = vunpack.c.l.b16 %v310
    %v1455 = vunpack.c.l.b16 %v311
    %v1456 = vunpack.c.l.b16 %v312
    %v1457 = vunpack.c.l.b16 %v313
    %v1458 = vunpack.c.l.b16 %v314
    %v1459 = vunpack.c.l.b16 %v315
    %v1460 = vunpack.c.l.b16 %v316
    %v1461 = vunpack.c.l.b16 %v317
    %v1462 = vunpack.c.l.b16 %v318
    %v1463 = vunpack.c.l.b16 %v319
    %v1464 = vunpack.c.l.b16 %v320
    %v1465 = vunpack.c.l.b16 %v321
    %v1466 = vunpack.c.l.b16 %v322
    %v1467 = vunpack.c.l.b16 %v323
    %v1468 = vunpack.c.l.b16 %v324
    %v1469 = vunpack.c.l.b16 %v325
    %v1470 = vunpack.c.l.b16 %v326
    %v1471 = vunpack.c.l.b16 %v327
    %v1472 = vunpack.c.l.b16 %v328
    %v1473 = vunpack.c.l.b16 %v329
    %v1474 = vunpack.c.l.b16 %v330
    %v1475 = vunpack.c.l.b16 %v331
    %v1476 = vunpack.c.l.b16 %v332
    %v1477 = vunpack.c.l.b16 %v333
    %v1478 = vunpack.c.l.b16 %v334
    %v1479 = vunpack.c.l.b16 %v335
    %v1480 = vunpack.c.l.b16 %v336
    %v1481 = vunpack.c.l.b16 %v337
    %v1482 = vunpack.c.l.b16 %v338
    %v1483 = vunpack.c.l.b16 %v339
    %v1484 = vunpack.c.l.b16 %v340
    %v1485 = vunpack.c.l.b16 %v341
    %v1486 = vunpack.c.l.b16 %v342
    %v1487 = vunpack.c.l.b16 %v343
    %v1488 = vunpack.c.l.b16 %v344
    %v1489 = vunpack.c.l.b16 %v345
    %v1490 = vunpack.c.l.b16 %v346
    %v1491 = vunpack.c.l.b16 %v347
    %v1492 = vunpack.c.l.b16 %v348
    %v1493 = vunpack.c.l.b16 %v349
    %v1494 = vunpack.c.l.b16 %v350
    %v1495 = vunpack.c.l.b16 %v351
    %v1496 = vunpack.c.l.b16 %v352
    %v1497 = vunpack.c.l.b16 %v353
    %v1498 = vunpack.c.l.b16 %v354
    %v1499 = vunpack.c.l.b16 %v355
    %v1500 = vunpack.c.l.b16 %v356
    %v1501 = vunpack.c.l.b16 %v357
    %v1502 = vunpack.c.l.b16 %v358
    %v1503 = vunpack.c.l.b16 %v359
    %v1504 = vunpack.c.l.b16 %v360
    %v1505 = vunpack.c.l.b16 %v361
    %v1506 = vunpack.c.l.b16 %v362
    %v1507 = vunpack.c.l.b16 %v363
    %v1508 = vunpack.c.l.b16 %v364
    %v1509 = vunpack.c.l.b16 %v365
    %v1510 = vunpack.c.l.b16 %v366
    %v1511 = vunpack.c.l.b16 %v367
    %v1512 = vunpack.c.l.b16 %v368
    %v1513 = vunpack.c.l.b16 %v369
    %v1514 = vunpack.c.l.b16 %v370
    %v1515 = vunpack.c.l.b16 %v371
    %v1516 = vunpack.c.l.b16 %v372
    %v1517 = vunpack.c.l.b16 %v373
    %v1518 = vunpack.c.l.b16 %v374
    %v1519 = vunpack.c.l.b16 %v375
    %v1520 = vunpack.c.l.b16 %v376
    %v1521 = vunpack.c.l.b16 %v377
    %v1522 = vunpack.c.l.b16 %v378
    %v1523 = vunpack.c.l.b16 %v379
    %v1524 = vunpack.c.l.b16 %v380
    %v1525 = vunpack.c.l.b16 %v381
    %v1526 = vunpack.c.l.b16 %v382
    %v1527 = vunpack.c.l.b16 %v383
    %v1528 = vunpack.c.l.b16 %v384
    %v1529 = vunpack.c.l.b16 %v385
    %v1530 = vunpack.c.l.b16 %v386
    %v1531 = vunpack.c.l.b16 %v387
    %v1532 = vunpack.c.l.b16 %v388
    %v1533 = vunpack.c.l.b16 %v389
    %v1534 = vunpack.c.l.b16 %v390
    %v1535 = vunpack.c.l.b16 %v391
    %v1536 = vunpack.c.l.b16 %v392
    %v1537 = vunpack.c.l.b16 %v393
    %v1538 = vunpack.c.l.b16 %v394
    %v1539 = vunpack.c.l.b16 %v395
    %v1540 = vunpack.c.l.b16 %v396
    %v1541 = vunpack.c.l.b16 %v397
    %v1542 = vunpack.c.l.b16 %v398
    %v1543 = vunpack.c.l.b16 %v399
    %v1544 = vunpack.c.l.b16 %v400
    %v1545 = vunpack.c.l.b16 %v401
    %v1546 = vunpack.c.l.b16 %v402
    %v1547 = vunpack.c.l.b16 %v403
    %v1548 = vunpack.c.l.b16 %v404
    %v1549 = vunpack.c.l.b16 %v405
    %v1550 = vunpack.c.l.b16 %v406
    %v1551 = vunpack.c.l.b16 %v407
    %v1552 = vunpack.c.l.b16 %v408
    %v1553 = vunpack.c.l.b16 %v409
    %v1554 = vunpack.c.l.b16 %v410
    %v1555 = vunpack.c.l.b16 %v411
    %v1556 = vunpack.c.l.b16 %v412
    %v1557 = vunpack.c.l.b16 %v413
    %v1558 = vunpack.c.l.b16 %v414
    %v1559 = vunpack.c.l.b16 %v415
    %v1560 = vunpack.c.l.b16 %v416
    %v1561 = vunpack.c.l.b16 %v417
    %v1562 = vunpack.c.l.b16 %v418
    %v1563 = vunpack.c.l.b16 %v419
    %v1564 = vunpack.c.l.b16 %v420
    %v1565 = vunpack.c.l.b16 %v421
    %v1566 = vunpack.c.l.b16 %v422
    %v1567 = vunpack.c.l.b16 %v423
    %v1568 = vpack.c.b16 %v1409, %v1408
    %v1569 = vpack.c.b16 %v1411, %v1410
    %v1570 = vpack.c.b16 %v1413, %v1412
    %v1571 = vpack.c.b16 %v1415, %v1414
    %v1572 = vpack.c.b16 %v1417, %v1416
    %v1573 = vpack.c.b16 %v1419, %v1418
    %v1574 = vpack.c.b16 %v1421, %v1420
    %v1575 = vpack.c.b16 %v1423, %v1422
    %v1576 = vpack.c.b16 %v1425, %v1424
    %v1577 = vpack.c.b16 %v1427, %v1426
    %v1578 = vpack.c.b16 %v1429, %v1428
    %v1579 = vpack.c.b16 %v1431, %v1430
    %v1580 = vpack.c.b16 %v1433, %v1432
    %v1581 = vpack.c.b16 %v1435, %v1434
    %v1582 = vpack.c.b16 %v1437, %v1436
    %v1583 = vpack.c.b16 %v1439, %v1438
    %v1584 = vpack.c.b16 %v1441, %v1440
    %v1585 = vpack.c.b16 %v1443, %v1442
    %v1586 = vpack.c.b16 %v1445, %v1444
    %v1587 = vpack.c.b16 %v1447, %v1446
    %v1588 = vpack.c.b16 %v1449, %v1448
    %v1589 = vpack.c.b16 %v1451, %v1450
    %v1590 = vpack.c.b16 %v1453, %v1452
    %v1591 = vpack.c.b16 %v1455, %v1454
    %v1592 = vpack.c.b16 %v1457, %v1456
    %v1593 = vpack.c.b16 %v1459, %v1458
    %v1594 = vpack.c.b16 %v1461, %v1460
    %v1595 = vpack.c.b16 %v1463, %v1462
    %v1596 = vpack.c.b16 %v1465, %v1464
    %v1597 = vpack.c.b16 %v1467, %v1466
    %v1598 = vpack.c.b16 %v1469, %v1468
    %v1599 = vpack.c.b16 %v1471, %v1470
    %v1600 = vpack.c.b16 %v1473, %v1472
    %v1601 = vpack.c.b16 %v1475, %v1474
    %v1602 = vpack.c.b16 %v1477, %v1476
    %v1603 = vpack.c.b16 %v1479, %v1478
    %v1604 = vpack.c.b16 %v1481, %v1480
    %v1605 = vpack.c.b16 %v1483, %v1482
    %v1606 = vpack.c.b16 %v1485, %v1484
    %v1607 = vpack.c.b16 %v1487, %v1486
    %v1608 = vpack.c.b16 %v1489, %v1488
    %v1609 = vpack.c.b16 %v1491, %v1490
    %v1610 = vpack.c.b16 %v1493, %v1492
    %v1611 = vpack.c.b16 %v1495, %v1494
    %v1612 = vpack.c.b16 %v1497, %v1496
    %v1613 = vpack.c.b16 %v1499, %v1498
    %v1614 = vpack.c.b16 %v1501, %v1500
    %v1615 = vpack.c.b16 %v1503, %v1502
    %v1616 = vpack.c.b16 %v1505, %v1504
    %v1617 = vpack.c.b16 %v1507, %v1506
    %v1618 = vpack.c.b16 %v1509, %v1508
    %v1619 = vpack.c.b16 %v1511, %v1510
    %v1620 = vpack.c.b16 %v1513, %v1512
    %v1621 = vpack.c.b16 %v1515, %v1514
    %v1622 = vpack.c.b16 %v1517, %v1516
    %v1623 = vpack.c.b16 %v1519, %v1518
    %v1624 = vpack.c.b16 %v1521, %v1520
    %v1625 = vpack.c.b16 %v1523, %v1522
    %v1626 = vpack.c.b16 %v1525, %v1524
    %v1627 = vpack.c.b16 %v1527, %v1526
    %v1628 = vpack.c.b16 %v1529, %v1528
    %v1629 = vpack.c.b16 %v1531, %v1530
    %v1630 = vpack.c.b16 %v1533, %v1532
    %v1631 = vpack.c.b16 %v1535, %v1534
    %v1632 = vpack.c.b16 %v1537, %v1536
    %v1633 = vpack.c.b16 %v1539, %v1538
    %v1634 = vpack.c.b16 %v1541, %v1540
    %v1635 = vpack.c.b16 %v1543, %v1542
    %v1636 = vpack.c.b16 %v1545, %v1544
    %v1637 = vpack.c.b16 %v1547, %v1546
    %v1638 = vpack.c.b16 %v1549, %v1548
    %v1639 = vpack.c.b16 %v1551, %v1550
    %v1640 = vpack.c.b16 %v1553, %v1552
    %v1641 = vpack.c.b16 %v1555, %v1554
    %v1642 = vpack.c.b16 %v1557, %v1556
    %v1643 = vpack.c.b16 %v1559, %v1558
    %v1644 = vpack.c.b16 %v1561, %v1560
    %v1645 = vpack.c.b16 %v1563, %v1562
    %v1646 = vpack.c.b16 %v1565, %v1564
    %v1647 = vpack.c.b16 %v1567, %v1566
    %1728 = vmatprep.subr.bf16.mxu0 0
    %1729 = vmatpush1.bf16.msra.mxu0 %v1568
    %1730 = vmatprep.subr.bf16.mxu0 0
    %1731 = vmatpush1.bf16.msra.mxu0 %v1569
    %1732 = vmatprep.subr.bf16.mxu0 0
    %1733 = vmatpush1.bf16.msra.mxu0 %v1570
    %1734 = vmatprep.subr.bf16.mxu0 0
    %1735 = vmatpush1.bf16.msra.mxu0 %v1571
    %1736 = vmatprep.subr.bf16.mxu0 0
    %1737 = vmatpush1.bf16.msra.mxu0 %v1572
    %1738 = vmatprep.subr.bf16.mxu0 0
    %1739 = vmatpush1.bf16.msra.mxu0 %v1573
    %1740 = vmatprep.subr.bf16.mxu0 0
    %1741 = vmatpush1.bf16.msra.mxu0 %v1574
    %1742 = vmatprep.subr.bf16.mxu0 0
    %1743 = vmatpush1.bf16.msra.mxu0 %v1575
    %1744 = vmatprep.subr.bf16.mxu0 0
    %1745 = vmatpush1.bf16.msra.mxu0 %v1576
    %1746 = vmatprep.subr.bf16.mxu0 0
    %1747 = vmatpush1.bf16.msra.mxu0 %v1577
    %1748 = vmatprep.subr.bf16.mxu0 0
    %1749 = vmatpush1.bf16.msra.mxu0 %v1578
    %1750 = vmatprep.subr.bf16.mxu0 0
    %1751 = vmatpush1.bf16.msra.mxu0 %v1579
    %1752 = vmatprep.subr.bf16.mxu0 0
    %1753 = vmatpush1.bf16.msra.mxu0 %v1580
    %1754 = vmatprep.subr.bf16.mxu0 0
    %1755 = vmatpush1.bf16.msra.mxu0 %v1581
    %1756 = vmatprep.subr.bf16.mxu0 0
    %1757 = vmatpush1.bf16.msra.mxu0 %v1582
    %1758 = vmatprep.subr.bf16.mxu0 0
    %1759 = vmatpush1.bf16.msra.mxu0 %v1583
    %1760 = vmatprep.mubr.bf16.mxu0 %v443
    %1761 = vmatmul.mubr.bf16.gmra.mrb[0].mxu0 %v435
    %v1762 = vpop.f32.mrb[0].mxu0
    %v1763 = vadd.f32 0.0, %v1762
    %v1764 = vpop.f32.mrb[0].mxu0
    %v1765 = vpop.f32.mrb[0].mxu0
    %v1766 = vpop.f32.mrb[0].mxu0
    %1767 = vdwg.mxu0
    %1768 = vmatprep.subr.bf16.mxu0 0
    %1769 = vmatpush1.bf16.msra.mxu0 %v1584
    %1770 = vmatprep.subr.bf16.mxu0 0
    %1771 = vmatpush1.bf16.msra.mxu0 %v1585
    %1772 = vmatprep.subr.bf16.mxu0 0
    %1773 = vmatpush1.bf16.msra.mxu0 %v1586
    %1774 = vmatprep.subr.bf16.mxu0 0
    %1775 = vmatpush1.bf16.msra.mxu0 %v1587
    %1776 = vmatprep.subr.bf16.mxu0 0
    %1777 = vmatpush1.bf16.msra.mxu0 %v1588
    %1778 = vmatprep.subr.bf16.mxu0 0
    %1779 = vmatpush1.bf16.msra.mxu0 %v1589
    %1780 = vmatprep.subr.bf16.mxu0 0
    %1781 = vmatpush1.bf16.msra.mxu0 %v1590
    %1782 = vmatprep.subr.bf16.mxu0 0
    %1783 = vmatpush1.bf16.msra.mxu0 %v1591
    %1784 = vmatprep.subr.bf16.mxu0 0
    %1785 = vmatpush1.bf16.msra.mxu0 %v1592
    %1786 = vmatprep.subr.bf16.mxu0 0
    %1787 = vmatpush1.bf16.msra.mxu0 %v1593
    %1788 = vmatprep.subr.bf16.mxu0 0
    %1789 = vmatpush1.bf16.msra.mxu0 %v1594
    %1790 = vmatprep.subr.bf16.mxu0 0
    %1791 = vmatpush1.bf16.msra.mxu0 %v1595
    %1792 = vmatprep.subr.bf16.mxu0 0
    %1793 = vmatpush1.bf16.msra.mxu0 %v1596
    %1794 = vmatprep.subr.bf16.mxu0 0
    %1795 = vmatpush1.bf16.msra.mxu0 %v1597
    %1796 = vmatprep.subr.bf16.mxu0 0
    %1797 = vmatpush1.bf16.msra.mxu0 %v1598
    %1798 = vmatprep.subr.bf16.mxu0 0
    %1799 = vmatpush1.bf16.msra.mxu0 %v1599
    %1800 = vmatprep.mubr.bf16.mxu0 %v444
    %1801 = vmatmul.mubr.bf16.gmra.mrb[0].mxu0 %v442
    %v1802 = vpop.f32.mrb[0].mxu0
    %v1803 = vadd.f32 %v1763, %v1802
    %v1804 = vpop.f32.mrb[0].mxu0
    %v1805 = vpop.f32.mrb[0].mxu0
    %v1806 = vpop.f32.mrb[0].mxu0
    %1807 = vdwg.mxu0
    %1808 = vmatprep.subr.bf16.mxu0 0
    %1809 = vmatpush1.bf16.msra.mxu0 %v1600
    %1810 = vmatprep.subr.bf16.mxu0 0
    %1811 = vmatpush1.bf16.msra.mxu0 %v1601
    %1812 = vmatprep.subr.bf16.mxu0 0
    %1813 = vmatpush1.bf16.msra.mxu0 %v1602
    %1814 = vmatprep.subr.bf16.mxu0 0
    %1815 = vmatpush1.bf16.msra.mxu0 %v1603
    %1816 = vmatprep.subr.bf16.mxu0 0
    %1817 = vmatpush1.bf16.msra.mxu0 %v1604
    %1818 = vmatprep.subr.bf16.mxu0 0
    %1819 = vmatpush1.bf16.msra.mxu0 %v1605
    %1820 = vmatprep.subr.bf16.mxu0 0
    %1821 = vmatpush1.bf16.msra.mxu0 %v1606
    %1822 = vmatprep.subr.bf16.mxu0 0
    %1823 = vmatpush1.bf16.msra.mxu0 %v1607
    %1824 = vmatprep.subr.bf16.mxu0 0
    %1825 = vmatpush1.bf16.msra.mxu0 %v1608
    %1826 = vmatprep.subr.bf16.mxu0 0
    %1827 = vmatpush1.bf16.msra.mxu0 %v1609
    %1828 = vmatprep.subr.bf16.mxu0 0
    %1829 = vmatpush1.bf16.msra.mxu0 %v1610
    %1830 = vmatprep.subr.bf16.mxu0 0
    %1831 = vmatpush1.bf16.msra.mxu0 %v1611
    %1832 = vmatprep.subr.bf16.mxu0 0
    %1833 = vmatpush1.bf16.msra.mxu0 %v1612
    %1834 = vmatprep.subr.bf16.mxu0 0
    %1835 = vmatpush1.bf16.msra.mxu0 %v1613
    %1836 = vmatprep.subr.bf16.mxu0 0
    %1837 = vmatpush1.bf16.msra.mxu0 %v1614
    %1838 = vmatprep.subr.bf16.mxu0 0
    %1839 = vmatpush1.bf16.msra.mxu0 %v1615
    %1840 = vmatprep.mubr.bf16.mxu0 %v558
    %1841 = vmatmul.mubr.bf16.gmra.mrb[0].mxu0 %v451
    %v1842 = vpop.f32.mrb[0].mxu0
    %v1843 = vadd.f32 %v1803, %v1842
    %v1844 = vpop.f32.mrb[0].mxu0
    %v1845 = vpop.f32.mrb[0].mxu0
    %v1846 = vpop.f32.mrb[0].mxu0
    %1847 = vdwg.mxu0
    %1848 = vmatprep.subr.bf16.mxu0 0
    %1849 = vmatpush1.bf16.msra.mxu0 %v1616
    %1850 = vmatprep.subr.bf16.mxu0 0
    %1851 = vmatpush1.bf16.msra.mxu0 %v1617
    %1852 = vmatprep.subr.bf16.mxu0 0
    %1853 = vmatpush1.bf16.msra.mxu0 %v1618
    %1854 = vmatprep.subr.bf16.mxu0 0
    %1855 = vmatpush1.bf16.msra.mxu0 %v1619
    %1856 = vmatprep.subr.bf16.mxu0 0
    %1857 = vmatpush1.bf16.msra.mxu0 %v1620
    %1858 = vmatprep.subr.bf16.mxu0 0
    %1859 = vmatpush1.bf16.msra.mxu0 %v1621
    %1860 = vmatprep.subr.bf16.mxu0 0
    %1861 = vmatpush1.bf16.msra.mxu0 %v1622
    %1862 = vmatprep.subr.bf16.mxu0 0
    %1863 = vmatpush1.bf16.msra.mxu0 %v1623
    %1864 = vmatprep.subr.bf16.mxu0 0
    %1865 = vmatpush1.bf16.msra.mxu0 %v1624
    %1866 = vmatprep.subr.bf16.mxu0 0
    %1867 = vmatpush1.bf16.msra.mxu0 %v1625
    %1868 = vmatprep.subr.bf16.mxu0 0
    %1869 = vmatpush1.bf16.msra.mxu0 %v1626
    %1870 = vmatprep.subr.bf16.mxu0 0
    %1871 = vmatpush1.bf16.msra.mxu0 %v1627
    %1872 = vmatprep.subr.bf16.mxu0 0
    %1873 = vmatpush1.bf16.msra.mxu0 %v1628
    %1874 = vmatprep.subr.bf16.mxu0 0
    %1875 = vmatpush1.bf16.msra.mxu0 %v1629
    %1876 = vmatprep.subr.bf16.mxu0 0
    %1877 = vmatpush1.bf16.msra.mxu0 %v1630
    %1878 = vmatprep.subr.bf16.mxu0 0
    %1879 = vmatpush1.bf16.msra.mxu0 %v1631
    %1880 = vmatprep.mubr.bf16.mxu0 %v560
    %1881 = vmatmul.mubr.bf16.gmra.mrb[0].mxu0 %v559
    %v1882 = vpop.f32.mrb[0].mxu0
    %v1883 = vadd.f32 %v1843, %v1882
    %v1884 = vpop.f32.mrb[0].mxu0
    %v1885 = vpop.f32.mrb[0].mxu0
    %v1886 = vpop.f32.mrb[0].mxu0
    %1887 = vdwg.mxu0
    %1888 = vmatprep.subr.bf16.mxu0 0
    %1889 = vmatpush1.bf16.msra.mxu0 %v1632
    %1890 = vmatprep.subr.bf16.mxu0 0
    %1891 = vmatpush1.bf16.msra.mxu0 %v1633
    %1892 = vmatprep.subr.bf16.mxu0 0
    %1893 = vmatpush1.bf16.msra.mxu0 %v1634
    %1894 = vmatprep.subr.bf16.mxu0 0
    %1895 = vmatpush1.bf16.msra.mxu0 %v1635
    %1896 = vmatprep.subr.bf16.mxu0 0
    %1897 = vmatpush1.bf16.msra.mxu0 %v1636
    %1898 = vmatprep.subr.bf16.mxu0 0
    %1899 = vmatpush1.bf16.msra.mxu0 %v1637
    %1900 = vmatprep.subr.bf16.mxu0 0
    %1901 = vmatpush1.bf16.msra.mxu0 %v1638
    %1902 = vmatprep.subr.bf16.mxu0 0
    %1903 = vmatpush1.bf16.msra.mxu0 %v1639
    %1904 = vmatprep.subr.bf16.mxu0 0
    %1905 = vmatpush1.bf16.msra.mxu0 %v1640
    %1906 = vmatprep.subr.bf16.mxu0 0
    %1907 = vmatpush1.bf16.msra.mxu0 %v1641
    %1908 = vmatprep.subr.bf16.mxu0 0
    %1909 = vmatpush1.bf16.msra.mxu0 %v1642
    %1910 = vmatprep.subr.bf16.mxu0 0
    %1911 = vmatpush1.bf16.msra.mxu0 %v1643
    %1912 = vmatprep.subr.bf16.mxu0 0
    %1913 = vmatpush1.bf16.msra.mxu0 %v1644
    %1914 = vmatprep.subr.bf16.mxu0 0
    %1915 = vmatpush1.bf16.msra.mxu0 %v1645
    %1916 = vmatprep.subr.bf16.mxu0 0
    %1917 = vmatpush1.bf16.msra.mxu0 %v1646
    %1918 = vmatprep.subr.bf16.mxu0 0
    %1919 = vmatpush1.bf16.msra.mxu0 %v1647
    %1920 = vmatprep.mubr.bf16.mxu0 %v562
    %1921 = vmatmul.mubr.bf16.gmra.mrb[0].mxu0 %v561
    %v1922 = vpop.f32.mrb[0].mxu0
    %v1923 = vadd.f32 %v1883, %v1922
    %v1924 = vpop.f32.mrb[0].mxu0
    %v1925 = vpop.f32.mrb[0].mxu0
    %v1926 = vpop.f32.mrb[0].mxu0
    %1927 = vdwg.mxu0
    %v1930 = vunpack.c.l.s4 1966171168
    %v1931 = vunpack.c.0.s8 %v1930
    %v1932 = vlaneseq
    %v1933 = vshrl.u32 %v1932, 7
    %v1934 = vsub.s32 %v1931, %v1933
    %v1935 = vrot.slane %v1243, %v1934
    %v1936 = vcombine.high %v1935, %v1935
    %v1938 = vunpack.c.l.s4 1966171168
    %v1939 = vunpack.c.0.s8 %v1938
    %v1940 = vlaneseq
    %v1941 = vshrl.u32 %v1940, 7
    %v1942 = vsub.s32 %v1939, %v1941
    %v1943 = vrot.slane %v1935, %v1942
    %v1945 = vunpack.c.l.s4 1966171168
    %v1946 = vunpack.c.0.s8 %v1945
    %v1947 = vlaneseq
    %v1948 = vshrl.u32 %v1947, 7
    %v1949 = vsub.s32 %v1946, %v1948
    %v1950 = vrot.slane %v1936, %v1949
    %v1951 = vcombine.high %v1943, %v1943
    %v1952 = vcombine.high %v1950, %v1950
    %v1959 = vunpack.c.l.s4 1966171168
    %v1960 = vunpack.c.0.s8 %v1959
    %v1961 = vlaneseq
    %v1962 = vshrl.u32 %v1961, 7
    %v1963 = vsub.s32 %v1960, %v1962
    %v1964 = vrot.slane %v1923, %v1963
    %v1965 = vcombine.high %v1964, %v1964
    %v1967 = vunpack.c.l.s4 1966171168
    %v1968 = vunpack.c.0.s8 %v1967
    %v1969 = vlaneseq
    %v1970 = vshrl.u32 %v1969, 7
    %v1971 = vsub.s32 %v1968, %v1970
    %v1972 = vrot.slane %v1964, %v1971
    %v1974 = vunpack.c.l.s4 1966171168
    %v1975 = vunpack.c.0.s8 %v1974
    %v1976 = vlaneseq
    %v1977 = vshrl.u32 %v1976, 7
    %v1978 = vsub.s32 %v1975, %v1977
    %v1979 = vrot.slane %v1965, %v1978
    %v1980 = vcombine.high %v1972, %v1972
    %v1981 = vcombine.high %v1979, %v1979
    %v1982 = vlaneseq
    %v1983 = vshrl.u32 %v1982, 7
    %v1984 = vsub.s32 0, %v1983
    %v1985 = vrot.slane %v1972, %v1984
    %v1986 = vlaneseq
    %v1987 = vshrl.u32 %v1986, 7
    %v1988 = vsub.s32 0, %v1987
    %v1989 = vrot.slane %v1979, %v1988
    %v1990 = vlaneseq
    %v1991 = vshrl.u32 %v1990, 7
    %v1992 = vsub.s32 0, %v1991
    %v1993 = vrot.slane %v1980, %v1992
    %v1994 = vlaneseq
    %v1995 = vshrl.u32 %v1994, 7
    %v1996 = vsub.s32 0, %v1995
    %v1997 = vrot.slane %v1981, %v1996
    %vm2002 = vcmask 1040384
    %v2003 = vsel %vm2002, %v1943, %v1985
    %v2004 = vsel %vm2002, %v1950, %v1989
    %v2005 = vsel %vm2002, %v1951, %v1993
    %v2006 = vsel %vm2002, %v1952, %v1997
    %v2008 = vcombine.high %v424, %v424
    %v2010 = vunpack.c.l.s4 1983009808
    %v2011 = vunpack.c.0.s8 %v2010
    %v2012 = vlaneseq
    %v2013 = vshrl.u32 %v2012, 7
    %v2014 = vsub.s32 %v2011, %v2013
    %v2015 = vrot.slane %v424, %v2014
    %v2017 = vunpack.c.l.s4 1983009808
    %v2018 = vunpack.c.0.s8 %v2017
    %v2019 = vlaneseq
    %v2020 = vshrl.u32 %v2019, 7
    %v2021 = vsub.s32 %v2018, %v2020
    %v2022 = vrot.slane %v2008, %v2021
    %v2023 = vcombine.high %v2015, %v2015
    %v2024 = vcombine.high %v2022, %v2022
    %v2029 = vadd.f32 %v2003, %v2015
    %v2030 = vadd.f32 %v2004, %v2023
    %v2031 = vadd.f32 %v2005, %v2022
    %v2032 = vadd.f32 %v2006, %v2024
    %v2034 = vlaneseq
    %v2035 = vshrl.u32 %v2034, 7
    %v2036 = vsub.s32 0, %v2035
    %v2037 = vrot.slane %v425, %v2036
    %v2038 = vcombine.high %v2037, %v2037
    %v2040 = vunpack.c.l.s4 1983009808
    %v2041 = vunpack.c.0.s8 %v2040
    %v2042 = vlaneseq
    %v2043 = vshrl.u32 %v2042, 7
    %v2044 = vsub.s32 %v2041, %v2043
    %v2045 = vrot.slane %v2037, %v2044
    %v2047 = vunpack.c.l.s4 1983009808
    %v2048 = vunpack.c.0.s8 %v2047
    %v2049 = vlaneseq
    %v2050 = vshrl.u32 %v2049, 7
    %v2051 = vsub.s32 %v2048, %v2050
    %v2052 = vrot.slane %v2038, %v2051
    %v2053 = vcombine.high %v2045, %v2045
    %v2054 = vcombine.high %v2052, %v2052
    %v2059 = vadd.f32 %v2029, %v2045
    %v2060 = vadd.f32 %v2030, %v2053
    %v2061 = vadd.f32 %v2031, %v2052
    %v2062 = vadd.f32 %v2032, %v2054
    %v2063 = vmax.f32 %v2059, 0.0
    %v2064 = vmax.f32 %v2060, 0.0
    %v2065 = vmax.f32 %v2061, 0.0
    %v2066 = vmax.f32 %v2062, 0.0
    %v2067 = vld [vmem:[#allocation6] sm:$0xff]
    %v2068 = vld [vmem:[#allocation6 + $0x8] sm:$0xff]
    %v2069 = vld [vmem:[#allocation6 + $0x10] sm:$0xff]
    %v2070 = vld [vmem:[#allocation6 + $0x18] sm:$0xff]
    %v2071 = vld [vmem:[#allocation6 + $0x20] sm:$0xff]
    %v2072 = vld [vmem:[#allocation6 + $0x28] sm:$0xff]
    %v2073 = vld [vmem:[#allocation6 + $0x30] sm:$0xff]
    %v2074 = vld [vmem:[#allocation6 + $0x38] sm:$0xff]
    %v2075 = vld [vmem:[#allocation6 + $0x40] sm:$0xff]
    %v2076 = vld [vmem:[#allocation6 + $0x48] sm:$0xff]
    %v2077 = vld [vmem:[#allocation6 + $0x50] sm:$0xff]
    %v2078 = vld [vmem:[#allocation6 + $0x58] sm:$0xff]
    %v2079 = vld [vmem:[#allocation6 + $0x60] sm:$0xff]
    %v2080 = vld [vmem:[#allocation6 + $0x68] sm:$0xff]
    %v2081 = vld [vmem:[#allocation6 + $0x70] sm:$0xff]
    %v2082 = vld [vmem:[#allocation6 + $0x78] sm:$0xff]
    %v2083 = vld [vmem:[#allocation6 + $0x80] sm:$0xff]
    %v2084 = vld [vmem:[#allocation6 + $0x88] sm:$0xff]
    %v2085 = vld [vmem:[#allocation6 + $0x90] sm:$0xff]
    %v2086 = vld [vmem:[#allocation6 + $0x98] sm:$0xff]
    %v2087 = vld [vmem:[#allocation6 + $0xa0] sm:$0xff]
    %v2088 = vld [vmem:[#allocation6 + $0xa8] sm:$0xff]
    %v2089 = vld [vmem:[#allocation6 + $0xb0] sm:$0xff]
    %v2090 = vld [vmem:[#allocation6 + $0xb8] sm:$0xff]
    %v2091 = vld [vmem:[#allocation6 + $0xc0] sm:$0xff]
    %v2092 = vld [vmem:[#allocation6 + $0xc8] sm:$0xff]
    %v2093 = vld [vmem:[#allocation6 + $0xd0] sm:$0xff]
    %v2094 = vld [vmem:[#allocation6 + $0xd8] sm:$0xff]
    %v2095 = vld [vmem:[#allocation6 + $0xe0] sm:$0xff]
    %v2096 = vld [vmem:[#allocation6 + $0xe8] sm:$0xff]
    %v2097 = vld [vmem:[#allocation6 + $0xf0] sm:$0xff]
    %v2098 = vld [vmem:[#allocation6 + $0xf8] sm:$0xff]
    %v2099 = vld [vmem:[#allocation7] sm:$0xff]
    %v2100 = vld [vmem:[#allocation7 + $0x8] sm:$0xff]
    %v2101 = vld [vmem:[#allocation7 + $0x10] sm:$0xff]
    %v2102 = vld [vmem:[#allocation7 + $0x18] sm:$0xff]
    %v2103 = vld [vmem:[#allocation7 + $0x20] sm:$0xff]
    %v2104 = vld [vmem:[#allocation7 + $0x28] sm:$0xff]
    %v2105 = vld [vmem:[#allocation7 + $0x30] sm:$0xff]
    %v2106 = vld [vmem:[#allocation7 + $0x38] sm:$0xff]
    %v2107 = vld [vmem:[#allocation7 + $0x40] sm:$0xff]
    %v2108 = vld [vmem:[#allocation7 + $0x48] sm:$0xff]
    %v2109 = vld [vmem:[#allocation7 + $0x50] sm:$0xff]
    %v2110 = vld [vmem:[#allocation7 + $0x58] sm:$0xff]
    %v2111 = vld [vmem:[#allocation7 + $0x60] sm:$0xff]
    %v2112 = vld [vmem:[#allocation7 + $0x68] sm:$0xff]
    %v2113 = vld [vmem:[#allocation7 + $0x70] sm:$0xff]
    %v2114 = vld [vmem:[#allocation7 + $0x78] sm:$0xff]
    %v2115 = vld [vmem:[#allocation7 + $0x80] sm:$0xff]
    %v2116 = vld [vmem:[#allocation7 + $0x88] sm:$0xff]
    %v2117 = vld [vmem:[#allocation7 + $0x90] sm:$0xff]
    %v2118 = vld [vmem:[#allocation7 + $0x98] sm:$0xff]
    %v2119 = vld [vmem:[#allocation7 + $0xa0] sm:$0xff]
    %v2120 = vld [vmem:[#allocation7 + $0xa8] sm:$0xff]
    %v2121 = vld [vmem:[#allocation7 + $0xb0] sm:$0xff]
    %v2122 = vld [vmem:[#allocation7 + $0xb8] sm:$0xff]
    %v2123 = vld [vmem:[#allocation7 + $0xc0] sm:$0xff]
    %v2124 = vld [vmem:[#allocation7 + $0xc8] sm:$0xff]
    %v2125 = vld [vmem:[#allocation7 + $0xd0] sm:$0xff]
    %v2126 = vld [vmem:[#allocation7 + $0xd8] sm:$0xff]
    %v2127 = vld [vmem:[#allocation7 + $0xe0] sm:$0xff]
    %v2128 = vld [vmem:[#allocation7 + $0xe8] sm:$0xff]
    %v2129 = vld [vmem:[#allocation7 + $0xf0] sm:$0xff]
    %v2130 = vld [vmem:[#allocation7 + $0xf8] sm:$0xff]
    %v2131 = vld [vmem:[%s2] sm:$0xff]
    %v2132 = vld [vmem:[%s2 + $0x8] sm:$0xff]
    %v2133 = vld [vmem:[%s2 + $0x10] sm:$0xff]
    %v2134 = vld [vmem:[%s2 + $0x18] sm:$0xff]
    %v2135 = vld [vmem:[%s11] sm:$0x3]
    %v2140 = vcombine.low %v2063, %v2064
    %v2141 = vcombine.low %v2065, %v2066
    %v2143 = vunpack.c.l.s4 1983009808
    %v2144 = vunpack.c.0.s8 %v2143
    %v2145 = vlaneseq
    %v2146 = vshrl.u32 %v2145, 7
    %v2147 = vsub.s32 %v2144, %v2146
    %v2148 = vrot.slane %v2140, %v2147
    %v2150 = vunpack.c.l.s4 1983009808
    %v2151 = vunpack.c.0.s8 %v2150
    %v2152 = vlaneseq
    %v2153 = vshrl.u32 %v2152, 7
    %v2154 = vsub.s32 %v2151, %v2153
    %v2155 = vrot.slane %v2141, %v2154
    %v2156 = vcombine.low %v2148, %v2155
    %v2158 = vpack.c.bf16 %v2156, %v2156
    %v2160 = vshrl.u32 %v2158, 16
    %v2162 = vrot.slane %v2160, 7
    %v2163 = vshll.u32 %v2158, 16
    %v2165 = vor.u32 %v2162, %v2163
    %v2167 = vsel %vm494, 0, %v2165
    %v2168 = vrot.slane %v2163, 1
    %v2169 = vor.u32 %v2160, %v2168
    %vm2171 = vcmask 1043456
    %vm2172 = vsmask.f32 3328
    %vm2173 = vmand %vm2171, %vm2172
    %v2174 = vsel %vm2173, %v2169, 0
    %vm2175 = vcmp.lt.s32.totalorder %v524, 0
    %v2176 = vsub.s32 0, %v524
    %v2177 = vsel %vm2175, %v2176, %v524
    %v2178 = vshrl.u32 %v2177, 2
    %v2179 = vand.u32 %v2177, 3
    %v2180 = vsub.s32 0, %v2179
    %v2181 = vsel %vm2175, %v2180, %v2179
    %vm2182 = vcmp.ne.s32.totalorder %v2181, 0
    %vm2183 = vcmp.lt.s32.totalorder %v2181, 0
    %vm2184 = vmand %vm2183, %vm2182
    %v2185 = vadd.s32 %v2181, 4
    %v2186 = vsel %vm2184, %v2185, %v2181
    %vm2187 = vcmp.eq.s32.totalorder %v2186, 0
    %v2188 = vsel %vm2187, 1, 0
    %vm2189 = vcmp.eq.s32.totalorder %v2188, 1
    %vm2190 = vmpackc.low %vm2189, %vm2189
    %v2191 = vsel %vm2190, 0, %v2167
    %vm2192 = vcmp.eq.s32.totalorder %v2186, 3
    %v2193 = vsel %vm2192, 1, 0
    %vm2194 = vcmp.eq.s32.totalorder %v2193, 1
    %vm2195 = vmpackc.low %vm2194, %vm2194
    %v2196 = vsel %vm2195, 0, %v2174
    %v2229 = vunpack.c.l.b16 %v2067
    %v2230 = vunpack.c.h.b16 %v2067
    %v2231 = vunpack.c.l.b16 %v2068
    %v2232 = vunpack.c.h.b16 %v2068
    %v2233 = vunpack.c.l.b16 %v2069
    %v2234 = vunpack.c.h.b16 %v2069
    %v2235 = vunpack.c.l.b16 %v2070
    %v2236 = vunpack.c.h.b16 %v2070
    %v2237 = vunpack.c.l.b16 %v2071
    %v2238 = vunpack.c.h.b16 %v2071
    %v2239 = vunpack.c.l.b16 %v2072
    %v2240 = vunpack.c.h.b16 %v2072
    %v2241 = vunpack.c.l.b16 %v2073
    %v2242 = vunpack.c.h.b16 %v2073
    %v2243 = vunpack.c.l.b16 %v2074
    %v2244 = vunpack.c.h.b16 %v2074
    %v2245 = vunpack.c.l.b16 %v2075
    %v2246 = vunpack.c.h.b16 %v2075
    %v2247 = vunpack.c.l.b16 %v2076
    %v2248 = vunpack.c.h.b16 %v2076
    %v2249 = vunpack.c.l.b16 %v2077
    %v2250 = vunpack.c.h.b16 %v2077
    %v2251 = vunpack.c.l.b16 %v2078
    %v2252 = vunpack.c.h.b16 %v2078
    %v2253 = vunpack.c.l.b16 %v2079
    %v2254 = vunpack.c.h.b16 %v2079
    %v2255 = vunpack.c.l.b16 %v2080
    %v2256 = vunpack.c.h.b16 %v2080
    %v2257 = vunpack.c.l.b16 %v2081
    %v2258 = vunpack.c.h.b16 %v2081
    %v2259 = vunpack.c.l.b16 %v2082
    %v2260 = vunpack.c.h.b16 %v2082
    %v2261 = vunpack.c.l.b16 %v2083
    %v2262 = vunpack.c.h.b16 %v2083
    %v2263 = vunpack.c.l.b16 %v2084
    %v2264 = vunpack.c.h.b16 %v2084
    %v2265 = vunpack.c.l.b16 %v2085
    %v2266 = vunpack.c.h.b16 %v2085
    %v2267 = vunpack.c.l.b16 %v2086
    %v2268 = vunpack.c.h.b16 %v2086
    %v2269 = vunpack.c.l.b16 %v2087
    %v2270 = vunpack.c.h.b16 %v2087
    %v2271 = vunpack.c.l.b16 %v2088
    %v2272 = vunpack.c.h.b16 %v2088
    %v2273 = vunpack.c.l.b16 %v2089
    %v2274 = vunpack.c.h.b16 %v2089
    %v2275 = vunpack.c.l.b16 %v2090
    %v2276 = vunpack.c.h.b16 %v2090
    %v2277 = vunpack.c.l.b16 %v2091
    %v2278 = vunpack.c.h.b16 %v2091
    %v2279 = vunpack.c.l.b16 %v2092
    %v2280 = vunpack.c.h.b16 %v2092
    %v2281 = vunpack.c.l.b16 %v2093
    %v2282 = vunpack.c.h.b16 %v2093
    %v2283 = vunpack.c.l.b16 %v2094
    %v2284 = vunpack.c.h.b16 %v2094
    %v2285 = vunpack.c.l.b16 %v2095
    %v2286 = vunpack.c.h.b16 %v2095
    %v2287 = vunpack.c.l.b16 %v2096
    %v2288 = vunpack.c.h.b16 %v2096
    %v2289 = vunpack.c.l.b16 %v2097
    %v2290 = vunpack.c.h.b16 %v2097
    %v2291 = vunpack.c.l.b16 %v2098
    %v2292 = vunpack.c.h.b16 %v2098
    %v2293 = vpack.c.b16 %v2231, %v2229
    %v2294 = vpack.c.b16 %v2232, %v2230
    %v2295 = vpack.c.b16 %v2235, %v2233
    %v2296 = vpack.c.b16 %v2236, %v2234
    %v2297 = vpack.c.b16 %v2239, %v2237
    %v2298 = vpack.c.b16 %v2240, %v2238
    %v2299 = vpack.c.b16 %v2243, %v2241
    %v2300 = vpack.c.b16 %v2244, %v2242
    %v2301 = vpack.c.b16 %v2247, %v2245
    %v2302 = vpack.c.b16 %v2248, %v2246
    %v2303 = vpack.c.b16 %v2251, %v2249
    %v2304 = vpack.c.b16 %v2252, %v2250
    %v2305 = vpack.c.b16 %v2255, %v2253
    %v2306 = vpack.c.b16 %v2256, %v2254
    %v2307 = vpack.c.b16 %v2259, %v2257
    %v2308 = vpack.c.b16 %v2260, %v2258
    %v2309 = vpack.c.b16 %v2263, %v2261
    %v2310 = vpack.c.b16 %v2264, %v2262
    %v2311 = vpack.c.b16 %v2267, %v2265
    %v2312 = vpack.c.b16 %v2268, %v2266
    %v2313 = vpack.c.b16 %v2271, %v2269
    %v2314 = vpack.c.b16 %v2272, %v2270
    %v2315 = vpack.c.b16 %v2275, %v2273
    %v2316 = vpack.c.b16 %v2276, %v2274
    %v2317 = vpack.c.b16 %v2279, %v2277
    %v2318 = vpack.c.b16 %v2280, %v2278
    %v2319 = vpack.c.b16 %v2283, %v2281
    %v2320 = vpack.c.b16 %v2284, %v2282
    %v2321 = vpack.c.b16 %v2287, %v2285
    %v2322 = vpack.c.b16 %v2288, %v2286
    %v2323 = vpack.c.b16 %v2291, %v2289
    %v2324 = vpack.c.b16 %v2292, %v2290
    %2357 = vmatprep.subr.bf16.mxu0 %v2294
    %2358 = vmatpush1.bf16.msra.mxu0 %v2293
    %2359 = vmatprep.subr.bf16.mxu0 %v2296
    %2360 = vmatpush1.bf16.msra.mxu0 %v2295
    %2361 = vmatprep.subr.bf16.mxu0 %v2298
    %2362 = vmatpush1.bf16.msra.mxu0 %v2297
    %2363 = vmatprep.subr.bf16.mxu0 %v2300
    %2364 = vmatpush1.bf16.msra.mxu0 %v2299
    %2365 = vmatprep.subr.bf16.mxu0 %v2302
    %2366 = vmatpush1.bf16.msra.mxu0 %v2301
    %2367 = vmatprep.subr.bf16.mxu0 %v2304
    %2368 = vmatpush1.bf16.msra.mxu0 %v2303
    %2369 = vmatprep.subr.bf16.mxu0 %v2306
    %2370 = vmatpush1.bf16.msra.mxu0 %v2305
    %2371 = vmatprep.subr.bf16.mxu0 %v2308
    %2372 = vmatpush1.bf16.msra.mxu0 %v2307
    %2373 = vmatprep.subr.bf16.mxu0 %v2310
    %2374 = vmatpush1.bf16.msra.mxu0 %v2309
    %2375 = vmatprep.subr.bf16.mxu0 %v2312
    %2376 = vmatpush1.bf16.msra.mxu0 %v2311
    %2377 = vmatprep.subr.bf16.mxu0 %v2314
    %2378 = vmatpush1.bf16.msra.mxu0 %v2313
    %2379 = vmatprep.subr.bf16.mxu0 %v2316
    %2380 = vmatpush1.bf16.msra.mxu0 %v2315
    %2381 = vmatprep.subr.bf16.mxu0 %v2318
    %2382 = vmatpush1.bf16.msra.mxu0 %v2317
    %2383 = vmatprep.subr.bf16.mxu0 %v2320
    %2384 = vmatpush1.bf16.msra.mxu0 %v2319
    %2385 = vmatprep.subr.bf16.mxu0 %v2322
    %2386 = vmatpush1.bf16.msra.mxu0 %v2321
    %2387 = vmatprep.subr.bf16.mxu0 %v2324
    %2388 = vmatpush1.bf16.msra.mxu0 %v2323
    %2389 = vmatprep.mubr.bf16.mxu0 %v2158
    %2390 = vmatmul.mubr.bf16.gmra.mrb[0].mxu0 %v2191
    %v2391 = vpop.f32.mrb[0].mxu0
    %v2392 = vadd.f32 0.0, %v2391
    %v2393 = vpop.f32.mrb[0].mxu0
    %v2394 = vadd.f32 0.0, %v2393
    %v2395 = vpop.f32.mrb[0].mxu0
    %v2396 = vpop.f32.mrb[0].mxu0
    %2397 = vdwg.mxu0
    %v2430 = vunpack.c.l.b16 %v2099
    %v2431 = vunpack.c.h.b16 %v2099
    %v2432 = vunpack.c.l.b16 %v2100
    %v2433 = vunpack.c.h.b16 %v2100
    %v2434 = vunpack.c.l.b16 %v2101
    %v2435 = vunpack.c.h.b16 %v2101
    %v2436 = vunpack.c.l.b16 %v2102
    %v2437 = vunpack.c.h.b16 %v2102
    %v2438 = vunpack.c.l.b16 %v2103
    %v2439 = vunpack.c.h.b16 %v2103
    %v2440 = vunpack.c.l.b16 %v2104
    %v2441 = vunpack.c.h.b16 %v2104
    %v2442 = vunpack.c.l.b16 %v2105
    %v2443 = vunpack.c.h.b16 %v2105
    %v2444 = vunpack.c.l.b16 %v2106
    %v2445 = vunpack.c.h.b16 %v2106
    %v2446 = vunpack.c.l.b16 %v2107
    %v2447 = vunpack.c.h.b16 %v2107
    %v2448 = vunpack.c.l.b16 %v2108
    %v2449 = vunpack.c.h.b16 %v2108
    %v2450 = vunpack.c.l.b16 %v2109
    %v2451 = vunpack.c.h.b16 %v2109
    %v2452 = vunpack.c.l.b16 %v2110
    %v2453 = vunpack.c.h.b16 %v2110
    %v2454 = vunpack.c.l.b16 %v2111
    %v2455 = vunpack.c.h.b16 %v2111
    %v2456 = vunpack.c.l.b16 %v2112
    %v2457 = vunpack.c.h.b16 %v2112
    %v2458 = vunpack.c.l.b16 %v2113
    %v2459 = vunpack.c.h.b16 %v2113
    %v2460 = vunpack.c.l.b16 %v2114
    %v2461 = vunpack.c.h.b16 %v2114
    %v2462 = vunpack.c.l.b16 %v2115
    %v2463 = vunpack.c.h.b16 %v2115
    %v2464 = vunpack.c.l.b16 %v2116
    %v2465 = vunpack.c.h.b16 %v2116
    %v2466 = vunpack.c.l.b16 %v2117
    %v2467 = vunpack.c.h.b16 %v2117
    %v2468 = vunpack.c.l.b16 %v2118
    %v2469 = vunpack.c.h.b16 %v2118
    %v2470 = vunpack.c.l.b16 %v2119
    %v2471 = vunpack.c.h.b16 %v2119
    %v2472 = vunpack.c.l.b16 %v2120
    %v2473 = vunpack.c.h.b16 %v2120
    %v2474 = vunpack.c.l.b16 %v2121
    %v2475 = vunpack.c.h.b16 %v2121
    %v2476 = vunpack.c.l.b16 %v2122
    %v2477 = vunpack.c.h.b16 %v2122
    %v2478 = vunpack.c.l.b16 %v2123
    %v2479 = vunpack.c.h.b16 %v2123
    %v2480 = vunpack.c.l.b16 %v2124
    %v2481 = vunpack.c.h.b16 %v2124
    %v2482 = vunpack.c.l.b16 %v2125
    %v2483 = vunpack.c.h.b16 %v2125
    %v2484 = vunpack.c.l.b16 %v2126
    %v2485 = vunpack.c.h.b16 %v2126
    %v2486 = vunpack.c.l.b16 %v2127
    %v2487 = vunpack.c.h.b16 %v2127
    %v2488 = vunpack.c.l.b16 %v2128
    %v2489 = vunpack.c.h.b16 %v2128
    %v2490 = vunpack.c.l.b16 %v2129
    %v2491 = vunpack.c.h.b16 %v2129
    %v2492 = vunpack.c.l.b16 %v2130
    %v2493 = vunpack.c.h.b16 %v2130
    %v2494 = vpack.c.b16 %v2432, %v2430
    %v2495 = vpack.c.b16 %v2433, %v2431
    %v2496 = vpack.c.b16 %v2436, %v2434
    %v2497 = vpack.c.b16 %v2437, %v2435
    %v2498 = vpack.c.b16 %v2440, %v2438
    %v2499 = vpack.c.b16 %v2441, %v2439
    %v2500 = vpack.c.b16 %v2444, %v2442
    %v2501 = vpack.c.b16 %v2445, %v2443
    %v2502 = vpack.c.b16 %v2448, %v2446
    %v2503 = vpack.c.b16 %v2449, %v2447
    %v2504 = vpack.c.b16 %v2452, %v2450
    %v2505 = vpack.c.b16 %v2453, %v2451
    %v2506 = vpack.c.b16 %v2456, %v2454
    %v2507 = vpack.c.b16 %v2457, %v2455
    %v2508 = vpack.c.b16 %v2460, %v2458
    %v2509 = vpack.c.b16 %v2461, %v2459
    %v2510 = vpack.c.b16 %v2464, %v2462
    %v2511 = vpack.c.b16 %v2465, %v2463
    %v2512 = vpack.c.b16 %v2468, %v2466
    %v2513 = vpack.c.b16 %v2469, %v2467
    %v2514 = vpack.c.b16 %v2472, %v2470
    %v2515 = vpack.c.b16 %v2473, %v2471
    %v2516 = vpack.c.b16 %v2476, %v2474
    %v2517 = vpack.c.b16 %v2477, %v2475
    %v2518 = vpack.c.b16 %v2480, %v2478
    %v2519 = vpack.c.b16 %v2481, %v2479
    %v2520 = vpack.c.b16 %v2484, %v2482
    %v2521 = vpack.c.b16 %v2485, %v2483
    %v2522 = vpack.c.b16 %v2488, %v2486
    %v2523 = vpack.c.b16 %v2489, %v2487
    %v2524 = vpack.c.b16 %v2492, %v2490
    %v2525 = vpack.c.b16 %v2493, %v2491
    %2558 = vmatprep.subr.bf16.mxu0 %v2495
    %2559 = vmatpush1.bf16.msra.mxu0 %v2494
    %2560 = vmatprep.subr.bf16.mxu0 %v2497
    %2561 = vmatpush1.bf16.msra.mxu0 %v2496
    %2562 = vmatprep.subr.bf16.mxu0 %v2499
    %2563 = vmatpush1.bf16.msra.mxu0 %v2498
    %2564 = vmatprep.subr.bf16.mxu0 %v2501
    %2565 = vmatpush1.bf16.msra.mxu0 %v2500
    %2566 = vmatprep.subr.bf16.mxu0 %v2503
    %2567 = vmatpush1.bf16.msra.mxu0 %v2502
    %2568 = vmatprep.subr.bf16.mxu0 %v2505
    %2569 = vmatpush1.bf16.msra.mxu0 %v2504
    %2570 = vmatprep.subr.bf16.mxu0 %v2507
    %2571 = vmatpush1.bf16.msra.mxu0 %v2506
    %2572 = vmatprep.subr.bf16.mxu0 %v2509
    %2573 = vmatpush1.bf16.msra.mxu0 %v2508
    %2574 = vmatprep.subr.bf16.mxu0 %v2511
    %2575 = vmatpush1.bf16.msra.mxu0 %v2510
    %2576 = vmatprep.subr.bf16.mxu0 %v2513
    %2577 = vmatpush1.bf16.msra.mxu0 %v2512
    %2578 = vmatprep.subr.bf16.mxu0 %v2515
    %2579 = vmatpush1.bf16.msra.mxu0 %v2514
    %2580 = vmatprep.subr.bf16.mxu0 %v2517
    %2581 = vmatpush1.bf16.msra.mxu0 %v2516
    %2582 = vmatprep.subr.bf16.mxu0 %v2519
    %2583 = vmatpush1.bf16.msra.mxu0 %v2518
    %2584 = vmatprep.subr.bf16.mxu0 %v2521
    %2585 = vmatpush1.bf16.msra.mxu0 %v2520
    %2586 = vmatprep.subr.bf16.mxu0 %v2523
    %2587 = vmatpush1.bf16.msra.mxu0 %v2522
    %2588 = vmatprep.subr.bf16.mxu0 %v2525
    %2589 = vmatpush1.bf16.msra.mxu0 %v2524
    %2590 = vmatprep.mubr.bf16.mxu0 %v2196
    %2591 = vmatmul.mubr.bf16.gmra.mrb[0].mxu0 %v2158
    %v2592 = vpop.f32.mrb[0].mxu0
    %v2593 = vadd.f32 0.0, %v2592
    %v2594 = vpop.f32.mrb[0].mxu0
    %v2595 = vadd.f32 0.0, %v2594
    %v2596 = vpop.f32.mrb[0].mxu0
    %v2597 = vpop.f32.mrb[0].mxu0
    %2598 = vdwg.mxu0
    %v2601 = vcombine.low %v2392, %v2394
    %v2602 = vcombine.high %v2392, %v2394
    %v2604 = vunpack.c.l.s4 1966171168
    %v2605 = vunpack.c.0.s8 %v2604
    %v2606 = vlaneseq
    %v2607 = vshrl.u32 %v2606, 7
    %v2608 = vsub.s32 %v2605, %v2607
    %v2609 = vrot.slane %v2601, %v2608
    %v2611 = vunpack.c.l.s4 1966171168
    %v2612 = vunpack.c.0.s8 %v2611
    %v2613 = vlaneseq
    %v2614 = vshrl.u32 %v2613, 7
    %v2615 = vsub.s32 %v2612, %v2614
    %v2616 = vrot.slane %v2602, %v2615
    %v2617 = vcombine.high %v2609, %v2609
    %v2618 = vcombine.high %v2616, %v2616
    %v2620 = vunpack.c.l.s4 1966171168
    %v2621 = vunpack.c.0.s8 %v2620
    %v2622 = vlaneseq
    %v2623 = vshrl.u32 %v2622, 7
    %v2624 = vsub.s32 %v2621, %v2623
    %v2625 = vrot.slane %v2609, %v2624
    %v2627 = vunpack.c.l.s4 1966171168
    %v2628 = vunpack.c.0.s8 %v2627
    %v2629 = vlaneseq
    %v2630 = vshrl.u32 %v2629, 7
    %v2631 = vsub.s32 %v2628, %v2630
    %v2632 = vrot.slane %v2616, %v2631
    %v2634 = vunpack.c.l.s4 1966171168
    %v2635 = vunpack.c.0.s8 %v2634
    %v2636 = vlaneseq
    %v2637 = vshrl.u32 %v2636, 7
    %v2638 = vsub.s32 %v2635, %v2637
    %v2639 = vrot.slane %v2617, %v2638
    %v2641 = vunpack.c.l.s4 1966171168
    %v2642 = vunpack.c.0.s8 %v2641
    %v2643 = vlaneseq
    %v2644 = vshrl.u32 %v2643, 7
    %v2645 = vsub.s32 %v2642, %v2644
    %v2646 = vrot.slane %v2618, %v2645
    %v2647 = vcombine.high %v2625, %v2625
    %v2648 = vcombine.high %v2632, %v2632
    %v2649 = vcombine.high %v2639, %v2639
    %v2650 = vcombine.high %v2646, %v2646
    %v2653 = vcombine.low %v2593, %v2595
    %v2654 = vcombine.high %v2593, %v2595
    %v2656 = vunpack.c.l.s4 1966171168
    %v2657 = vunpack.c.0.s8 %v2656
    %v2658 = vlaneseq
    %v2659 = vshrl.u32 %v2658, 7
    %v2660 = vsub.s32 %v2657, %v2659
    %v2661 = vrot.slane %v2653, %v2660
    %v2663 = vunpack.c.l.s4 1966171168
    %v2664 = vunpack.c.0.s8 %v2663
    %v2665 = vlaneseq
    %v2666 = vshrl.u32 %v2665, 7
    %v2667 = vsub.s32 %v2664, %v2666
    %v2668 = vrot.slane %v2654, %v2667
    %v2669 = vcombine.high %v2661, %v2661
    %v2670 = vcombine.high %v2668, %v2668
    %v2672 = vunpack.c.l.s4 1966171168
    %v2673 = vunpack.c.0.s8 %v2672
    %v2674 = vlaneseq
    %v2675 = vshrl.u32 %v2674, 7
    %v2676 = vsub.s32 %v2673, %v2675
    %v2677 = vrot.slane %v2661, %v2676
    %v2679 = vunpack.c.l.s4 1966171168
    %v2680 = vunpack.c.0.s8 %v2679
    %v2681 = vlaneseq
    %v2682 = vshrl.u32 %v2681, 7
    %v2683 = vsub.s32 %v2680, %v2682
    %v2684 = vrot.slane %v2668, %v2683
    %v2686 = vunpack.c.l.s4 1966171168
    %v2687 = vunpack.c.0.s8 %v2686
    %v2688 = vlaneseq
    %v2689 = vshrl.u32 %v2688, 7
    %v2690 = vsub.s32 %v2687, %v2689
    %v2691 = vrot.slane %v2669, %v2690
    %v2693 = vunpack.c.l.s4 1966171168
    %v2694 = vunpack.c.0.s8 %v2693
    %v2695 = vlaneseq
    %v2696 = vshrl.u32 %v2695, 7
    %v2697 = vsub.s32 %v2694, %v2696
    %v2698 = vrot.slane %v2670, %v2697
    %v2699 = vcombine.high %v2677, %v2677
    %v2700 = vcombine.high %v2684, %v2684
    %v2701 = vcombine.high %v2691, %v2691
    %v2702 = vcombine.high %v2698, %v2698
    %v2703 = vlaneseq
    %v2704 = vshrl.u32 %v2703, 7
    %v2705 = vsub.s32 0, %v2704
    %v2706 = vrot.slane %v2625, %v2705
    %v2707 = vlaneseq
    %v2708 = vshrl.u32 %v2707, 7
    %v2709 = vsub.s32 1, %v2708
    %v2710 = vrot.slane %v2625, %v2709
    %v2711 = vlaneseq
    %v2712 = vshrl.u32 %v2711, 7
    %v2713 = vsub.s32 0, %v2712
    %v2714 = vrot.slane %v2639, %v2713
    %v2715 = vlaneseq
    %v2716 = vshrl.u32 %v2715, 7
    %v2717 = vsub.s32 1, %v2716
    %v2718 = vrot.slane %v2639, %v2717
    %v2719 = vlaneseq
    %v2720 = vshrl.u32 %v2719, 7
    %v2721 = vsub.s32 0, %v2720
    %v2722 = vrot.slane %v2647, %v2721
    %v2723 = vlaneseq
    %v2724 = vshrl.u32 %v2723, 7
    %v2725 = vsub.s32 1, %v2724
    %v2726 = vrot.slane %v2647, %v2725
    %v2727 = vlaneseq
    %v2728 = vshrl.u32 %v2727, 7
    %v2729 = vsub.s32 0, %v2728
    %v2730 = vrot.slane %v2649, %v2729
    %v2731 = vlaneseq
    %v2732 = vshrl.u32 %v2731, 7
    %v2733 = vsub.s32 1, %v2732
    %v2734 = vrot.slane %v2649, %v2733
    %v2735 = vlaneseq
    %v2736 = vshrl.u32 %v2735, 7
    %v2737 = vsub.s32 0, %v2736
    %v2738 = vrot.slane %v2632, %v2737
    %v2739 = vlaneseq
    %v2740 = vshrl.u32 %v2739, 7
    %v2741 = vsub.s32 1, %v2740
    %v2742 = vrot.slane %v2632, %v2741
    %v2743 = vlaneseq
    %v2744 = vshrl.u32 %v2743, 7
    %v2745 = vsub.s32 0, %v2744
    %v2746 = vrot.slane %v2646, %v2745
    %v2747 = vlaneseq
    %v2748 = vshrl.u32 %v2747, 7
    %v2749 = vsub.s32 1, %v2748
    %v2750 = vrot.slane %v2646, %v2749
    %v2751 = vlaneseq
    %v2752 = vshrl.u32 %v2751, 7
    %v2753 = vsub.s32 0, %v2752
    %v2754 = vrot.slane %v2648, %v2753
    %v2755 = vlaneseq
    %v2756 = vshrl.u32 %v2755, 7
    %v2757 = vsub.s32 1, %v2756
    %v2758 = vrot.slane %v2648, %v2757
    %v2759 = vlaneseq
    %v2760 = vshrl.u32 %v2759, 7
    %v2761 = vsub.s32 0, %v2760
    %v2762 = vrot.slane %v2650, %v2761
    %v2763 = vlaneseq
    %v2764 = vshrl.u32 %v2763, 7
    %v2765 = vsub.s32 1, %v2764
    %v2766 = vrot.slane %v2650, %v2765
    %v2783 = vlaneseq
    %v2784 = vshrl.u32 %v2783, 7
    %v2785 = vsub.s32 0, %v2784
    %v2786 = vrot.slane %v2677, %v2785
    %v2787 = vlaneseq
    %v2788 = vshrl.u32 %v2787, 7
    %v2789 = vsub.s32 1, %v2788
    %v2790 = vrot.slane %v2677, %v2789
    %v2791 = vlaneseq
    %v2792 = vshrl.u32 %v2791, 7
    %v2793 = vsub.s32 0, %v2792
    %v2794 = vrot.slane %v2691, %v2793
    %v2795 = vlaneseq
    %v2796 = vshrl.u32 %v2795, 7
    %v2797 = vsub.s32 1, %v2796
    %v2798 = vrot.slane %v2691, %v2797
    %v2799 = vlaneseq
    %v2800 = vshrl.u32 %v2799, 7
    %v2801 = vsub.s32 0, %v2800
    %v2802 = vrot.slane %v2699, %v2801
    %v2803 = vlaneseq
    %v2804 = vshrl.u32 %v2803, 7
    %v2805 = vsub.s32 1, %v2804
    %v2806 = vrot.slane %v2699, %v2805
    %v2807 = vlaneseq
    %v2808 = vshrl.u32 %v2807, 7
    %v2809 = vsub.s32 0, %v2808
    %v2810 = vrot.slane %v2701, %v2809
    %v2811 = vlaneseq
    %v2812 = vshrl.u32 %v2811, 7
    %v2813 = vsub.s32 1, %v2812
    %v2814 = vrot.slane %v2701, %v2813
    %v2815 = vlaneseq
    %v2816 = vshrl.u32 %v2815, 7
    %v2817 = vsub.s32 0, %v2816
    %v2818 = vrot.slane %v2684, %v2817
    %v2819 = vlaneseq
    %v2820 = vshrl.u32 %v2819, 7
    %v2821 = vsub.s32 1, %v2820
    %v2822 = vrot.slane %v2684, %v2821
    %v2823 = vlaneseq
    %v2824 = vshrl.u32 %v2823, 7
    %v2825 = vsub.s32 0, %v2824
    %v2826 = vrot.slane %v2698, %v2825
    %v2827 = vlaneseq
    %v2828 = vshrl.u32 %v2827, 7
    %v2829 = vsub.s32 1, %v2828
    %v2830 = vrot.slane %v2698, %v2829
    %v2831 = vlaneseq
    %v2832 = vshrl.u32 %v2831, 7
    %v2833 = vsub.s32 0, %v2832
    %v2834 = vrot.slane %v2700, %v2833
    %v2835 = vlaneseq
    %v2836 = vshrl.u32 %v2835, 7
    %v2837 = vsub.s32 1, %v2836
    %v2838 = vrot.slane %v2700, %v2837
    %v2839 = vlaneseq
    %v2840 = vshrl.u32 %v2839, 7
    %v2841 = vsub.s32 0, %v2840
    %v2842 = vrot.slane %v2702, %v2841
    %v2843 = vlaneseq
    %v2844 = vshrl.u32 %v2843, 7
    %v2845 = vsub.s32 1, %v2844
    %v2846 = vrot.slane %v2702, %v2845
    %v2863 = vsel %vm2002, %v2706, %v2786
    %v2864 = vsel %vm2002, %v2710, %v2790
    %v2865 = vsel %vm2002, %v2714, %v2794
    %v2866 = vsel %vm2002, %v2718, %v2798
    %v2867 = vsel %vm2002, %v2722, %v2802
    %v2868 = vsel %vm2002, %v2726, %v2806
    %v2869 = vsel %vm2002, %v2730, %v2810
    %v2870 = vsel %vm2002, %v2734, %v2814
    %v2871 = vsel %vm2002, %v2738, %v2818
    %v2872 = vsel %vm2002, %v2742, %v2822
    %v2873 = vsel %vm2002, %v2746, %v2826
    %v2874 = vsel %vm2002, %v2750, %v2830
    %v2875 = vsel %vm2002, %v2754, %v2834
    %v2876 = vsel %vm2002, %v2758, %v2838
    %v2877 = vsel %vm2002, %v2762, %v2842
    %v2878 = vsel %vm2002, %v2766, %v2846
    %v2895 = vcombine.low %v2863, %v2864
    %v2897 = vunpack.c.l.s4 1983009808
    %v2898 = vunpack.c.0.s8 %v2897
    %v2899 = vlaneseq
    %v2900 = vshrl.u32 %v2899, 7
    %v2901 = vsub.s32 %v2898, %v2900
    %v2902 = vrot.slane %v2895, %v2901
    %v2903 = vcombine.low %v2865, %v2866
    %v2905 = vunpack.c.l.s4 1983009808
    %v2906 = vunpack.c.0.s8 %v2905
    %v2907 = vlaneseq
    %v2908 = vshrl.u32 %v2907, 7
    %v2909 = vsub.s32 %v2906, %v2908
    %v2910 = vrot.slane %v2903, %v2909
    %v2911 = vcombine.low %v2867, %v2868
    %v2913 = vunpack.c.l.s4 1983009808
    %v2914 = vunpack.c.0.s8 %v2913
    %v2915 = vlaneseq
    %v2916 = vshrl.u32 %v2915, 7
    %v2917 = vsub.s32 %v2914, %v2916
    %v2918 = vrot.slane %v2911, %v2917
    %v2919 = vcombine.low %v2869, %v2870
    %v2921 = vunpack.c.l.s4 1983009808
    %v2922 = vunpack.c.0.s8 %v2921
    %v2923 = vlaneseq
    %v2924 = vshrl.u32 %v2923, 7
    %v2925 = vsub.s32 %v2922, %v2924
    %v2926 = vrot.slane %v2919, %v2925
    %v2927 = vcombine.low %v2871, %v2872
    %v2929 = vunpack.c.l.s4 1983009808
    %v2930 = vunpack.c.0.s8 %v2929
    %v2931 = vlaneseq
    %v2932 = vshrl.u32 %v2931, 7
    %v2933 = vsub.s32 %v2930, %v2932
    %v2934 = vrot.slane %v2927, %v2933
    %v2935 = vcombine.low %v2873, %v2874
    %v2937 = vunpack.c.l.s4 1983009808
    %v2938 = vunpack.c.0.s8 %v2937
    %v2939 = vlaneseq
    %v2940 = vshrl.u32 %v2939, 7
    %v2941 = vsub.s32 %v2938, %v2940
    %v2942 = vrot.slane %v2935, %v2941
    %v2943 = vcombine.low %v2875, %v2876
    %v2945 = vunpack.c.l.s4 1983009808
    %v2946 = vunpack.c.0.s8 %v2945
    %v2947 = vlaneseq
    %v2948 = vshrl.u32 %v2947, 7
    %v2949 = vsub.s32 %v2946, %v2948
    %v2950 = vrot.slane %v2943, %v2949
    %v2951 = vcombine.low %v2877, %v2878
    %v2953 = vunpack.c.l.s4 1983009808
    %v2954 = vunpack.c.0.s8 %v2953
    %v2955 = vlaneseq
    %v2956 = vshrl.u32 %v2955, 7
    %v2957 = vsub.s32 %v2954, %v2956
    %v2958 = vrot.slane %v2951, %v2957
    %v2971 = vcombine.low %v2131, %v2132
    %v2972 = vcombine.high %v2131, %v2132
    %v2974 = vunpack.c.l.s4 1983009808
    %v2975 = vunpack.c.0.s8 %v2974
    %v2976 = vlaneseq
    %v2977 = vshrl.u32 %v2976, 7
    %v2978 = vsub.s32 %v2975, %v2977
    %v2979 = vrot.slane %v2971, %v2978
    %v2981 = vunpack.c.l.s4 1983009808
    %v2982 = vunpack.c.0.s8 %v2981
    %v2983 = vlaneseq
    %v2984 = vshrl.u32 %v2983, 7
    %v2985 = vsub.s32 %v2982, %v2984
    %v2986 = vrot.slane %v2972, %v2985
    %v2987 = vcombine.high %v2979, %v2979
    %v2988 = vcombine.high %v2986, %v2986
    %v2989 = vcombine.low %v2133, %v2134
    %v2990 = vcombine.high %v2133, %v2134
    %v2992 = vunpack.c.l.s4 1983009808
    %v2993 = vunpack.c.0.s8 %v2992
    %v2994 = vlaneseq
    %v2995 = vshrl.u32 %v2994, 7
    %v2996 = vsub.s32 %v2993, %v2995
    %v2997 = vrot.slane %v2989, %v2996
    %v2999 = vunpack.c.l.s4 1983009808
    %v3000 = vunpack.c.0.s8 %v2999
    %v3001 = vlaneseq
    %v3002 = vshrl.u32 %v3001, 7
    %v3003 = vsub.s32 %v3000, %v3002
    %v3004 = vrot.slane %v2990, %v3003
    %v3005 = vcombine.high %v2997, %v2997
    %v3006 = vcombine.high %v3004, %v3004
    %v3015 = vadd.f32 %v2902, %v2979
    %v3016 = vadd.f32 %v2910, %v2987
    %v3017 = vadd.f32 %v2918, %v2986
    %v3018 = vadd.f32 %v2926, %v2988
    %v3019 = vadd.f32 %v2934, %v2997
    %v3020 = vadd.f32 %v2942, %v3005
    %v3021 = vadd.f32 %v2950, %v3004
    %v3022 = vadd.f32 %v2958, %v3006
    %v3024 = vlaneseq
    %v3025 = vshrl.u32 %v3024, 7
    %v3026 = vsub.s32 0, %v3025
    %v3027 = vrot.slane %v2135, %v3026
    %v3028 = vlaneseq
    %v3029 = vshrl.u32 %v3028, 7
    %v3030 = vsub.s32 1, %v3029
    %v3031 = vrot.slane %v2135, %v3030
    %v3032 = vcombine.low %v3027, %v3031
    %v3033 = vcombine.high %v3027, %v3031
    %v3035 = vunpack.c.l.s4 1983009808
    %v3036 = vunpack.c.0.s8 %v3035
    %v3037 = vlaneseq
    %v3038 = vshrl.u32 %v3037, 7
    %v3039 = vsub.s32 %v3036, %v3038
    %v3040 = vrot.slane %v3032, %v3039
    %v3042 = vunpack.c.l.s4 1983009808
    %v3043 = vunpack.c.0.s8 %v3042
    %v3044 = vlaneseq
    %v3045 = vshrl.u32 %v3044, 7
    %v3046 = vsub.s32 %v3043, %v3045
    %v3047 = vrot.slane %v3033, %v3046
    %v3048 = vcombine.high %v3040, %v3040
    %v3049 = vcombine.high %v3047, %v3047
    %v3054 = vadd.f32 %v3015, %v3040
    %v3055 = vadd.f32 %v3016, %v3048
    %v3056 = vadd.f32 %v3017, %v3047
    %v3057 = vadd.f32 %v3018, %v3049
    %v3058 = vadd.f32 %v3019, %v3040
    %v3059 = vadd.f32 %v3020, %v3048
    %v3060 = vadd.f32 %v3021, %v3047
    %v3061 = vadd.f32 %v3022, %v3049
    %v3062 = vmax.f32 %v3054, 0.0
    %v3063 = vmax.f32 %v3055, 0.0
    %v3064 = vmax.f32 %v3056, 0.0
    %v3065 = vmax.f32 %v3057, 0.0
    %v3066 = vmax.f32 %v3058, 0.0
    %v3067 = vmax.f32 %v3059, 0.0
    %v3068 = vmax.f32 %v3060, 0.0
    %v3069 = vmax.f32 %v3061, 0.0
    %v3070 = vld [vmem:[%s8] sm:$0xff]
    %v3071 = vld [vmem:[%s8 + $0x8] sm:$0xff]
    %v3072 = vld [vmem:[%s8 + $0x10] sm:$0xff]
    %v3073 = vld [vmem:[%s8 + $0x18] sm:$0xff]
    %v3074 = vld [vmem:[%s8 + $0x20] sm:$0xff]
    %v3075 = vld [vmem:[%s8 + $0x28] sm:$0xff]
    %v3076 = vld [vmem:[%s8 + $0x30] sm:$0xff]
    %v3077 = vld [vmem:[%s8 + $0x38] sm:$0xff]
    %v3078 = vld [vmem:[%s8 + $0x40] sm:$0xff]
    %v3079 = vld [vmem:[%s8 + $0x48] sm:$0xff]
    %v3080 = vld [vmem:[%s8 + $0x50] sm:$0xff]
    %v3081 = vld [vmem:[%s8 + $0x58] sm:$0xff]
    %v3082 = vld [vmem:[%s8 + $0x60] sm:$0xff]
    %v3083 = vld [vmem:[%s8 + $0x68] sm:$0xff]
    %v3084 = vld [vmem:[%s8 + $0x70] sm:$0xff]
    %v3085 = vld [vmem:[%s8 + $0x78] sm:$0xff]
    %v3086 = vld [vmem:[%s8 + $0x80] sm:$0xff]
    %v3087 = vld [vmem:[%s8 + $0x88] sm:$0xff]
    %v3088 = vld [vmem:[%s8 + $0x90] sm:$0xff]
    %v3089 = vld [vmem:[%s8 + $0x98] sm:$0xff]
    %v3090 = vld [vmem:[%s8 + $0xa0] sm:$0xff]
    %v3091 = vld [vmem:[%s8 + $0xa8] sm:$0xff]
    %v3092 = vld [vmem:[%s8 + $0xb0] sm:$0xff]
    %v3093 = vld [vmem:[%s8 + $0xb8] sm:$0xff]
    %v3094 = vld [vmem:[%s8 + $0xc0] sm:$0xff]
    %v3095 = vld [vmem:[%s8 + $0xc8] sm:$0xff]
    %v3096 = vld [vmem:[%s8 + $0xd0] sm:$0xff]
    %v3097 = vld [vmem:[%s8 + $0xd8] sm:$0xff]
    %v3098 = vld [vmem:[%s8 + $0xe0] sm:$0xff]
    %v3099 = vld [vmem:[%s8 + $0xe8] sm:$0xff]
    %v3100 = vld [vmem:[%s8 + $0xf0] sm:$0xff]
    %v3101 = vld [vmem:[%s8 + $0xf8] sm:$0xff]
    %v3102 = vld [vmem:[%s8 + $0x100] sm:$0xff]
    %v3103 = vld [vmem:[%s8 + $0x108] sm:$0xff]
    %v3104 = vld [vmem:[%s8 + $0x110] sm:$0xff]
    %v3105 = vld [vmem:[%s8 + $0x118] sm:$0xff]
    %v3106 = vld [vmem:[%s8 + $0x120] sm:$0xff]
    %v3107 = vld [vmem:[%s8 + $0x128] sm:$0xff]
    %v3108 = vld [vmem:[%s8 + $0x130] sm:$0xff]
    %v3109 = vld [vmem:[%s8 + $0x138] sm:$0xff]
    %v3110 = vld [vmem:[%s8 + $0x140] sm:$0xff]
    %v3111 = vld [vmem:[%s8 + $0x148] sm:$0xff]
    %v3112 = vld [vmem:[%s8 + $0x150] sm:$0xff]
    %v3113 = vld [vmem:[%s8 + $0x158] sm:$0xff]
    %v3114 = vld [vmem:[%s8 + $0x160] sm:$0xff]
    %v3115 = vld [vmem:[%s8 + $0x168] sm:$0xff]
    %v3116 = vld [vmem:[%s8 + $0x170] sm:$0xff]
    %v3117 = vld [vmem:[%s8 + $0x178] sm:$0xff]
    %v3118 = vld [vmem:[%s8 + $0x180] sm:$0xff]
    %v3119 = vld [vmem:[%s8 + $0x188] sm:$0xff]
    %v3120 = vld [vmem:[%s8 + $0x190] sm:$0xff]
    %v3121 = vld [vmem:[%s8 + $0x198] sm:$0xff]
    %v3122 = vld [vmem:[%s8 + $0x1a0] sm:$0xff]
    %v3123 = vld [vmem:[%s8 + $0x1a8] sm:$0xff]
    %v3124 = vld [vmem:[%s8 + $0x1b0] sm:$0xff]
    %v3125 = vld [vmem:[%s8 + $0x1b8] sm:$0xff]
    %v3126 = vld [vmem:[%s8 + $0x1c0] sm:$0xff]
    %v3127 = vld [vmem:[%s8 + $0x1c8] sm:$0xff]
    %v3128 = vld [vmem:[%s8 + $0x1d0] sm:$0xff]
    %v3129 = vld [vmem:[%s8 + $0x1d8] sm:$0xff]
    %v3130 = vld [vmem:[%s8 + $0x1e0] sm:$0xff]
    %v3131 = vld [vmem:[%s8 + $0x1e8] sm:$0xff]
    %v3132 = vld [vmem:[%s8 + $0x1f0] sm:$0xff]
    %v3133 = vld [vmem:[%s8 + $0x1f8] sm:$0xff]
    %v3134 = vld [vmem:[%s8 + $0x200] sm:$0xff]
    %v3135 = vld [vmem:[%s8 + $0x208] sm:$0xff]
    %v3136 = vld [vmem:[%s8 + $0x210] sm:$0xff]
    %v3137 = vld [vmem:[%s8 + $0x218] sm:$0xff]
    %v3138 = vld [vmem:[%s8 + $0x220] sm:$0xff]
    %v3139 = vld [vmem:[%s8 + $0x228] sm:$0xff]
    %v3140 = vld [vmem:[%s8 + $0x230] sm:$0xff]
    %v3141 = vld [vmem:[%s8 + $0x238] sm:$0xff]
    %v3142 = vld [vmem:[%s8 + $0x240] sm:$0xff]
    %v3143 = vld [vmem:[%s8 + $0x248] sm:$0xff]
    %v3144 = vld [vmem:[%s8 + $0x250] sm:$0xff]
    %v3145 = vld [vmem:[%s8 + $0x258] sm:$0xff]
    %v3146 = vld [vmem:[%s8 + $0x260] sm:$0xff]
    %v3147 = vld [vmem:[%s8 + $0x268] sm:$0xff]
    %v3148 = vld [vmem:[%s8 + $0x270] sm:$0xff]
    %v3149 = vld [vmem:[%s8 + $0x278] sm:$0xff]
    %v3150 = vld [vmem:[%s8 + $0x280] sm:$0xff]
    %v3151 = vld [vmem:[%s8 + $0x288] sm:$0xff]
    %v3152 = vld [vmem:[%s8 + $0x290] sm:$0xff]
    %v3153 = vld [vmem:[%s8 + $0x298] sm:$0xff]
    %v3154 = vld [vmem:[%s8 + $0x2a0] sm:$0xff]
    %v3155 = vld [vmem:[%s8 + $0x2a8] sm:$0xff]
    %v3156 = vld [vmem:[%s8 + $0x2b0] sm:$0xff]
    %v3157 = vld [vmem:[%s8 + $0x2b8] sm:$0xff]
    %v3158 = vld [vmem:[%s8 + $0x2c0] sm:$0xff]
    %v3159 = vld [vmem:[%s8 + $0x2c8] sm:$0xff]
    %v3160 = vld [vmem:[%s8 + $0x2d0] sm:$0xff]
    %v3161 = vld [vmem:[%s8 + $0x2d8] sm:$0xff]
    %v3162 = vld [vmem:[%s8 + $0x2e0] sm:$0xff]
    %v3163 = vld [vmem:[%s8 + $0x2e8] sm:$0xff]
    %v3164 = vld [vmem:[%s8 + $0x2f0] sm:$0xff]
    %v3165 = vld [vmem:[%s8 + $0x2f8] sm:$0xff]
    %v3166 = vld [vmem:[%s8 + $0x300] sm:$0xff]
    %v3167 = vld [vmem:[%s8 + $0x308] sm:$0xff]
    %v3168 = vld [vmem:[%s8 + $0x310] sm:$0xff]
    %v3169 = vld [vmem:[%s8 + $0x318] sm:$0xff]
    %v3170 = vld [vmem:[%s8 + $0x320] sm:$0xff]
    %v3171 = vld [vmem:[%s8 + $0x328] sm:$0xff]
    %v3172 = vld [vmem:[%s8 + $0x330] sm:$0xff]
    %v3173 = vld [vmem:[%s8 + $0x338] sm:$0xff]
    %v3174 = vld [vmem:[%s8 + $0x340] sm:$0xff]
    %v3175 = vld [vmem:[%s8 + $0x348] sm:$0xff]
    %v3176 = vld [vmem:[%s8 + $0x350] sm:$0xff]
    %v3177 = vld [vmem:[%s8 + $0x358] sm:$0xff]
    %v3178 = vld [vmem:[%s8 + $0x360] sm:$0xff]
    %v3179 = vld [vmem:[%s8 + $0x368] sm:$0xff]
    %v3180 = vld [vmem:[%s8 + $0x370] sm:$0xff]
    %v3181 = vld [vmem:[%s8 + $0x378] sm:$0xff]
    %v3182 = vld [vmem:[%s8 + $0x380] sm:$0xff]
    %v3183 = vld [vmem:[%s8 + $0x388] sm:$0xff]
    %v3184 = vld [vmem:[%s8 + $0x390] sm:$0xff]
    %v3185 = vld [vmem:[%s8 + $0x398] sm:$0xff]
    %v3186 = vld [vmem:[%s8 + $0x3a0] sm:$0xff]
    %v3187 = vld [vmem:[%s8 + $0x3a8] sm:$0xff]
    %v3188 = vld [vmem:[%s8 + $0x3b0] sm:$0xff]
    %v3189 = vld [vmem:[%s8 + $0x3b8] sm:$0xff]
    %v3190 = vld [vmem:[%s8 + $0x3c0] sm:$0xff]
    %v3191 = vld [vmem:[%s8 + $0x3c8] sm:$0xff]
    %v3192 = vld [vmem:[%s8 + $0x3d0] sm:$0xff]
    %v3193 = vld [vmem:[%s8 + $0x3d8] sm:$0xff]
    %v3194 = vld [vmem:[%s8 + $0x3e0] sm:$0xff]
    %v3195 = vld [vmem:[%s8 + $0x3e8] sm:$0xff]
    %v3196 = vld [vmem:[%s8 + $0x3f0] sm:$0xff]
    %v3197 = vld [vmem:[%s8 + $0x3f8] sm:$0xff]
    %v3198 = vld [vmem:[%s9] sm:$0xff]
    %v3199 = vld [vmem:[%s9 + $0x8] sm:$0xff]
    %v3200 = vld [vmem:[%s9 + $0x10] sm:$0xff]
    %v3201 = vld [vmem:[%s9 + $0x18] sm:$0xff]
    %v3202 = vld [vmem:[%s9 + $0x20] sm:$0xff]
    %v3203 = vld [vmem:[%s9 + $0x28] sm:$0xff]
    %v3204 = vld [vmem:[%s9 + $0x30] sm:$0xff]
    %v3205 = vld [vmem:[%s9 + $0x38] sm:$0xff]
    %v3206 = vld [vmem:[%s9 + $0x40] sm:$0xff]
    %v3207 = vld [vmem:[%s9 + $0x48] sm:$0xff]
    %v3208 = vld [vmem:[%s9 + $0x50] sm:$0xff]
    %v3209 = vld [vmem:[%s9 + $0x58] sm:$0xff]
    %v3210 = vld [vmem:[%s9 + $0x60] sm:$0xff]
    %v3211 = vld [vmem:[%s9 + $0x68] sm:$0xff]
    %v3212 = vld [vmem:[%s9 + $0x70] sm:$0xff]
    %v3213 = vld [vmem:[%s9 + $0x78] sm:$0xff]
    %v3214 = vld [vmem:[%s9 + $0x80] sm:$0xff]
    %v3215 = vld [vmem:[%s9 + $0x88] sm:$0xff]
    %v3216 = vld [vmem:[%s9 + $0x90] sm:$0xff]
    %v3217 = vld [vmem:[%s9 + $0x98] sm:$0xff]
    %v3218 = vld [vmem:[%s9 + $0xa0] sm:$0xff]
    %v3219 = vld [vmem:[%s9 + $0xa8] sm:$0xff]
    %v3220 = vld [vmem:[%s9 + $0xb0] sm:$0xff]
    %v3221 = vld [vmem:[%s9 + $0xb8] sm:$0xff]
    %v3222 = vld [vmem:[%s9 + $0xc0] sm:$0xff]
    %v3223 = vld [vmem:[%s9 + $0xc8] sm:$0xff]
    %v3224 = vld [vmem:[%s9 + $0xd0] sm:$0xff]
    %v3225 = vld [vmem:[%s9 + $0xd8] sm:$0xff]
    %v3226 = vld [vmem:[%s9 + $0xe0] sm:$0xff]
    %v3227 = vld [vmem:[%s9 + $0xe8] sm:$0xff]
    %v3228 = vld [vmem:[%s9 + $0xf0] sm:$0xff]
    %v3229 = vld [vmem:[%s9 + $0xf8] sm:$0xff]
    %v3230 = vld [vmem:[%s9 + $0x100] sm:$0xff]
    %v3231 = vld [vmem:[%s9 + $0x108] sm:$0xff]
    %v3232 = vld [vmem:[%s9 + $0x110] sm:$0xff]
    %v3233 = vld [vmem:[%s9 + $0x118] sm:$0xff]
    %v3234 = vld [vmem:[%s9 + $0x120] sm:$0xff]
    %v3235 = vld [vmem:[%s9 + $0x128] sm:$0xff]
    %v3236 = vld [vmem:[%s9 + $0x130] sm:$0xff]
    %v3237 = vld [vmem:[%s9 + $0x138] sm:$0xff]
    %v3238 = vld [vmem:[%s9 + $0x140] sm:$0xff]
    %v3239 = vld [vmem:[%s9 + $0x148] sm:$0xff]
    %v3240 = vld [vmem:[%s9 + $0x150] sm:$0xff]
    %v3241 = vld [vmem:[%s9 + $0x158] sm:$0xff]
    %v3242 = vld [vmem:[%s9 + $0x160] sm:$0xff]
    %v3243 = vld [vmem:[%s9 + $0x168] sm:$0xff]
    %v3244 = vld [vmem:[%s9 + $0x170] sm:$0xff]
    %v3245 = vld [vmem:[%s9 + $0x178] sm:$0xff]
    %v3246 = vld [vmem:[%s9 + $0x180] sm:$0xff]
    %v3247 = vld [vmem:[%s9 + $0x188] sm:$0xff]
    %v3248 = vld [vmem:[%s9 + $0x190] sm:$0xff]
    %v3249 = vld [vmem:[%s9 + $0x198] sm:$0xff]
    %v3250 = vld [vmem:[%s9 + $0x1a0] sm:$0xff]
    %v3251 = vld [vmem:[%s9 + $0x1a8] sm:$0xff]
    %v3252 = vld [vmem:[%s9 + $0x1b0] sm:$0xff]
    %v3253 = vld [vmem:[%s9 + $0x1b8] sm:$0xff]
    %v3254 = vld [vmem:[%s9 + $0x1c0] sm:$0xff]
    %v3255 = vld [vmem:[%s9 + $0x1c8] sm:$0xff]
    %v3256 = vld [vmem:[%s9 + $0x1d0] sm:$0xff]
    %v3257 = vld [vmem:[%s9 + $0x1d8] sm:$0xff]
    %v3258 = vld [vmem:[%s9 + $0x1e0] sm:$0xff]
    %v3259 = vld [vmem:[%s9 + $0x1e8] sm:$0xff]
    %v3260 = vld [vmem:[%s9 + $0x1f0] sm:$0xff]
    %v3261 = vld [vmem:[%s9 + $0x1f8] sm:$0xff]
    %v3262 = vld [vmem:[%s9 + $0x200] sm:$0xff]
    %v3263 = vld [vmem:[%s9 + $0x208] sm:$0xff]
    %v3264 = vld [vmem:[%s9 + $0x210] sm:$0xff]
    %v3265 = vld [vmem:[%s9 + $0x218] sm:$0xff]
    %v3266 = vld [vmem:[%s9 + $0x220] sm:$0xff]
    %v3267 = vld [vmem:[%s9 + $0x228] sm:$0xff]
    %v3268 = vld [vmem:[%s9 + $0x230] sm:$0xff]
    %v3269 = vld [vmem:[%s9 + $0x238] sm:$0xff]
    %v3270 = vld [vmem:[%s9 + $0x240] sm:$0xff]
    %v3271 = vld [vmem:[%s9 + $0x248] sm:$0xff]
    %v3272 = vld [vmem:[%s9 + $0x250] sm:$0xff]
    %v3273 = vld [vmem:[%s9 + $0x258] sm:$0xff]
    %v3274 = vld [vmem:[%s9 + $0x260] sm:$0xff]
    %v3275 = vld [vmem:[%s9 + $0x268] sm:$0xff]
    %v3276 = vld [vmem:[%s9 + $0x270] sm:$0xff]
    %v3277 = vld [vmem:[%s9 + $0x278] sm:$0xff]
    %v3278 = vld [vmem:[%s9 + $0x280] sm:$0xff]
    %v3279 = vld [vmem:[%s9 + $0x288] sm:$0xff]
    %v3280 = vld [vmem:[%s9 + $0x290] sm:$0xff]
    %v3281 = vld [vmem:[%s9 + $0x298] sm:$0xff]
    %v3282 = vld [vmem:[%s9 + $0x2a0] sm:$0xff]
    %v3283 = vld [vmem:[%s9 + $0x2a8] sm:$0xff]
    %v3284 = vld [vmem:[%s9 + $0x2b0] sm:$0xff]
    %v3285 = vld [vmem:[%s9 + $0x2b8] sm:$0xff]
    %v3286 = vld [vmem:[%s9 + $0x2c0] sm:$0xff]
    %v3287 = vld [vmem:[%s9 + $0x2c8] sm:$0xff]
    %v3288 = vld [vmem:[%s9 + $0x2d0] sm:$0xff]
    %v3289 = vld [vmem:[%s9 + $0x2d8] sm:$0xff]
    %v3290 = vld [vmem:[%s9 + $0x2e0] sm:$0xff]
    %v3291 = vld [vmem:[%s9 + $0x2e8] sm:$0xff]
    %v3292 = vld [vmem:[%s9 + $0x2f0] sm:$0xff]
    %v3293 = vld [vmem:[%s9 + $0x2f8] sm:$0xff]
    %v3294 = vld [vmem:[%s9 + $0x300] sm:$0xff]
    %v3295 = vld [vmem:[%s9 + $0x308] sm:$0xff]
    %v3296 = vld [vmem:[%s9 + $0x310] sm:$0xff]
    %v3297 = vld [vmem:[%s9 + $0x318] sm:$0xff]
    %v3298 = vld [vmem:[%s9 + $0x320] sm:$0xff]
    %v3299 = vld [vmem:[%s9 + $0x328] sm:$0xff]
    %v3300 = vld [vmem:[%s9 + $0x330] sm:$0xff]
    %v3301 = vld [vmem:[%s9 + $0x338] sm:$0xff]
    %v3302 = vld [vmem:[%s9 + $0x340] sm:$0xff]
    %v3303 = vld [vmem:[%s9 + $0x348] sm:$0xff]
    %v3304 = vld [vmem:[%s9 + $0x350] sm:$0xff]
    %v3305 = vld [vmem:[%s9 + $0x358] sm:$0xff]
    %v3306 = vld [vmem:[%s9 + $0x360] sm:$0xff]
    %v3307 = vld [vmem:[%s9 + $0x368] sm:$0xff]
    %v3308 = vld [vmem:[%s9 + $0x370] sm:$0xff]
    %v3309 = vld [vmem:[%s9 + $0x378] sm:$0xff]
    %v3310 = vld [vmem:[%s9 + $0x380] sm:$0xff]
    %v3311 = vld [vmem:[%s9 + $0x388] sm:$0xff]
    %v3312 = vld [vmem:[%s9 + $0x390] sm:$0xff]
    %v3313 = vld [vmem:[%s9 + $0x398] sm:$0xff]
    %v3314 = vld [vmem:[%s9 + $0x3a0] sm:$0xff]
    %v3315 = vld [vmem:[%s9 + $0x3a8] sm:$0xff]
    %v3316 = vld [vmem:[%s9 + $0x3b0] sm:$0xff]
    %v3317 = vld [vmem:[%s9 + $0x3b8] sm:$0xff]
    %v3318 = vld [vmem:[%s9 + $0x3c0] sm:$0xff]
    %v3319 = vld [vmem:[%s9 + $0x3c8] sm:$0xff]
    %v3320 = vld [vmem:[%s9 + $0x3d0] sm:$0xff]
    %v3321 = vld [vmem:[%s9 + $0x3d8] sm:$0xff]
    %v3322 = vld [vmem:[%s9 + $0x3e0] sm:$0xff]
    %v3323 = vld [vmem:[%s9 + $0x3e8] sm:$0xff]
    %v3324 = vld [vmem:[%s9 + $0x3f0] sm:$0xff]
    %v3325 = vld [vmem:[%s9 + $0x3f8] sm:$0xff]
    %v3326 = vld [vmem:[%s3] sm:$0xff]
    %v3327 = vld [vmem:[%s3 + $0x8] sm:$0xff]
    %v3328 = vld [vmem:[%s3 + $0x10] sm:$0xff]
    %v3329 = vld [vmem:[%s3 + $0x18] sm:$0xff]
    %v3330 = vld [vmem:[%s3 + $0x20] sm:$0xff]
    %v3331 = vld [vmem:[%s3 + $0x28] sm:$0xff]
    %v3332 = vld [vmem:[%s3 + $0x30] sm:$0xff]
    %v3333 = vld [vmem:[%s3 + $0x38] sm:$0xff]
    %v3334 = vld [vmem:[%s3 + $0x40] sm:$0xff]
    %v3335 = vld [vmem:[%s3 + $0x48] sm:$0xff]
    %v3336 = vld [vmem:[%s3 + $0x50] sm:$0xff]
    %v3337 = vld [vmem:[%s3 + $0x58] sm:$0xff]
    %v3338 = vld [vmem:[%s3 + $0x60] sm:$0xff]
    %v3339 = vld [vmem:[%s3 + $0x68] sm:$0xff]
    %v3340 = vld [vmem:[%s3 + $0x70] sm:$0xff]
    %v3341 = vld [vmem:[%s3 + $0x78] sm:$0xff]
    %v3342 = vld [vmem:[%s12] sm:$0xf]
    %v3351 = vcombine.low %v3062, %v3063
    %v3352 = vcombine.low %v3064, %v3065
    %v3354 = vunpack.c.l.s4 1983009808
    %v3355 = vunpack.c.0.s8 %v3354
    %v3356 = vlaneseq
    %v3357 = vshrl.u32 %v3356, 7
    %v3358 = vsub.s32 %v3355, %v3357
    %v3359 = vrot.slane %v3351, %v3358
    %v3361 = vunpack.c.l.s4 1983009808
    %v3362 = vunpack.c.0.s8 %v3361
    %v3363 = vlaneseq
    %v3364 = vshrl.u32 %v3363, 7
    %v3365 = vsub.s32 %v3362, %v3364
    %v3366 = vrot.slane %v3352, %v3365
    %v3367 = vcombine.low %v3359, %v3366
    %v3368 = vcombine.high %v3359, %v3366
    %v3369 = vcombine.low %v3066, %v3067
    %v3370 = vcombine.low %v3068, %v3069
    %v3372 = vunpack.c.l.s4 1983009808
    %v3373 = vunpack.c.0.s8 %v3372
    %v3374 = vlaneseq
    %v3375 = vshrl.u32 %v3374, 7
    %v3376 = vsub.s32 %v3373, %v3375
    %v3377 = vrot.slane %v3369, %v3376
    %v3379 = vunpack.c.l.s4 1983009808
    %v3380 = vunpack.c.0.s8 %v3379
    %v3381 = vlaneseq
    %v3382 = vshrl.u32 %v3381, 7
    %v3383 = vsub.s32 %v3380, %v3382
    %v3384 = vrot.slane %v3370, %v3383
    %v3385 = vcombine.low %v3377, %v3384
    %v3386 = vcombine.high %v3377, %v3384
    %v3391 = vpack.c.bf16 %v3385, %v3367
    %v3392 = vpack.c.bf16 %v3386, %v3368
    %v3394 = vshrl.u32 %v3391, 16
    %v3396 = vrot.slane %v3394, 7
    %v3397 = vshll.u32 %v3391, 16
    %v3399 = vor.u32 %v3396, %v3397
    %v3401 = vshrl.u32 %v3392, 16
    %v3403 = vrot.slane %v3401, 7
    %v3404 = vshll.u32 %v3392, 16
    %v3406 = vor.u32 %v3403, %v3404
    %v3409 = vsel %vm494, 0, %v3399
    %v3410 = vsel %vm494, 0, %v3406
    %v3411 = vrot.slane %v3397, 1
    %v3412 = vor.u32 %v3394, %v3411
    %v3413 = vrot.slane %v3404, 1
    %v3414 = vor.u32 %v3401, %v3413
    %vm3417 = vcmask 1047552
    %vm3418 = vsmask.f32 7424
    %vm3419 = vmand %vm3417, %vm3418
    %v3420 = vsel %vm3419, %v3412, 0
    %v3421 = vsel %vm3419, %v3414, 0
    %v3422 = vadd.s32 %v524, 8
    %vm3423 = vcmp.lt.s32.totalorder %v524, 0
    %v3424 = vsub.s32 0, %v524
    %v3425 = vsel %vm3423, %v3424, %v524
    %v3426 = vshrl.u32 %v3425, 3
    %v3427 = vand.u32 %v3425, 7
    %v3428 = vsub.s32 0, %v3427
    %v3429 = vsel %vm3423, %v3428, %v3427
    %vm3430 = vcmp.lt.s32.totalorder %v3422, 0
    %v3431 = vsub.s32 0, %v3422
    %v3432 = vsel %vm3430, %v3431, %v3422
    %v3433 = vshrl.u32 %v3432, 3
    %v3434 = vand.u32 %v3432, 7
    %v3435 = vsub.s32 0, %v3434
    %v3436 = vsel %vm3430, %v3435, %v3434
    %vm3437 = vcmp.ne.s32.totalorder %v3429, 0
    %vm3438 = vcmp.ne.s32.totalorder %v3436, 0
    %vm3439 = vcmp.lt.s32.totalorder %v3429, 0
    %vm3440 = vcmp.lt.s32.totalorder %v3436, 0
    %vm3441 = vmand %vm3439, %vm3437
    %vm3442 = vmand %vm3440, %vm3438
    %v3443 = vadd.s32 %v3429, 8
    %v3444 = vadd.s32 %v3436, 8
    %v3445 = vsel %vm3441, %v3443, %v3429
    %v3446 = vsel %vm3442, %v3444, %v3436
    %vm3447 = vcmp.eq.s32.totalorder %v3445, 0
    %vm3448 = vcmp.eq.s32.totalorder %v3446, 0
    %v3449 = vsel %vm3447, 1, 0
    %v3450 = vsel %vm3448, 1, 0
    %vm3451 = vcmp.eq.s32.totalorder %v3449, 1
    %vm3452 = vcmp.eq.s32.totalorder %v3450, 1
    %vm3453 = vmpackc.low %vm3451, %vm3451
    %vm3454 = vmpackc.low %vm3452, %vm3452
    %v3455 = vsel %vm3453, 65537, 0
    %v3456 = vsel %vm3454, 65537, 0
    %v3457 = vunpack.c.l.b16 %v3455
    %v3458 = vunpack.c.l.b16 %v3456
    %v3459 = vpack.c.b16 %v3458, %v3457
    %vm3460 = vcmp.ne.s16.totalorder %v3459, 0
    %v3461 = vsel %vm3460, 0, %v3409
    %v3462 = vsel %vm3460, 0, %v3410
    %vm3463 = vcmp.eq.s32.totalorder %v3445, 7
    %vm3464 = vcmp.eq.s32.totalorder %v3446, 7
    %v3465 = vsel %vm3463, 1, 0
    %v3466 = vsel %vm3464, 1, 0
    %vm3467 = vcmp.eq.s32.totalorder %v3465, 1
    %vm3468 = vcmp.eq.s32.totalorder %v3466, 1
    %vm3469 = vmpackc.low %vm3467, %vm3467
    %vm3470 = vmpackc.low %vm3468, %vm3468
    %v3471 = vsel %vm3469, 65537, 0
    %v3472 = vsel %vm3470, 65537, 0
    %v3473 = vunpack.c.l.b16 %v3471
    %v3474 = vunpack.c.l.b16 %v3472
    %v3475 = vpack.c.b16 %v3474, %v3473
    %vm3476 = vcmp.ne.s16.totalorder %v3475, 0
    %v3477 = vsel %vm3476, 0, %v3420
    %v3478 = vsel %vm3476, 0, %v3421
    %v3607 = vunpack.c.l.b16 %v3070
    %v3608 = vunpack.c.h.b16 %v3070
    %v3609 = vunpack.c.l.b16 %v3071
    %v3610 = vunpack.c.h.b16 %v3071
    %v3611 = vunpack.c.l.b16 %v3072
    %v3612 = vunpack.c.h.b16 %v3072
    %v3613 = vunpack.c.l.b16 %v3073
    %v3614 = vunpack.c.h.b16 %v3073
    %v3615 = vunpack.c.l.b16 %v3074
    %v3616 = vunpack.c.h.b16 %v3074
    %v3617 = vunpack.c.l.b16 %v3075
    %v3618 = vunpack.c.h.b16 %v3075
    %v3619 = vunpack.c.l.b16 %v3076
    %v3620 = vunpack.c.h.b16 %v3076
    %v3621 = vunpack.c.l.b16 %v3077
    %v3622 = vunpack.c.h.b16 %v3077
    %v3623 = vunpack.c.l.b16 %v3078
    %v3624 = vunpack.c.h.b16 %v3078
    %v3625 = vunpack.c.l.b16 %v3079
    %v3626 = vunpack.c.h.b16 %v3079
    %v3627 = vunpack.c.l.b16 %v3080
    %v3628 = vunpack.c.h.b16 %v3080
    %v3629 = vunpack.c.l.b16 %v3081
    %v3630 = vunpack.c.h.b16 %v3081
    %v3631 = vunpack.c.l.b16 %v3082
    %v3632 = vunpack.c.h.b16 %v3082
    %v3633 = vunpack.c.l.b16 %v3083
    %v3634 = vunpack.c.h.b16 %v3083
    %v3635 = vunpack.c.l.b16 %v3084
    %v3636 = vunpack.c.h.b16 %v3084
    %v3637 = vunpack.c.l.b16 %v3085
    %v3638 = vunpack.c.h.b16 %v3085
    %v3639 = vunpack.c.l.b16 %v3086
    %v3640 = vunpack.c.h.b16 %v3086
    %v3641 = vunpack.c.l.b16 %v3087
    %v3642 = vunpack.c.h.b16 %v3087
    %v3643 = vunpack.c.l.b16 %v3088
    %v3644 = vunpack.c.h.b16 %v3088
    %v3645 = vunpack.c.l.b16 %v3089
    %v3646 = vunpack.c.h.b16 %v3089
    %v3647 = vunpack.c.l.b16 %v3090
    %v3648 = vunpack.c.h.b16 %v3090
    %v3649 = vunpack.c.l.b16 %v3091
    %v3650 = vunpack.c.h.b16 %v3091
    %v3651 = vunpack.c.l.b16 %v3092
    %v3652 = vunpack.c.h.b16 %v3092
    %v3653 = vunpack.c.l.b16 %v3093
    %v3654 = vunpack.c.h.b16 %v3093
    %v3655 = vunpack.c.l.b16 %v3094
    %v3656 = vunpack.c.h.b16 %v3094
    %v3657 = vunpack.c.l.b16 %v3095
    %v3658 = vunpack.c.h.b16 %v3095
    %v3659 = vunpack.c.l.b16 %v3096
    %v3660 = vunpack.c.h.b16 %v3096
    %v3661 = vunpack.c.l.b16 %v3097
    %v3662 = vunpack.c.h.b16 %v3097
    %v3663 = vunpack.c.l.b16 %v3098
    %v3664 = vunpack.c.h.b16 %v3098
    %v3665 = vunpack.c.l.b16 %v3099
    %v3666 = vunpack.c.h.b16 %v3099
    %v3667 = vunpack.c.l.b16 %v3100
    %v3668 = vunpack.c.h.b16 %v3100
    %v3669 = vunpack.c.l.b16 %v3101
    %v3670 = vunpack.c.h.b16 %v3101
    %v3671 = vunpack.c.l.b16 %v3102
    %v3672 = vunpack.c.h.b16 %v3102
    %v3673 = vunpack.c.l.b16 %v3103
    %v3674 = vunpack.c.h.b16 %v3103
    %v3675 = vunpack.c.l.b16 %v3104
    %v3676 = vunpack.c.h.b16 %v3104
    %v3677 = vunpack.c.l.b16 %v3105
    %v3678 = vunpack.c.h.b16 %v3105
    %v3679 = vunpack.c.l.b16 %v3106
    %v3680 = vunpack.c.h.b16 %v3106
    %v3681 = vunpack.c.l.b16 %v3107
    %v3682 = vunpack.c.h.b16 %v3107
    %v3683 = vunpack.c.l.b16 %v3108
    %v3684 = vunpack.c.h.b16 %v3108
    %v3685 = vunpack.c.l.b16 %v3109
    %v3686 = vunpack.c.h.b16 %v3109
    %v3687 = vunpack.c.l.b16 %v3110
    %v3688 = vunpack.c.h.b16 %v3110
    %v3689 = vunpack.c.l.b16 %v3111
    %v3690 = vunpack.c.h.b16 %v3111
    %v3691 = vunpack.c.l.b16 %v3112
    %v3692 = vunpack.c.h.b16 %v3112
    %v3693 = vunpack.c.l.b16 %v3113
    %v3694 = vunpack.c.h.b16 %v3113
    %v3695 = vunpack.c.l.b16 %v3114
    %v3696 = vunpack.c.h.b16 %v3114
    %v3697 = vunpack.c.l.b16 %v3115
    %v3698 = vunpack.c.h.b16 %v3115
    %v3699 = vunpack.c.l.b16 %v3116
    %v3700 = vunpack.c.h.b16 %v3116
    %v3701 = vunpack.c.l.b16 %v3117
    %v3702 = vunpack.c.h.b16 %v3117
    %v3703 = vunpack.c.l.b16 %v3118
    %v3704 = vunpack.c.h.b16 %v3118
    %v3705 = vunpack.c.l.b16 %v3119
    %v3706 = vunpack.c.h.b16 %v3119
    %v3707 = vunpack.c.l.b16 %v3120
    %v3708 = vunpack.c.h.b16 %v3120
    %v3709 = vunpack.c.l.b16 %v3121
    %v3710 = vunpack.c.h.b16 %v3121
    %v3711 = vunpack.c.l.b16 %v3122
    %v3712 = vunpack.c.h.b16 %v3122
    %v3713 = vunpack.c.l.b16 %v3123
    %v3714 = vunpack.c.h.b16 %v3123
    %v3715 = vunpack.c.l.b16 %v3124
    %v3716 = vunpack.c.h.b16 %v3124
    %v3717 = vunpack.c.l.b16 %v3125
    %v3718 = vunpack.c.h.b16 %v3125
    %v3719 = vunpack.c.l.b16 %v3126
    %v3720 = vunpack.c.h.b16 %v3126
    %v3721 = vunpack.c.l.b16 %v3127
    %v3722 = vunpack.c.h.b16 %v3127
    %v3723 = vunpack.c.l.b16 %v3128
    %v3724 = vunpack.c.h.b16 %v3128
    %v3725 = vunpack.c.l.b16 %v3129
    %v3726 = vunpack.c.h.b16 %v3129
    %v3727 = vunpack.c.l.b16 %v3130
    %v3728 = vunpack.c.h.b16 %v3130
    %v3729 = vunpack.c.l.b16 %v3131
    %v3730 = vunpack.c.h.b16 %v3131
    %v3731 = vunpack.c.l.b16 %v3132
    %v3732 = vunpack.c.h.b16 %v3132
    %v3733 = vunpack.c.l.b16 %v3133
    %v3734 = vunpack.c.h.b16 %v3133
    %v3735 = vunpack.c.l.b16 %v3134
    %v3736 = vunpack.c.h.b16 %v3134
    %v3737 = vunpack.c.l.b16 %v3135
    %v3738 = vunpack.c.h.b16 %v3135
    %v3739 = vunpack.c.l.b16 %v3136
    %v3740 = vunpack.c.h.b16 %v3136
    %v3741 = vunpack.c.l.b16 %v3137
    %v3742 = vunpack.c.h.b16 %v3137
    %v3743 = vunpack.c.l.b16 %v3138
    %v3744 = vunpack.c.h.b16 %v3138
    %v3745 = vunpack.c.l.b16 %v3139
    %v3746 = vunpack.c.h.b16 %v3139
    %v3747 = vunpack.c.l.b16 %v3140
    %v3748 = vunpack.c.h.b16 %v3140
    %v3749 = vunpack.c.l.b16 %v3141
    %v3750 = vunpack.c.h.b16 %v3141
    %v3751 = vunpack.c.l.b16 %v3142
    %v3752 = vunpack.c.h.b16 %v3142
    %v3753 = vunpack.c.l.b16 %v3143
    %v3754 = vunpack.c.h.b16 %v3143
    %v3755 = vunpack.c.l.b16 %v3144
    %v3756 = vunpack.c.h.b16 %v3144
    %v3757 = vunpack.c.l.b16 %v3145
    %v3758 = vunpack.c.h.b16 %v3145
    %v3759 = vunpack.c.l.b16 %v3146
    %v3760 = vunpack.c.h.b16 %v3146
    %v3761 = vunpack.c.l.b16 %v3147
    %v3762 = vunpack.c.h.b16 %v3147
    %v3763 = vunpack.c.l.b16 %v3148
    %v3764 = vunpack.c.h.b16 %v3148
    %v3765 = vunpack.c.l.b16 %v3149
    %v3766 = vunpack.c.h.b16 %v3149
    %v3767 = vunpack.c.l.b16 %v3150
    %v3768 = vunpack.c.h.b16 %v3150
    %v3769 = vunpack.c.l.b16 %v3151
    %v3770 = vunpack.c.h.b16 %v3151
    %v3771 = vunpack.c.l.b16 %v3152
    %v3772 = vunpack.c.h.b16 %v3152
    %v3773 = vunpack.c.l.b16 %v3153
    %v3774 = vunpack.c.h.b16 %v3153
    %v3775 = vunpack.c.l.b16 %v3154
    %v3776 = vunpack.c.h.b16 %v3154
    %v3777 = vunpack.c.l.b16 %v3155
    %v3778 = vunpack.c.h.b16 %v3155
    %v3779 = vunpack.c.l.b16 %v3156
    %v3780 = vunpack.c.h.b16 %v3156
    %v3781 = vunpack.c.l.b16 %v3157
    %v3782 = vunpack.c.h.b16 %v3157
    %v3783 = vunpack.c.l.b16 %v3158
    %v3784 = vunpack.c.h.b16 %v3158
    %v3785 = vunpack.c.l.b16 %v3159
    %v3786 = vunpack.c.h.b16 %v3159
    %v3787 = vunpack.c.l.b16 %v3160
    %v3788 = vunpack.c.h.b16 %v3160
    %v3789 = vunpack.c.l.b16 %v3161
    %v3790 = vunpack.c.h.b16 %v3161
    %v3791 = vunpack.c.l.b16 %v3162
    %v3792 = vunpack.c.h.b16 %v3162
    %v3793 = vunpack.c.l.b16 %v3163
    %v3794 = vunpack.c.h.b16 %v3163
    %v3795 = vunpack.c.l.b16 %v3164
    %v3796 = vunpack.c.h.b16 %v3164
    %v3797 = vunpack.c.l.b16 %v3165
    %v3798 = vunpack.c.h.b16 %v3165
    %v3799 = vunpack.c.l.b16 %v3166
    %v3800 = vunpack.c.h.b16 %v3166
    %v3801 = vunpack.c.l.b16 %v3167
    %v3802 = vunpack.c.h.b16 %v3167
    %v3803 = vunpack.c.l.b16 %v3168
    %v3804 = vunpack.c.h.b16 %v3168
    %v3805 = vunpack.c.l.b16 %v3169
    %v3806 = vunpack.c.h.b16 %v3169
    %v3807 = vunpack.c.l.b16 %v3170
    %v3808 = vunpack.c.h.b16 %v3170
    %v3809 = vunpack.c.l.b16 %v3171
    %v3810 = vunpack.c.h.b16 %v3171
    %v3811 = vunpack.c.l.b16 %v3172
    %v3812 = vunpack.c.h.b16 %v3172
    %v3813 = vunpack.c.l.b16 %v3173
    %v3814 = vunpack.c.h.b16 %v3173
    %v3815 = vunpack.c.l.b16 %v3174
    %v3816 = vunpack.c.h.b16 %v3174
    %v3817 = vunpack.c.l.b16 %v3175
    %v3818 = vunpack.c.h.b16 %v3175
    %v3819 = vunpack.c.l.b16 %v3176
    %v3820 = vunpack.c.h.b16 %v3176
    %v3821 = vunpack.c.l.b16 %v3177
    %v3822 = vunpack.c.h.b16 %v3177
    %v3823 = vunpack.c.l.b16 %v3178
    %v3824 = vunpack.c.h.b16 %v3178
    %v3825 = vunpack.c.l.b16 %v3179
    %v3826 = vunpack.c.h.b16 %v3179
    %v3827 = vunpack.c.l.b16 %v3180
    %v3828 = vunpack.c.h.b16 %v3180
    %v3829 = vunpack.c.l.b16 %v3181
    %v3830 = vunpack.c.h.b16 %v3181
    %v3831 = vunpack.c.l.b16 %v3182
    %v3832 = vunpack.c.h.b16 %v3182
    %v3833 = vunpack.c.l.b16 %v3183
    %v3834 = vunpack.c.h.b16 %v3183
    %v3835 = vunpack.c.l.b16 %v3184
    %v3836 = vunpack.c.h.b16 %v3184
    %v3837 = vunpack.c.l.b16 %v3185
    %v3838 = vunpack.c.h.b16 %v3185
    %v3839 = vunpack.c.l.b16 %v3186
    %v3840 = vunpack.c.h.b16 %v3186
    %v3841 = vunpack.c.l.b16 %v3187
    %v3842 = vunpack.c.h.b16 %v3187
    %v3843 = vunpack.c.l.b16 %v3188
    %v3844 = vunpack.c.h.b16 %v3188
    %v3845 = vunpack.c.l.b16 %v3189
    %v3846 = vunpack.c.h.b16 %v3189
    %v3847 = vunpack.c.l.b16 %v3190
    %v3848 = vunpack.c.h.b16 %v3190
    %v3849 = vunpack.c.l.b16 %v3191
    %v3850 = vunpack.c.h.b16 %v3191
    %v3851 = vunpack.c.l.b16 %v3192
    %v3852 = vunpack.c.h.b16 %v3192
    %v3853 = vunpack.c.l.b16 %v3193
    %v3854 = vunpack.c.h.b16 %v3193
    %v3855 = vunpack.c.l.b16 %v3194
    %v3856 = vunpack.c.h.b16 %v3194
    %v3857 = vunpack.c.l.b16 %v3195
    %v3858 = vunpack.c.h.b16 %v3195
    %v3859 = vunpack.c.l.b16 %v3196
    %v3860 = vunpack.c.h.b16 %v3196
    %v3861 = vunpack.c.l.b16 %v3197
    %v3862 = vunpack.c.h.b16 %v3197
    %v3863 = vpack.c.b16 %v3611, %v3607
    %v3864 = vpack.c.b16 %v3612, %v3608
    %v3865 = vpack.c.b16 %v3613, %v3609
    %v3866 = vpack.c.b16 %v3614, %v3610
    %v3867 = vpack.c.b16 %v3619, %v3615
    %v3868 = vpack.c.b16 %v3620, %v3616
    %v3869 = vpack.c.b16 %v3621, %v3617
    %v3870 = vpack.c.b16 %v3622, %v3618
    %v3871 = vpack.c.b16 %v3627, %v3623
    %v3872 = vpack.c.b16 %v3628, %v3624
    %v3873 = vpack.c.b16 %v3629, %v3625
    %v3874 = vpack.c.b16 %v3630, %v3626
    %v3875 = vpack.c.b16 %v3635, %v3631
    %v3876 = vpack.c.b16 %v3636, %v3632
    %v3877 = vpack.c.b16 %v3637, %v3633
    %v3878 = vpack.c.b16 %v3638, %v3634
    %v3879 = vpack.c.b16 %v3643, %v3639
    %v3880 = vpack.c.b16 %v3644, %v3640
    %v3881 = vpack.c.b16 %v3645, %v3641
    %v3882 = vpack.c.b16 %v3646, %v3642
    %v3883 = vpack.c.b16 %v3651, %v3647
    %v3884 = vpack.c.b16 %v3652, %v3648
    %v3885 = vpack.c.b16 %v3653, %v3649
    %v3886 = vpack.c.b16 %v3654, %v3650
    %v3887 = vpack.c.b16 %v3659, %v3655
    %v3888 = vpack.c.b16 %v3660, %v3656
    %v3889 = vpack.c.b16 %v3661, %v3657
    %v3890 = vpack.c.b16 %v3662, %v3658
    %v3891 = vpack.c.b16 %v3667, %v3663
    %v3892 = vpack.c.b16 %v3668, %v3664
    %v3893 = vpack.c.b16 %v3669, %v3665
    %v3894 = vpack.c.b16 %v3670, %v3666
    %v3895 = vpack.c.b16 %v3675, %v3671
    %v3896 = vpack.c.b16 %v3676, %v3672
    %v3897 = vpack.c.b16 %v3677, %v3673
    %v3898 = vpack.c.b16 %v3678, %v3674
    %v3899 = vpack.c.b16 %v3683, %v3679
    %v3900 = vpack.c.b16 %v3684, %v3680
    %v3901 = vpack.c.b16 %v3685, %v3681
    %v3902 = vpack.c.b16 %v3686, %v3682
    %v3903 = vpack.c.b16 %v3691, %v3687
    %v3904 = vpack.c.b16 %v3692, %v3688
    %v3905 = vpack.c.b16 %v3693, %v3689
    %v3906 = vpack.c.b16 %v3694, %v3690
    %v3907 = vpack.c.b16 %v3699, %v3695
    %v3908 = vpack.c.b16 %v3700, %v3696
    %v3909 = vpack.c.b16 %v3701, %v3697
    %v3910 = vpack.c.b16 %v3702, %v3698
    %v3911 = vpack.c.b16 %v3707, %v3703
    %v3912 = vpack.c.b16 %v3708, %v3704
    %v3913 = vpack.c.b16 %v3709, %v3705
    %v3914 = vpack.c.b16 %v3710, %v3706
    %v3915 = vpack.c.b16 %v3715, %v3711
    %v3916 = vpack.c.b16 %v3716, %v3712
    %v3917 = vpack.c.b16 %v3717, %v3713
    %v3918 = vpack.c.b16 %v3718, %v3714
    %v3919 = vpack.c.b16 %v3723, %v3719
    %v3920 = vpack.c.b16 %v3724, %v3720
    %v3921 = vpack.c.b16 %v3725, %v3721
    %v3922 = vpack.c.b16 %v3726, %v3722
    %v3923 = vpack.c.b16 %v3731, %v3727
    %v3924 = vpack.c.b16 %v3732, %v3728
    %v3925 = vpack.c.b16 %v3733, %v3729
    %v3926 = vpack.c.b16 %v3734, %v3730
    %v3927 = vpack.c.b16 %v3739, %v3735
    %v3928 = vpack.c.b16 %v3740, %v3736
    %v3929 = vpack.c.b16 %v3741, %v3737
    %v3930 = vpack.c.b16 %v3742, %v3738
    %v3931 = vpack.c.b16 %v3747, %v3743
    %v3932 = vpack.c.b16 %v3748, %v3744
    %v3933 = vpack.c.b16 %v3749, %v3745
    %v3934 = vpack.c.b16 %v3750, %v3746
    %v3935 = vpack.c.b16 %v3755, %v3751
    %v3936 = vpack.c.b16 %v3756, %v3752
    %v3937 = vpack.c.b16 %v3757, %v3753
    %v3938 = vpack.c.b16 %v3758, %v3754
    %v3939 = vpack.c.b16 %v3763, %v3759
    %v3940 = vpack.c.b16 %v3764, %v3760
    %v3941 = vpack.c.b16 %v3765, %v3761
    %v3942 = vpack.c.b16 %v3766, %v3762
    %v3943 = vpack.c.b16 %v3771, %v3767
    %v3944 = vpack.c.b16 %v3772, %v3768
    %v3945 = vpack.c.b16 %v3773, %v3769
    %v3946 = vpack.c.b16 %v3774, %v3770
    %v3947 = vpack.c.b16 %v3779, %v3775
    %v3948 = vpack.c.b16 %v3780, %v3776
    %v3949 = vpack.c.b16 %v3781, %v3777
    %v3950 = vpack.c.b16 %v3782, %v3778
    %v3951 = vpack.c.b16 %v3787, %v3783
    %v3952 = vpack.c.b16 %v3788, %v3784
    %v3953 = vpack.c.b16 %v3789, %v3785
    %v3954 = vpack.c.b16 %v3790, %v3786
    %v3955 = vpack.c.b16 %v3795, %v3791
    %v3956 = vpack.c.b16 %v3796, %v3792
    %v3957 = vpack.c.b16 %v3797, %v3793
    %v3958 = vpack.c.b16 %v3798, %v3794
    %v3959 = vpack.c.b16 %v3803, %v3799
    %v3960 = vpack.c.b16 %v3804, %v3800
    %v3961 = vpack.c.b16 %v3805, %v3801
    %v3962 = vpack.c.b16 %v3806, %v3802
    %v3963 = vpack.c.b16 %v3811, %v3807
    %v3964 = vpack.c.b16 %v3812, %v3808
    %v3965 = vpack.c.b16 %v3813, %v3809
    %v3966 = vpack.c.b16 %v3814, %v3810
    %v3967 = vpack.c.b16 %v3819, %v3815
    %v3968 = vpack.c.b16 %v3820, %v3816
    %v3969 = vpack.c.b16 %v3821, %v3817
    %v3970 = vpack.c.b16 %v3822, %v3818
    %v3971 = vpack.c.b16 %v3827, %v3823
    %v3972 = vpack.c.b16 %v3828, %v3824
    %v3973 = vpack.c.b16 %v3829, %v3825
    %v3974 = vpack.c.b16 %v3830, %v3826
    %v3975 = vpack.c.b16 %v3835, %v3831
    %v3976 = vpack.c.b16 %v3836, %v3832
    %v3977 = vpack.c.b16 %v3837, %v3833
    %v3978 = vpack.c.b16 %v3838, %v3834
    %v3979 = vpack.c.b16 %v3843, %v3839
    %v3980 = vpack.c.b16 %v3844, %v3840
    %v3981 = vpack.c.b16 %v3845, %v3841
    %v3982 = vpack.c.b16 %v3846, %v3842
    %v3983 = vpack.c.b16 %v3851, %v3847
    %v3984 = vpack.c.b16 %v3852, %v3848
    %v3985 = vpack.c.b16 %v3853, %v3849
    %v3986 = vpack.c.b16 %v3854, %v3850
    %v3987 = vpack.c.b16 %v3859, %v3855
    %v3988 = vpack.c.b16 %v3860, %v3856
    %v3989 = vpack.c.b16 %v3861, %v3857
    %v3990 = vpack.c.b16 %v3862, %v3858
    %4119 = vmatprep.subr.bf16.mxu0 %v3864
    %4120 = vmatpush1.bf16.msra.mxu0 %v3863
    %4121 = vmatprep.subr.bf16.mxu0 %v3868
    %4122 = vmatpush1.bf16.msra.mxu0 %v3867
    %4123 = vmatprep.subr.bf16.mxu0 %v3872
    %4124 = vmatpush1.bf16.msra.mxu0 %v3871
    %4125 = vmatprep.subr.bf16.mxu0 %v3876
    %4126 = vmatpush1.bf16.msra.mxu0 %v3875
    %4127 = vmatprep.subr.bf16.mxu0 %v3880
    %4128 = vmatpush1.bf16.msra.mxu0 %v3879
    %4129 = vmatprep.subr.bf16.mxu0 %v3884
    %4130 = vmatpush1.bf16.msra.mxu0 %v3883
    %4131 = vmatprep.subr.bf16.mxu0 %v3888
    %4132 = vmatpush1.bf16.msra.mxu0 %v3887
    %4133 = vmatprep.subr.bf16.mxu0 %v3892
    %4134 = vmatpush1.bf16.msra.mxu0 %v3891
    %4135 = vmatprep.subr.bf16.mxu0 %v3896
    %4136 = vmatpush1.bf16.msra.mxu0 %v3895
    %4137 = vmatprep.subr.bf16.mxu0 %v3900
    %4138 = vmatpush1.bf16.msra.mxu0 %v3899
    %4139 = vmatprep.subr.bf16.mxu0 %v3904
    %4140 = vmatpush1.bf16.msra.mxu0 %v3903
    %4141 = vmatprep.subr.bf16.mxu0 %v3908
    %4142 = vmatpush1.bf16.msra.mxu0 %v3907
    %4143 = vmatprep.subr.bf16.mxu0 %v3912
    %4144 = vmatpush1.bf16.msra.mxu0 %v3911
    %4145 = vmatprep.subr.bf16.mxu0 %v3916
    %4146 = vmatpush1.bf16.msra.mxu0 %v3915
    %4147 = vmatprep.subr.bf16.mxu0 %v3920
    %4148 = vmatpush1.bf16.msra.mxu0 %v3919
    %4149 = vmatprep.subr.bf16.mxu0 %v3924
    %4150 = vmatpush1.bf16.msra.mxu0 %v3923
    %4151 = vmatprep.mubr.bf16.mxu0 %v3462
    %4152 = vmatmul.mubr.bf16.gmra.mrb[0].mxu0 %v3461
    %v4153 = vpop.f32.mrb[0].mxu0
    %v4154 = vadd.f32 0.0, %v4153
    %v4155 = vpop.f32.mrb[0].mxu0
    %v4156 = vadd.f32 0.0, %v4155
    %v4157 = vpop.f32.mrb[0].mxu0
    %v4158 = vadd.f32 0.0, %v4157
    %v4159 = vpop.f32.mrb[0].mxu0
    %v4160 = vadd.f32 0.0, %v4159
    %4161 = vdwg.mxu0
    %4162 = vmatprep.subr.bf16.mxu0 %v3928
    %4163 = vmatpush1.bf16.msra.mxu0 %v3927
    %4164 = vmatprep.subr.bf16.mxu0 %v3932
    %4165 = vmatpush1.bf16.msra.mxu0 %v3931
    %4166 = vmatprep.subr.bf16.mxu0 %v3936
    %4167 = vmatpush1.bf16.msra.mxu0 %v3935
    %4168 = vmatprep.subr.bf16.mxu0 %v3940
    %4169 = vmatpush1.bf16.msra.mxu0 %v3939
    %4170 = vmatprep.subr.bf16.mxu0 %v3944
    %4171 = vmatpush1.bf16.msra.mxu0 %v3943
    %4172 = vmatprep.subr.bf16.mxu0 %v3948
    %4173 = vmatpush1.bf16.msra.mxu0 %v3947
    %4174 = vmatprep.subr.bf16.mxu0 %v3952
    %4175 = vmatpush1.bf16.msra.mxu0 %v3951
    %4176 = vmatprep.subr.bf16.mxu0 %v3956
    %4177 = vmatpush1.bf16.msra.mxu0 %v3955
    %4178 = vmatprep.subr.bf16.mxu0 %v3960
    %4179 = vmatpush1.bf16.msra.mxu0 %v3959
    %4180 = vmatprep.subr.bf16.mxu0 %v3964
    %4181 = vmatpush1.bf16.msra.mxu0 %v3963
    %4182 = vmatprep.subr.bf16.mxu0 %v3968
    %4183 = vmatpush1.bf16.msra.mxu0 %v3967
    %4184 = vmatprep.subr.bf16.mxu0 %v3972
    %4185 = vmatpush1.bf16.msra.mxu0 %v3971
    %4186 = vmatprep.subr.bf16.mxu0 %v3976
    %4187 = vmatpush1.bf16.msra.mxu0 %v3975
    %4188 = vmatprep.subr.bf16.mxu0 %v3980
    %4189 = vmatpush1.bf16.msra.mxu0 %v3979
    %4190 = vmatprep.subr.bf16.mxu0 %v3984
    %4191 = vmatpush1.bf16.msra.mxu0 %v3983
    %4192 = vmatprep.subr.bf16.mxu0 %v3988
    %4193 = vmatpush1.bf16.msra.mxu0 %v3987
    %4194 = vmatprep.mubr.bf16.mxu0 %v3392
    %4195 = vmatmul.mubr.bf16.gmra.mrb[0].mxu0 %v3391
    %v4196 = vpop.f32.mrb[0].mxu0
    %v4197 = vadd.f32 %v4154, %v4196
    %v4198 = vpop.f32.mrb[0].mxu0
    %v4199 = vadd.f32 %v4156, %v4198
    %v4200 = vpop.f32.mrb[0].mxu0
    %v4201 = vadd.f32 %v4158, %v4200
    %v4202 = vpop.f32.mrb[0].mxu0
    %v4203 = vadd.f32 %v4160, %v4202
    %4204 = vdwg.mxu0
    %4205 = vmatprep.subr.bf16.mxu0 %v3866
    %4206 = vmatpush1.bf16.msra.mxu0 %v3865
    %4207 = vmatprep.subr.bf16.mxu0 %v3870
    %4208 = vmatpush1.bf16.msra.mxu0 %v3869
    %4209 = vmatprep.subr.bf16.mxu0 %v3874
    %4210 = vmatpush1.bf16.msra.mxu0 %v3873
    %4211 = vmatprep.subr.bf16.mxu0 %v3878
    %4212 = vmatpush1.bf16.msra.mxu0 %v3877
    %4213 = vmatprep.subr.bf16.mxu0 %v3882
    %4214 = vmatpush1.bf16.msra.mxu0 %v3881
    %4215 = vmatprep.subr.bf16.mxu0 %v3886
    %4216 = vmatpush1.bf16.msra.mxu0 %v3885
    %4217 = vmatprep.subr.bf16.mxu0 %v3890
    %4218 = vmatpush1.bf16.msra.mxu0 %v3889
    %4219 = vmatprep.subr.bf16.mxu0 %v3894
    %4220 = vmatpush1.bf16.msra.mxu0 %v3893
    %4221 = vmatprep.subr.bf16.mxu0 %v3898
    %4222 = vmatpush1.bf16.msra.mxu0 %v3897
    %4223 = vmatprep.subr.bf16.mxu0 %v3902
    %4224 = vmatpush1.bf16.msra.mxu0 %v3901
    %4225 = vmatprep.subr.bf16.mxu0 %v3906
    %4226 = vmatpush1.bf16.msra.mxu0 %v3905
    %4227 = vmatprep.subr.bf16.mxu0 %v3910
    %4228 = vmatpush1.bf16.msra.mxu0 %v3909
    %4229 = vmatprep.subr.bf16.mxu0 %v3914
    %4230 = vmatpush1.bf16.msra.mxu0 %v3913
    %4231 = vmatprep.subr.bf16.mxu0 %v3918
    %4232 = vmatpush1.bf16.msra.mxu0 %v3917
    %4233 = vmatprep.subr.bf16.mxu0 %v3922
    %4234 = vmatpush1.bf16.msra.mxu0 %v3921
    %4235 = vmatprep.subr.bf16.mxu0 %v3926
    %4236 = vmatpush1.bf16.msra.mxu0 %v3925
    %4237 = vmatprep.mubr.bf16.mxu0 %v3462
    %4238 = vmatmul.mubr.bf16.gmra.mrb[0].mxu0 %v3461
    %v4239 = vpop.f32.mrb[0].mxu0
    %v4240 = vadd.f32 0.0, %v4239
    %v4241 = vpop.f32.mrb[0].mxu0
    %v4242 = vadd.f32 0.0, %v4241
    %v4243 = vpop.f32.mrb[0].mxu0
    %v4244 = vadd.f32 0.0, %v4243
    %v4245 = vpop.f32.mrb[0].mxu0
    %v4246 = vadd.f32 0.0, %v4245
    %4247 = vdwg.mxu0
    %4248 = vmatprep.subr.bf16.mxu0 %v3930
    %4249 = vmatpush1.bf16.msra.mxu0 %v3929
    %4250 = vmatprep.subr.bf16.mxu0 %v3934
    %4251 = vmatpush1.bf16.msra.mxu0 %v3933
    %4252 = vmatprep.subr.bf16.mxu0 %v3938
    %4253 = vmatpush1.bf16.msra.mxu0 %v3937
    %4254 = vmatprep.subr.bf16.mxu0 %v3942
    %4255 = vmatpush1.bf16.msra.mxu0 %v3941
    %4256 = vmatprep.subr.bf16.mxu0 %v3946
    %4257 = vmatpush1.bf16.msra.mxu0 %v3945
    %4258 = vmatprep.subr.bf16.mxu0 %v3950
    %4259 = vmatpush1.bf16.msra.mxu0 %v3949
    %4260 = vmatprep.subr.bf16.mxu0 %v3954
    %4261 = vmatpush1.bf16.msra.mxu0 %v3953
    %4262 = vmatprep.subr.bf16.mxu0 %v3958
    %4263 = vmatpush1.bf16.msra.mxu0 %v3957
    %4264 = vmatprep.subr.bf16.mxu0 %v3962
    %4265 = vmatpush1.bf16.msra.mxu0 %v3961
    %4266 = vmatprep.subr.bf16.mxu0 %v3966
    %4267 = vmatpush1.bf16.msra.mxu0 %v3965
    %4268 = vmatprep.subr.bf16.mxu0 %v3970
    %4269 = vmatpush1.bf16.msra.mxu0 %v3969
    %4270 = vmatprep.subr.bf16.mxu0 %v3974
    %4271 = vmatpush1.bf16.msra.mxu0 %v3973
    %4272 = vmatprep.subr.bf16.mxu0 %v3978
    %4273 = vmatpush1.bf16.msra.mxu0 %v3977
    %4274 = vmatprep.subr.bf16.mxu0 %v3982
    %4275 = vmatpush1.bf16.msra.mxu0 %v3981
    %4276 = vmatprep.subr.bf16.mxu0 %v3986
    %4277 = vmatpush1.bf16.msra.mxu0 %v3985
    %4278 = vmatprep.subr.bf16.mxu0 %v3990
    %4279 = vmatpush1.bf16.msra.mxu0 %v3989
    %4280 = vmatprep.mubr.bf16.mxu0 %v3392
    %4281 = vmatmul.mubr.bf16.gmra.mrb[0].mxu0 %v3391
    %v4282 = vpop.f32.mrb[0].mxu0
    %v4283 = vadd.f32 %v4240, %v4282
    %v4284 = vpop.f32.mrb[0].mxu0
    %v4285 = vadd.f32 %v4242, %v4284
    %v4286 = vpop.f32.mrb[0].mxu0
    %v4287 = vadd.f32 %v4244, %v4286
    %v4288 = vpop.f32.mrb[0].mxu0
    %v4289 = vadd.f32 %v4246, %v4288
    %4290 = vdwg.mxu0
    %v4419 = vunpack.c.l.b16 %v3198
    %v4420 = vunpack.c.h.b16 %v3198
    %v4421 = vunpack.c.l.b16 %v3199
    %v4422 = vunpack.c.h.b16 %v3199
    %v4423 = vunpack.c.l.b16 %v3200
    %v4424 = vunpack.c.h.b16 %v3200
    %v4425 = vunpack.c.l.b16 %v3201
    %v4426 = vunpack.c.h.b16 %v3201
    %v4427 = vunpack.c.l.b16 %v3202
    %v4428 = vunpack.c.h.b16 %v3202
    %v4429 = vunpack.c.l.b16 %v3203
    %v4430 = vunpack.c.h.b16 %v3203
    %v4431 = vunpack.c.l.b16 %v3204
    %v4432 = vunpack.c.h.b16 %v3204
    %v4433 = vunpack.c.l.b16 %v3205
    %v4434 = vunpack.c.h.b16 %v3205
    %v4435 = vunpack.c.l.b16 %v3206
    %v4436 = vunpack.c.h.b16 %v3206
    %v4437 = vunpack.c.l.b16 %v3207
    %v4438 = vunpack.c.h.b16 %v3207
    %v4439 = vunpack.c.l.b16 %v3208
    %v4440 = vunpack.c.h.b16 %v3208
    %v4441 = vunpack.c.l.b16 %v3209
    %v4442 = vunpack.c.h.b16 %v3209
    %v4443 = vunpack.c.l.b16 %v3210
    %v4444 = vunpack.c.h.b16 %v3210
    %v4445 = vunpack.c.l.b16 %v3211
    %v4446 = vunpack.c.h.b16 %v3211
    %v4447 = vunpack.c.l.b16 %v3212
    %v4448 = vunpack.c.h.b16 %v3212
    %v4449 = vunpack.c.l.b16 %v3213
    %v4450 = vunpack.c.h.b16 %v3213
    %v4451 = vunpack.c.l.b16 %v3214
    %v4452 = vunpack.c.h.b16 %v3214
    %v4453 = vunpack.c.l.b16 %v3215
    %v4454 = vunpack.c.h.b16 %v3215
    %v4455 = vunpack.c.l.b16 %v3216
    %v4456 = vunpack.c.h.b16 %v3216
    %v4457 = vunpack.c.l.b16 %v3217
    %v4458 = vunpack.c.h.b16 %v3217
    %v4459 = vunpack.c.l.b16 %v3218
    %v4460 = vunpack.c.h.b16 %v3218
    %v4461 = vunpack.c.l.b16 %v3219
    %v4462 = vunpack.c.h.b16 %v3219
    %v4463 = vunpack.c.l.b16 %v3220
    %v4464 = vunpack.c.h.b16 %v3220
    %v4465 = vunpack.c.l.b16 %v3221
    %v4466 = vunpack.c.h.b16 %v3221
    %v4467 = vunpack.c.l.b16 %v3222
    %v4468 = vunpack.c.h.b16 %v3222
    %v4469 = vunpack.c.l.b16 %v3223
    %v4470 = vunpack.c.h.b16 %v3223
    %v4471 = vunpack.c.l.b16 %v3224
    %v4472 = vunpack.c.h.b16 %v3224
    %v4473 = vunpack.c.l.b16 %v3225
    %v4474 = vunpack.c.h.b16 %v3225
    %v4475 = vunpack.c.l.b16 %v3226
    %v4476 = vunpack.c.h.b16 %v3226
    %v4477 = vunpack.c.l.b16 %v3227
    %v4478 = vunpack.c.h.b16 %v3227
    %v4479 = vunpack.c.l.b16 %v3228
    %v4480 = vunpack.c.h.b16 %v3228
    %v4481 = vunpack.c.l.b16 %v3229
    %v4482 = vunpack.c.h.b16 %v3229
    %v4483 = vunpack.c.l.b16 %v3230
    %v4484 = vunpack.c.h.b16 %v3230
    %v4485 = vunpack.c.l.b16 %v3231
    %v4486 = vunpack.c.h.b16 %v3231
    %v4487 = vunpack.c.l.b16 %v3232
    %v4488 = vunpack.c.h.b16 %v3232
    %v4489 = vunpack.c.l.b16 %v3233
    %v4490 = vunpack.c.h.b16 %v3233
    %v4491 = vunpack.c.l.b16 %v3234
    %v4492 = vunpack.c.h.b16 %v3234
    %v4493 = vunpack.c.l.b16 %v3235
    %v4494 = vunpack.c.h.b16 %v3235
    %v4495 = vunpack.c.l.b16 %v3236
    %v4496 = vunpack.c.h.b16 %v3236
    %v4497 = vunpack.c.l.b16 %v3237
    %v4498 = vunpack.c.h.b16 %v3237
    %v4499 = vunpack.c.l.b16 %v3238
    %v4500 = vunpack.c.h.b16 %v3238
    %v4501 = vunpack.c.l.b16 %v3239
    %v4502 = vunpack.c.h.b16 %v3239
    %v4503 = vunpack.c.l.b16 %v3240
    %v4504 = vunpack.c.h.b16 %v3240
    %v4505 = vunpack.c.l.b16 %v3241
    %v4506 = vunpack.c.h.b16 %v3241
    %v4507 = vunpack.c.l.b16 %v3242
    %v4508 = vunpack.c.h.b16 %v3242
    %v4509 = vunpack.c.l.b16 %v3243
    %v4510 = vunpack.c.h.b16 %v3243
    %v4511 = vunpack.c.l.b16 %v3244
    %v4512 = vunpack.c.h.b16 %v3244
    %v4513 = vunpack.c.l.b16 %v3245
    %v4514 = vunpack.c.h.b16 %v3245
    %v4515 = vunpack.c.l.b16 %v3246
    %v4516 = vunpack.c.h.b16 %v3246
    %v4517 = vunpack.c.l.b16 %v3247
    %v4518 = vunpack.c.h.b16 %v3247
    %v4519 = vunpack.c.l.b16 %v3248
    %v4520 = vunpack.c.h.b16 %v3248
    %v4521 = vunpack.c.l.b16 %v3249
    %v4522 = vunpack.c.h.b16 %v3249
    %v4523 = vunpack.c.l.b16 %v3250
    %v4524 = vunpack.c.h.b16 %v3250
    %v4525 = vunpack.c.l.b16 %v3251
    %v4526 = vunpack.c.h.b16 %v3251
    %v4527 = vunpack.c.l.b16 %v3252
    %v4528 = vunpack.c.h.b16 %v3252
    %v4529 = vunpack.c.l.b16 %v3253
    %v4530 = vunpack.c.h.b16 %v3253
    %v4531 = vunpack.c.l.b16 %v3254
    %v4532 = vunpack.c.h.b16 %v3254
    %v4533 = vunpack.c.l.b16 %v3255
    %v4534 = vunpack.c.h.b16 %v3255
    %v4535 = vunpack.c.l.b16 %v3256
    %v4536 = vunpack.c.h.b16 %v3256
    %v4537 = vunpack.c.l.b16 %v3257
    %v4538 = vunpack.c.h.b16 %v3257
    %v4539 = vunpack.c.l.b16 %v3258
    %v4540 = vunpack.c.h.b16 %v3258
    %v4541 = vunpack.c.l.b16 %v3259
    %v4542 = vunpack.c.h.b16 %v3259
    %v4543 = vunpack.c.l.b16 %v3260
    %v4544 = vunpack.c.h.b16 %v3260
    %v4545 = vunpack.c.l.b16 %v3261
    %v4546 = vunpack.c.h.b16 %v3261
    %v4547 = vunpack.c.l.b16 %v3262
    %v4548 = vunpack.c.h.b16 %v3262
    %v4549 = vunpack.c.l.b16 %v3263
    %v4550 = vunpack.c.h.b16 %v3263
    %v4551 = vunpack.c.l.b16 %v3264
    %v4552 = vunpack.c.h.b16 %v3264
    %v4553 = vunpack.c.l.b16 %v3265
    %v4554 = vunpack.c.h.b16 %v3265
    %v4555 = vunpack.c.l.b16 %v3266
    %v4556 = vunpack.c.h.b16 %v3266
    %v4557 = vunpack.c.l.b16 %v3267
    %v4558 = vunpack.c.h.b16 %v3267
    %v4559 = vunpack.c.l.b16 %v3268
    %v4560 = vunpack.c.h.b16 %v3268
    %v4561 = vunpack.c.l.b16 %v3269
    %v4562 = vunpack.c.h.b16 %v3269
    %v4563 = vunpack.c.l.b16 %v3270
    %v4564 = vunpack.c.h.b16 %v3270
    %v4565 = vunpack.c.l.b16 %v3271
    %v4566 = vunpack.c.h.b16 %v3271
    %v4567 = vunpack.c.l.b16 %v3272
    %v4568 = vunpack.c.h.b16 %v3272
    %v4569 = vunpack.c.l.b16 %v3273
    %v4570 = vunpack.c.h.b16 %v3273
    %v4571 = vunpack.c.l.b16 %v3274
    %v4572 = vunpack.c.h.b16 %v3274
    %v4573 = vunpack.c.l.b16 %v3275
    %v4574 = vunpack.c.h.b16 %v3275
    %v4575 = vunpack.c.l.b16 %v3276
    %v4576 = vunpack.c.h.b16 %v3276
    %v4577 = vunpack.c.l.b16 %v3277
    %v4578 = vunpack.c.h.b16 %v3277
    %v4579 = vunpack.c.l.b16 %v3278
    %v4580 = vunpack.c.h.b16 %v3278
    %v4581 = vunpack.c.l.b16 %v3279
    %v4582 = vunpack.c.h.b16 %v3279
    %v4583 = vunpack.c.l.b16 %v3280
    %v4584 = vunpack.c.h.b16 %v3280
    %v4585 = vunpack.c.l.b16 %v3281
    %v4586 = vunpack.c.h.b16 %v3281
    %v4587 = vunpack.c.l.b16 %v3282
    %v4588 = vunpack.c.h.b16 %v3282
    %v4589 = vunpack.c.l.b16 %v3283
    %v4590 = vunpack.c.h.b16 %v3283
    %v4591 = vunpack.c.l.b16 %v3284
    %v4592 = vunpack.c.h.b16 %v3284
    %v4593 = vunpack.c.l.b16 %v3285
    %v4594 = vunpack.c.h.b16 %v3285
    %v4595 = vunpack.c.l.b16 %v3286
    %v4596 = vunpack.c.h.b16 %v3286
    %v4597 = vunpack.c.l.b16 %v3287
    %v4598 = vunpack.c.h.b16 %v3287
    %v4599 = vunpack.c.l.b16 %v3288
    %v4600 = vunpack.c.h.b16 %v3288
    %v4601 = vunpack.c.l.b16 %v3289
    %v4602 = vunpack.c.h.b16 %v3289
    %v4603 = vunpack.c.l.b16 %v3290
    %v4604 = vunpack.c.h.b16 %v3290
    %v4605 = vunpack.c.l.b16 %v3291
    %v4606 = vunpack.c.h.b16 %v3291
    %v4607 = vunpack.c.l.b16 %v3292
    %v4608 = vunpack.c.h.b16 %v3292
    %v4609 = vunpack.c.l.b16 %v3293
    %v4610 = vunpack.c.h.b16 %v3293
    %v4611 = vunpack.c.l.b16 %v3294
    %v4612 = vunpack.c.h.b16 %v3294
    %v4613 = vunpack.c.l.b16 %v3295
    %v4614 = vunpack.c.h.b16 %v3295
    %v4615 = vunpack.c.l.b16 %v3296
    %v4616 = vunpack.c.h.b16 %v3296
    %v4617 = vunpack.c.l.b16 %v3297
    %v4618 = vunpack.c.h.b16 %v3297
    %v4619 = vunpack.c.l.b16 %v3298
    %v4620 = vunpack.c.h.b16 %v3298
    %v4621 = vunpack.c.l.b16 %v3299
    %v4622 = vunpack.c.h.b16 %v3299
    %v4623 = vunpack.c.l.b16 %v3300
    %v4624 = vunpack.c.h.b16 %v3300
    %v4625 = vunpack.c.l.b16 %v3301
    %v4626 = vunpack.c.h.b16 %v3301
    %v4627 = vunpack.c.l.b16 %v3302
    %v4628 = vunpack.c.h.b16 %v3302
    %v4629 = vunpack.c.l.b16 %v3303
    %v4630 = vunpack.c.h.b16 %v3303
    %v4631 = vunpack.c.l.b16 %v3304
    %v4632 = vunpack.c.h.b16 %v3304
    %v4633 = vunpack.c.l.b16 %v3305
    %v4634 = vunpack.c.h.b16 %v3305
    %v4635 = vunpack.c.l.b16 %v3306
    %v4636 = vunpack.c.h.b16 %v3306
    %v4637 = vunpack.c.l.b16 %v3307
    %v4638 = vunpack.c.h.b16 %v3307
    %v4639 = vunpack.c.l.b16 %v3308
    %v4640 = vunpack.c.h.b16 %v3308
    %v4641 = vunpack.c.l.b16 %v3309
    %v4642 = vunpack.c.h.b16 %v3309
    %v4643 = vunpack.c.l.b16 %v3310
    %v4644 = vunpack.c.h.b16 %v3310
    %v4645 = vunpack.c.l.b16 %v3311
    %v4646 = vunpack.c.h.b16 %v3311
    %v4647 = vunpack.c.l.b16 %v3312
    %v4648 = vunpack.c.h.b16 %v3312
    %v4649 = vunpack.c.l.b16 %v3313
    %v4650 = vunpack.c.h.b16 %v3313
    %v4651 = vunpack.c.l.b16 %v3314
    %v4652 = vunpack.c.h.b16 %v3314
    %v4653 = vunpack.c.l.b16 %v3315
    %v4654 = vunpack.c.h.b16 %v3315
    %v4655 = vunpack.c.l.b16 %v3316
    %v4656 = vunpack.c.h.b16 %v3316
    %v4657 = vunpack.c.l.b16 %v3317
    %v4658 = vunpack.c.h.b16 %v3317
    %v4659 = vunpack.c.l.b16 %v3318
    %v4660 = vunpack.c.h.b16 %v3318
    %v4661 = vunpack.c.l.b16 %v3319
    %v4662 = vunpack.c.h.b16 %v3319
    %v4663 = vunpack.c.l.b16 %v3320
    %v4664 = vunpack.c.h.b16 %v3320
    %v4665 = vunpack.c.l.b16 %v3321
    %v4666 = vunpack.c.h.b16 %v3321
    %v4667 = vunpack.c.l.b16 %v3322
    %v4668 = vunpack.c.h.b16 %v3322
    %v4669 = vunpack.c.l.b16 %v3323
    %v4670 = vunpack.c.h.b16 %v3323
    %v4671 = vunpack.c.l.b16 %v3324
    %v4672 = vunpack.c.h.b16 %v3324
    %v4673 = vunpack.c.l.b16 %v3325
    %v4674 = vunpack.c.h.b16 %v3325
    %v4675 = vpack.c.b16 %v4423, %v4419
    %v4676 = vpack.c.b16 %v4424, %v4420
    %v4677 = vpack.c.b16 %v4425, %v4421
    %v4678 = vpack.c.b16 %v4426, %v4422
    %v4679 = vpack.c.b16 %v4431, %v4427
    %v4680 = vpack.c.b16 %v4432, %v4428
    %v4681 = vpack.c.b16 %v4433, %v4429
    %v4682 = vpack.c.b16 %v4434, %v4430
    %v4683 = vpack.c.b16 %v4439, %v4435
    %v4684 = vpack.c.b16 %v4440, %v4436
    %v4685 = vpack.c.b16 %v4441, %v4437
    %v4686 = vpack.c.b16 %v4442, %v4438
    %v4687 = vpack.c.b16 %v4447, %v4443
    %v4688 = vpack.c.b16 %v4448, %v4444
    %v4689 = vpack.c.b16 %v4449, %v4445
    %v4690 = vpack.c.b16 %v4450, %v4446
    %v4691 = vpack.c.b16 %v4455, %v4451
    %v4692 = vpack.c.b16 %v4456, %v4452
    %v4693 = vpack.c.b16 %v4457, %v4453
    %v4694 = vpack.c.b16 %v4458, %v4454
    %v4695 = vpack.c.b16 %v4463, %v4459
    %v4696 = vpack.c.b16 %v4464, %v4460
    %v4697 = vpack.c.b16 %v4465, %v4461
    %v4698 = vpack.c.b16 %v4466, %v4462
    %v4699 = vpack.c.b16 %v4471, %v4467
    %v4700 = vpack.c.b16 %v4472, %v4468
    %v4701 = vpack.c.b16 %v4473, %v4469
    %v4702 = vpack.c.b16 %v4474, %v4470
    %v4703 = vpack.c.b16 %v4479, %v4475
    %v4704 = vpack.c.b16 %v4480, %v4476
    %v4705 = vpack.c.b16 %v4481, %v4477
    %v4706 = vpack.c.b16 %v4482, %v4478
    %v4707 = vpack.c.b16 %v4487, %v4483
    %v4708 = vpack.c.b16 %v4488, %v4484
    %v4709 = vpack.c.b16 %v4489, %v4485
    %v4710 = vpack.c.b16 %v4490, %v4486
    %v4711 = vpack.c.b16 %v4495, %v4491
    %v4712 = vpack.c.b16 %v4496, %v4492
    %v4713 = vpack.c.b16 %v4497, %v4493
    %v4714 = vpack.c.b16 %v4498, %v4494
    %v4715 = vpack.c.b16 %v4503, %v4499
    %v4716 = vpack.c.b16 %v4504, %v4500
    %v4717 = vpack.c.b16 %v4505, %v4501
    %v4718 = vpack.c.b16 %v4506, %v4502
    %v4719 = vpack.c.b16 %v4511, %v4507
    %v4720 = vpack.c.b16 %v4512, %v4508
    %v4721 = vpack.c.b16 %v4513, %v4509
    %v4722 = vpack.c.b16 %v4514, %v4510
    %v4723 = vpack.c.b16 %v4519, %v4515
    %v4724 = vpack.c.b16 %v4520, %v4516
    %v4725 = vpack.c.b16 %v4521, %v4517
    %v4726 = vpack.c.b16 %v4522, %v4518
    %v4727 = vpack.c.b16 %v4527, %v4523
    %v4728 = vpack.c.b16 %v4528, %v4524
    %v4729 = vpack.c.b16 %v4529, %v4525
    %v4730 = vpack.c.b16 %v4530, %v4526
    %v4731 = vpack.c.b16 %v4535, %v4531
    %v4732 = vpack.c.b16 %v4536, %v4532
    %v4733 = vpack.c.b16 %v4537, %v4533
    %v4734 = vpack.c.b16 %v4538, %v4534
    %v4735 = vpack.c.b16 %v4543, %v4539
    %v4736 = vpack.c.b16 %v4544, %v4540
    %v4737 = vpack.c.b16 %v4545, %v4541
    %v4738 = vpack.c.b16 %v4546, %v4542
    %v4739 = vpack.c.b16 %v4551, %v4547
    %v4740 = vpack.c.b16 %v4552, %v4548
    %v4741 = vpack.c.b16 %v4553, %v4549
    %v4742 = vpack.c.b16 %v4554, %v4550
    %v4743 = vpack.c.b16 %v4559, %v4555
    %v4744 = vpack.c.b16 %v4560, %v4556
    %v4745 = vpack.c.b16 %v4561, %v4557
    %v4746 = vpack.c.b16 %v4562, %v4558
    %v4747 = vpack.c.b16 %v4567, %v4563
    %v4748 = vpack.c.b16 %v4568, %v4564
    %v4749 = vpack.c.b16 %v4569, %v4565
    %v4750 = vpack.c.b16 %v4570, %v4566
    %v4751 = vpack.c.b16 %v4575, %v4571
    %v4752 = vpack.c.b16 %v4576, %v4572
    %v4753 = vpack.c.b16 %v4577, %v4573
    %v4754 = vpack.c.b16 %v4578, %v4574
    %v4755 = vpack.c.b16 %v4583, %v4579
    %v4756 = vpack.c.b16 %v4584, %v4580
    %v4757 = vpack.c.b16 %v4585, %v4581
    %v4758 = vpack.c.b16 %v4586, %v4582
    %v4759 = vpack.c.b16 %v4591, %v4587
    %v4760 = vpack.c.b16 %v4592, %v4588
    %v4761 = vpack.c.b16 %v4593, %v4589
    %v4762 = vpack.c.b16 %v4594, %v4590
    %v4763 = vpack.c.b16 %v4599, %v4595
    %v4764 = vpack.c.b16 %v4600, %v4596
    %v4765 = vpack.c.b16 %v4601, %v4597
    %v4766 = vpack.c.b16 %v4602, %v4598
    %v4767 = vpack.c.b16 %v4607, %v4603
    %v4768 = vpack.c.b16 %v4608, %v4604
    %v4769 = vpack.c.b16 %v4609, %v4605
    %v4770 = vpack.c.b16 %v4610, %v4606
    %v4771 = vpack.c.b16 %v4615, %v4611
    %v4772 = vpack.c.b16 %v4616, %v4612
    %v4773 = vpack.c.b16 %v4617, %v4613
    %v4774 = vpack.c.b16 %v4618, %v4614
    %v4775 = vpack.c.b16 %v4623, %v4619
    %v4776 = vpack.c.b16 %v4624, %v4620
    %v4777 = vpack.c.b16 %v4625, %v4621
    %v4778 = vpack.c.b16 %v4626, %v4622
    %v4779 = vpack.c.b16 %v4631, %v4627
    %v4780 = vpack.c.b16 %v4632, %v4628
    %v4781 = vpack.c.b16 %v4633, %v4629
    %v4782 = vpack.c.b16 %v4634, %v4630
    %v4783 = vpack.c.b16 %v4639, %v4635
    %v4784 = vpack.c.b16 %v4640, %v4636
    %v4785 = vpack.c.b16 %v4641, %v4637
    %v4786 = vpack.c.b16 %v4642, %v4638
    %v4787 = vpack.c.b16 %v4647, %v4643
    %v4788 = vpack.c.b16 %v4648, %v4644
    %v4789 = vpack.c.b16 %v4649, %v4645
    %v4790 = vpack.c.b16 %v4650, %v4646
    %v4791 = vpack.c.b16 %v4655, %v4651
    %v4792 = vpack.c.b16 %v4656, %v4652
    %v4793 = vpack.c.b16 %v4657, %v4653
    %v4794 = vpack.c.b16 %v4658, %v4654
    %v4795 = vpack.c.b16 %v4663, %v4659
    %v4796 = vpack.c.b16 %v4664, %v4660
    %v4797 = vpack.c.b16 %v4665, %v4661
    %v4798 = vpack.c.b16 %v4666, %v4662
    %v4799 = vpack.c.b16 %v4671, %v4667
    %v4800 = vpack.c.b16 %v4672, %v4668
    %v4801 = vpack.c.b16 %v4673, %v4669
    %v4802 = vpack.c.b16 %v4674, %v4670
    %4931 = vmatprep.subr.bf16.mxu0 %v4676
    %4932 = vmatpush1.bf16.msra.mxu0 %v4675
    %4933 = vmatprep.subr.bf16.mxu0 %v4680
    %4934 = vmatpush1.bf16.msra.mxu0 %v4679
    %4935 = vmatprep.subr.bf16.mxu0 %v4684
    %4936 = vmatpush1.bf16.msra.mxu0 %v4683
    %4937 = vmatprep.subr.bf16.mxu0 %v4688
    %4938 = vmatpush1.bf16.msra.mxu0 %v4687
    %4939 = vmatprep.subr.bf16.mxu0 %v4692
    %4940 = vmatpush1.bf16.msra.mxu0 %v4691
    %4941 = vmatprep.subr.bf16.mxu0 %v4696
    %4942 = vmatpush1.bf16.msra.mxu0 %v4695
    %4943 = vmatprep.subr.bf16.mxu0 %v4700
    %4944 = vmatpush1.bf16.msra.mxu0 %v4699
    %4945 = vmatprep.subr.bf16.mxu0 %v4704
    %4946 = vmatpush1.bf16.msra.mxu0 %v4703
    %4947 = vmatprep.subr.bf16.mxu0 %v4708
    %4948 = vmatpush1.bf16.msra.mxu0 %v4707
    %4949 = vmatprep.subr.bf16.mxu0 %v4712
    %4950 = vmatpush1.bf16.msra.mxu0 %v4711
    %4951 = vmatprep.subr.bf16.mxu0 %v4716
    %4952 = vmatpush1.bf16.msra.mxu0 %v4715
    %4953 = vmatprep.subr.bf16.mxu0 %v4720
    %4954 = vmatpush1.bf16.msra.mxu0 %v4719
    %4955 = vmatprep.subr.bf16.mxu0 %v4724
    %4956 = vmatpush1.bf16.msra.mxu0 %v4723
    %4957 = vmatprep.subr.bf16.mxu0 %v4728
    %4958 = vmatpush1.bf16.msra.mxu0 %v4727
    %4959 = vmatprep.subr.bf16.mxu0 %v4732
    %4960 = vmatpush1.bf16.msra.mxu0 %v4731
    %4961 = vmatprep.subr.bf16.mxu0 %v4736
    %4962 = vmatpush1.bf16.msra.mxu0 %v4735
    %4963 = vmatprep.mubr.bf16.mxu0 %v3392
    %4964 = vmatmul.mubr.bf16.gmra.mrb[0].mxu0 %v3391
    %v4965 = vpop.f32.mrb[0].mxu0
    %v4966 = vadd.f32 0.0, %v4965
    %v4967 = vpop.f32.mrb[0].mxu0
    %v4968 = vadd.f32 0.0, %v4967
    %v4969 = vpop.f32.mrb[0].mxu0
    %v4970 = vadd.f32 0.0, %v4969
    %v4971 = vpop.f32.mrb[0].mxu0
    %v4972 = vadd.f32 0.0, %v4971
    %4973 = vdwg.mxu0
    %4974 = vmatprep.subr.bf16.mxu0 %v4740
    %4975 = vmatpush1.bf16.msra.mxu0 %v4739
    %4976 = vmatprep.subr.bf16.mxu0 %v4744
    %4977 = vmatpush1.bf16.msra.mxu0 %v4743
    %4978 = vmatprep.subr.bf16.mxu0 %v4748
    %4979 = vmatpush1.bf16.msra.mxu0 %v4747
    %4980 = vmatprep.subr.bf16.mxu0 %v4752
    %4981 = vmatpush1.bf16.msra.mxu0 %v4751
    %4982 = vmatprep.subr.bf16.mxu0 %v4756
    %4983 = vmatpush1.bf16.msra.mxu0 %v4755
    %4984 = vmatprep.subr.bf16.mxu0 %v4760
    %4985 = vmatpush1.bf16.msra.mxu0 %v4759
    %4986 = vmatprep.subr.bf16.mxu0 %v4764
    %4987 = vmatpush1.bf16.msra.mxu0 %v4763
    %4988 = vmatprep.subr.bf16.mxu0 %v4768
    %4989 = vmatpush1.bf16.msra.mxu0 %v4767
    %4990 = vmatprep.subr.bf16.mxu0 %v4772
    %4991 = vmatpush1.bf16.msra.mxu0 %v4771
    %4992 = vmatprep.subr.bf16.mxu0 %v4776
    %4993 = vmatpush1.bf16.msra.mxu0 %v4775
    %4994 = vmatprep.subr.bf16.mxu0 %v4780
    %4995 = vmatpush1.bf16.msra.mxu0 %v4779
    %4996 = vmatprep.subr.bf16.mxu0 %v4784
    %4997 = vmatpush1.bf16.msra.mxu0 %v4783
    %4998 = vmatprep.subr.bf16.mxu0 %v4788
    %4999 = vmatpush1.bf16.msra.mxu0 %v4787
    %5000 = vmatprep.subr.bf16.mxu0 %v4792
    %5001 = vmatpush1.bf16.msra.mxu0 %v4791
    %5002 = vmatprep.subr.bf16.mxu0 %v4796
    %5003 = vmatpush1.bf16.msra.mxu0 %v4795
    %5004 = vmatprep.subr.bf16.mxu0 %v4800
    %5005 = vmatpush1.bf16.msra.mxu0 %v4799
    %5006 = vmatprep.mubr.bf16.mxu0 %v3478
    %5007 = vmatmul.mubr.bf16.gmra.mrb[0].mxu0 %v3477
    %v5008 = vpop.f32.mrb[0].mxu0
    %v5009 = vadd.f32 %v4966, %v5008
    %v5010 = vpop.f32.mrb[0].mxu0
    %v5011 = vadd.f32 %v4968, %v5010
    %v5012 = vpop.f32.mrb[0].mxu0
    %v5013 = vadd.f32 %v4970, %v5012
    %v5014 = vpop.f32.mrb[0].mxu0
    %v5015 = vadd.f32 %v4972, %v5014
    %5016 = vdwg.mxu0
    %5017 = vmatprep.subr.bf16.mxu0 %v4678
    %5018 = vmatpush1.bf16.msra.mxu0 %v4677
    %5019 = vmatprep.subr.bf16.mxu0 %v4682
    %5020 = vmatpush1.bf16.msra.mxu0 %v4681
    %5021 = vmatprep.subr.bf16.mxu0 %v4686
    %5022 = vmatpush1.bf16.msra.mxu0 %v4685
    %5023 = vmatprep.subr.bf16.mxu0 %v4690
    %5024 = vmatpush1.bf16.msra.mxu0 %v4689
    %5025 = vmatprep.subr.bf16.mxu0 %v4694
    %5026 = vmatpush1.bf16.msra.mxu0 %v4693
    %5027 = vmatprep.subr.bf16.mxu0 %v4698
    %5028 = vmatpush1.bf16.msra.mxu0 %v4697
    %5029 = vmatprep.subr.bf16.mxu0 %v4702
    %5030 = vmatpush1.bf16.msra.mxu0 %v4701
    %5031 = vmatprep.subr.bf16.mxu0 %v4706
    %5032 = vmatpush1.bf16.msra.mxu0 %v4705
    %5033 = vmatprep.subr.bf16.mxu0 %v4710
    %5034 = vmatpush1.bf16.msra.mxu0 %v4709
    %5035 = vmatprep.subr.bf16.mxu0 %v4714
    %5036 = vmatpush1.bf16.msra.mxu0 %v4713
    %5037 = vmatprep.subr.bf16.mxu0 %v4718
    %5038 = vmatpush1.bf16.msra.mxu0 %v4717
    %5039 = vmatprep.subr.bf16.mxu0 %v4722
    %5040 = vmatpush1.bf16.msra.mxu0 %v4721
    %5041 = vmatprep.subr.bf16.mxu0 %v4726
    %5042 = vmatpush1.bf16.msra.mxu0 %v4725
    %5043 = vmatprep.subr.bf16.mxu0 %v4730
    %5044 = vmatpush1.bf16.msra.mxu0 %v4729
    %5045 = vmatprep.subr.bf16.mxu0 %v4734
    %5046 = vmatpush1.bf16.msra.mxu0 %v4733
    %5047 = vmatprep.subr.bf16.mxu0 %v4738
    %5048 = vmatpush1.bf16.msra.mxu0 %v4737
    %5049 = vmatprep.mubr.bf16.mxu0 %v3392
    %5050 = vmatmul.mubr.bf16.gmra.mrb[0].mxu0 %v3391
    %v5051 = vpop.f32.mrb[0].mxu0
    %v5052 = vadd.f32 0.0, %v5051
    %v5053 = vpop.f32.mrb[0].mxu0
    %v5054 = vadd.f32 0.0, %v5053
    %v5055 = vpop.f32.mrb[0].mxu0
    %v5056 = vadd.f32 0.0, %v5055
    %v5057 = vpop.f32.mrb[0].mxu0
    %v5058 = vadd.f32 0.0, %v5057
    %5059 = vdwg.mxu0
    %5060 = vmatprep.subr.bf16.mxu0 %v4742
    %5061 = vmatpush1.bf16.msra.mxu0 %v4741
    %5062 = vmatprep.subr.bf16.mxu0 %v4746
    %5063 = vmatpush1.bf16.msra.mxu0 %v4745
    %5064 = vmatprep.subr.bf16.mxu0 %v4750
    %5065 = vmatpush1.bf16.msra.mxu0 %v4749
    %5066 = vmatprep.subr.bf16.mxu0 %v4754
    %5067 = vmatpush1.bf16.msra.mxu0 %v4753
    %5068 = vmatprep.subr.bf16.mxu0 %v4758
    %5069 = vmatpush1.bf16.msra.mxu0 %v4757
    %5070 = vmatprep.subr.bf16.mxu0 %v4762
    %5071 = vmatpush1.bf16.msra.mxu0 %v4761
    %5072 = vmatprep.subr.bf16.mxu0 %v4766
    %5073 = vmatpush1.bf16.msra.mxu0 %v4765
    %5074 = vmatprep.subr.bf16.mxu0 %v4770
    %5075 = vmatpush1.bf16.msra.mxu0 %v4769
    %5076 = vmatprep.subr.bf16.mxu0 %v4774
    %5077 = vmatpush1.bf16.msra.mxu0 %v4773
    %5078 = vmatprep.subr.bf16.mxu0 %v4778
    %5079 = vmatpush1.bf16.msra.mxu0 %v4777
    %5080 = vmatprep.subr.bf16.mxu0 %v4782
    %5081 = vmatpush1.bf16.msra.mxu0 %v4781
    %5082 = vmatprep.subr.bf16.mxu0 %v4786
    %5083 = vmatpush1.bf16.msra.mxu0 %v4785
    %5084 = vmatprep.subr.bf16.mxu0 %v4790
    %5085 = vmatpush1.bf16.msra.mxu0 %v4789
    %5086 = vmatprep.subr.bf16.mxu0 %v4794
    %5087 = vmatpush1.bf16.msra.mxu0 %v4793
    %5088 = vmatprep.subr.bf16.mxu0 %v4798
    %5089 = vmatpush1.bf16.msra.mxu0 %v4797
    %5090 = vmatprep.subr.bf16.mxu0 %v4802
    %5091 = vmatpush1.bf16.msra.mxu0 %v4801
    %5092 = vmatprep.mubr.bf16.mxu0 %v3478
    %5093 = vmatmul.mubr.bf16.gmra.mrb[0].mxu0 %v3477
    %v5094 = vpop.f32.mrb[0].mxu0
    %v5095 = vadd.f32 %v5052, %v5094
    %v5096 = vpop.f32.mrb[0].mxu0
    %v5097 = vadd.f32 %v5054, %v5096
    %v5098 = vpop.f32.mrb[0].mxu0
    %v5099 = vadd.f32 %v5056, %v5098
    %v5100 = vpop.f32.mrb[0].mxu0
    %v5101 = vadd.f32 %v5058, %v5100
    %5102 = vdwg.mxu0
    %v5111 = vcombine.low %v4197, %v4199
    %v5112 = vcombine.high %v4197, %v4199
    %v5113 = vcombine.low %v4283, %v4285
    %v5114 = vcombine.high %v4283, %v4285
    %v5116 = vunpack.c.l.s4 1966171168
    %v5117 = vunpack.c.0.s8 %v5116
    %v5118 = vlaneseq
    %v5119 = vshrl.u32 %v5118, 7
    %v5120 = vsub.s32 %v5117, %v5119
    %v5121 = vrot.slane %v5111, %v5120
    %v5123 = vunpack.c.l.s4 1966171168
    %v5124 = vunpack.c.0.s8 %v5123
    %v5125 = vlaneseq
    %v5126 = vshrl.u32 %v5125, 7
    %v5127 = vsub.s32 %v5124, %v5126
    %v5128 = vrot.slane %v5112, %v5127
    %v5130 = vunpack.c.l.s4 1966171168
    %v5131 = vunpack.c.0.s8 %v5130
    %v5132 = vlaneseq
    %v5133 = vshrl.u32 %v5132, 7
    %v5134 = vsub.s32 %v5131, %v5133
    %v5135 = vrot.slane %v5113, %v5134
    %v5137 = vunpack.c.l.s4 1966171168
    %v5138 = vunpack.c.0.s8 %v5137
    %v5139 = vlaneseq
    %v5140 = vshrl.u32 %v5139, 7
    %v5141 = vsub.s32 %v5138, %v5140
    %v5142 = vrot.slane %v5114, %v5141
    %v5143 = vcombine.low %v5121, %v5135
    %v5144 = vcombine.high %v5121, %v5135
    %v5145 = vcombine.low %v5128, %v5142
    %v5146 = vcombine.high %v5128, %v5142
    %v5148 = vunpack.c.l.s4 1966171168
    %v5149 = vunpack.c.0.s8 %v5148
    %v5150 = vlaneseq
    %v5151 = vshrl.u32 %v5150, 7
    %v5152 = vsub.s32 %v5149, %v5151
    %v5153 = vrot.slane %v5143, %v5152
    %v5155 = vunpack.c.l.s4 1966171168
    %v5156 = vunpack.c.0.s8 %v5155
    %v5157 = vlaneseq
    %v5158 = vshrl.u32 %v5157, 7
    %v5159 = vsub.s32 %v5156, %v5158
    %v5160 = vrot.slane %v5145, %v5159
    %v5162 = vunpack.c.l.s4 1966171168
    %v5163 = vunpack.c.0.s8 %v5162
    %v5164 = vlaneseq
    %v5165 = vshrl.u32 %v5164, 7
    %v5166 = vsub.s32 %v5163, %v5165
    %v5167 = vrot.slane %v5144, %v5166
    %v5169 = vunpack.c.l.s4 1966171168
    %v5170 = vunpack.c.0.s8 %v5169
    %v5171 = vlaneseq
    %v5172 = vshrl.u32 %v5171, 7
    %v5173 = vsub.s32 %v5170, %v5172
    %v5174 = vrot.slane %v5146, %v5173
    %v5175 = vcombine.high %v5153, %v5153
    %v5176 = vcombine.high %v5160, %v5160
    %v5177 = vcombine.high %v5167, %v5167
    %v5178 = vcombine.high %v5174, %v5174
    %v5179 = vcombine.low %v4201, %v4203
    %v5180 = vcombine.high %v4201, %v4203
    %v5181 = vcombine.low %v4287, %v4289
    %v5182 = vcombine.high %v4287, %v4289
    %v5184 = vunpack.c.l.s4 1966171168
    %v5185 = vunpack.c.0.s8 %v5184
    %v5186 = vlaneseq
    %v5187 = vshrl.u32 %v5186, 7
    %v5188 = vsub.s32 %v5185, %v5187
    %v5189 = vrot.slane %v5179, %v5188
    %v5191 = vunpack.c.l.s4 1966171168
    %v5192 = vunpack.c.0.s8 %v5191
    %v5193 = vlaneseq
    %v5194 = vshrl.u32 %v5193, 7
    %v5195 = vsub.s32 %v5192, %v5194
    %v5196 = vrot.slane %v5180, %v5195
    %v5198 = vunpack.c.l.s4 1966171168
    %v5199 = vunpack.c.0.s8 %v5198
    %v5200 = vlaneseq
    %v5201 = vshrl.u32 %v5200, 7
    %v5202 = vsub.s32 %v5199, %v5201
    %v5203 = vrot.slane %v5181, %v5202
    %v5205 = vunpack.c.l.s4 1966171168
    %v5206 = vunpack.c.0.s8 %v5205
    %v5207 = vlaneseq
    %v5208 = vshrl.u32 %v5207, 7
    %v5209 = vsub.s32 %v5206, %v5208
    %v5210 = vrot.slane %v5182, %v5209
    %v5211 = vcombine.low %v5189, %v5203
    %v5212 = vcombine.high %v5189, %v5203
    %v5213 = vcombine.low %v5196, %v5210
    %v5214 = vcombine.high %v5196, %v5210
    %v5216 = vunpack.c.l.s4 1966171168
    %v5217 = vunpack.c.0.s8 %v5216
    %v5218 = vlaneseq
    %v5219 = vshrl.u32 %v5218, 7
    %v5220 = vsub.s32 %v5217, %v5219
    %v5221 = vrot.slane %v5211, %v5220
    %v5223 = vunpack.c.l.s4 1966171168
    %v5224 = vunpack.c.0.s8 %v5223
    %v5225 = vlaneseq
    %v5226 = vshrl.u32 %v5225, 7
    %v5227 = vsub.s32 %v5224, %v5226
    %v5228 = vrot.slane %v5213, %v5227
    %v5230 = vunpack.c.l.s4 1966171168
    %v5231 = vunpack.c.0.s8 %v5230
    %v5232 = vlaneseq
    %v5233 = vshrl.u32 %v5232, 7
    %v5234 = vsub.s32 %v5231, %v5233
    %v5235 = vrot.slane %v5212, %v5234
    %v5237 = vunpack.c.l.s4 1966171168
    %v5238 = vunpack.c.0.s8 %v5237
    %v5239 = vlaneseq
    %v5240 = vshrl.u32 %v5239, 7
    %v5241 = vsub.s32 %v5238, %v5240
    %v5242 = vrot.slane %v5214, %v5241
    %v5243 = vcombine.high %v5221, %v5221
    %v5244 = vcombine.high %v5228, %v5228
    %v5245 = vcombine.high %v5235, %v5235
    %v5246 = vcombine.high %v5242, %v5242
    %v5255 = vcombine.low %v5009, %v5011
    %v5256 = vcombine.high %v5009, %v5011
    %v5257 = vcombine.low %v5095, %v5097
    %v5258 = vcombine.high %v5095, %v5097
    %v5260 = vunpack.c.l.s4 1966171168
    %v5261 = vunpack.c.0.s8 %v5260
    %v5262 = vlaneseq
    %v5263 = vshrl.u32 %v5262, 7
    %v5264 = vsub.s32 %v5261, %v5263
    %v5265 = vrot.slane %v5255, %v5264
    %v5267 = vunpack.c.l.s4 1966171168
    %v5268 = vunpack.c.0.s8 %v5267
    %v5269 = vlaneseq
    %v5270 = vshrl.u32 %v5269, 7
    %v5271 = vsub.s32 %v5268, %v5270
    %v5272 = vrot.slane %v5256, %v5271
    %v5274 = vunpack.c.l.s4 1966171168
    %v5275 = vunpack.c.0.s8 %v5274
    %v5276 = vlaneseq
    %v5277 = vshrl.u32 %v5276, 7
    %v5278 = vsub.s32 %v5275, %v5277
    %v5279 = vrot.slane %v5257, %v5278
    %v5281 = vunpack.c.l.s4 1966171168
    %v5282 = vunpack.c.0.s8 %v5281
    %v5283 = vlaneseq
    %v5284 = vshrl.u32 %v5283, 7
    %v5285 = vsub.s32 %v5282, %v5284
    %v5286 = vrot.slane %v5258, %v5285
    %v5287 = vcombine.low %v5265, %v5279
    %v5288 = vcombine.high %v5265, %v5279
    %v5289 = vcombine.low %v5272, %v5286
    %v5290 = vcombine.high %v5272, %v5286
    %v5292 = vunpack.c.l.s4 1966171168
    %v5293 = vunpack.c.0.s8 %v5292
    %v5294 = vlaneseq
    %v5295 = vshrl.u32 %v5294, 7
    %v5296 = vsub.s32 %v5293, %v5295
    %v5297 = vrot.slane %v5287, %v5296
    %v5299 = vunpack.c.l.s4 1966171168
    %v5300 = vunpack.c.0.s8 %v5299
    %v5301 = vlaneseq
    %v5302 = vshrl.u32 %v5301, 7
    %v5303 = vsub.s32 %v5300, %v5302
    %v5304 = vrot.slane %v5289, %v5303
    %v5306 = vunpack.c.l.s4 1966171168
    %v5307 = vunpack.c.0.s8 %v5306
    %v5308 = vlaneseq
    %v5309 = vshrl.u32 %v5308, 7
    %v5310 = vsub.s32 %v5307, %v5309
    %v5311 = vrot.slane %v5288, %v5310
    %v5313 = vunpack.c.l.s4 1966171168
    %v5314 = vunpack.c.0.s8 %v5313
    %v5315 = vlaneseq
    %v5316 = vshrl.u32 %v5315, 7
    %v5317 = vsub.s32 %v5314, %v5316
    %v5318 = vrot.slane %v5290, %v5317
    %v5319 = vcombine.high %v5297, %v5297
    %v5320 = vcombine.high %v5304, %v5304
    %v5321 = vcombine.high %v5311, %v5311
    %v5322 = vcombine.high %v5318, %v5318
    %v5323 = vcombine.low %v5013, %v5015
    %v5324 = vcombine.high %v5013, %v5015
    %v5325 = vcombine.low %v5099, %v5101
    %v5326 = vcombine.high %v5099, %v5101
    %v5328 = vunpack.c.l.s4 1966171168
    %v5329 = vunpack.c.0.s8 %v5328
    %v5330 = vlaneseq
    %v5331 = vshrl.u32 %v5330, 7
    %v5332 = vsub.s32 %v5329, %v5331
    %v5333 = vrot.slane %v5323, %v5332
    %v5335 = vunpack.c.l.s4 1966171168
    %v5336 = vunpack.c.0.s8 %v5335
    %v5337 = vlaneseq
    %v5338 = vshrl.u32 %v5337, 7
    %v5339 = vsub.s32 %v5336, %v5338
    %v5340 = vrot.slane %v5324, %v5339
    %v5342 = vunpack.c.l.s4 1966171168
    %v5343 = vunpack.c.0.s8 %v5342
    %v5344 = vlaneseq
    %v5345 = vshrl.u32 %v5344, 7
    %v5346 = vsub.s32 %v5343, %v5345
    %v5347 = vrot.slane %v5325, %v5346
    %v5349 = vunpack.c.l.s4 1966171168
    %v5350 = vunpack.c.0.s8 %v5349
    %v5351 = vlaneseq
    %v5352 = vshrl.u32 %v5351, 7
    %v5353 = vsub.s32 %v5350, %v5352
    %v5354 = vrot.slane %v5326, %v5353
    %v5355 = vcombine.low %v5333, %v5347
    %v5356 = vcombine.high %v5333, %v5347
    %v5357 = vcombine.low %v5340, %v5354
    %v5358 = vcombine.high %v5340, %v5354
    %v5360 = vunpack.c.l.s4 1966171168
    %v5361 = vunpack.c.0.s8 %v5360
    %v5362 = vlaneseq
    %v5363 = vshrl.u32 %v5362, 7
    %v5364 = vsub.s32 %v5361, %v5363
    %v5365 = vrot.slane %v5355, %v5364
    %v5367 = vunpack.c.l.s4 1966171168
    %v5368 = vunpack.c.0.s8 %v5367
    %v5369 = vlaneseq
    %v5370 = vshrl.u32 %v5369, 7
    %v5371 = vsub.s32 %v5368, %v5370
    %v5372 = vrot.slane %v5357, %v5371
    %v5374 = vunpack.c.l.s4 1966171168
    %v5375 = vunpack.c.0.s8 %v5374
    %v5376 = vlaneseq
    %v5377 = vshrl.u32 %v5376, 7
    %v5378 = vsub.s32 %v5375, %v5377
    %v5379 = vrot.slane %v5356, %v5378
    %v5381 = vunpack.c.l.s4 1966171168
    %v5382 = vunpack.c.0.s8 %v5381
    %v5383 = vlaneseq
    %v5384 = vshrl.u32 %v5383, 7
    %v5385 = vsub.s32 %v5382, %v5384
    %v5386 = vrot.slane %v5358, %v5385
    %v5387 = vcombine.high %v5365, %v5365
    %v5388 = vcombine.high %v5372, %v5372
    %v5389 = vcombine.high %v5379, %v5379
    %v5390 = vcombine.high %v5386, %v5386
    %v5391 = vlaneseq
    %v5392 = vshrl.u32 %v5391, 7
    %v5393 = vsub.s32 0, %v5392
    %v5394 = vrot.slane %v5153, %v5393
    %v5395 = vlaneseq
    %v5396 = vshrl.u32 %v5395, 7
    %v5397 = vsub.s32 1, %v5396
    %v5398 = vrot.slane %v5153, %v5397
    %v5399 = vlaneseq
    %v5400 = vshrl.u32 %v5399, 7
    %v5401 = vsub.s32 2, %v5400
    %v5402 = vrot.slane %v5153, %v5401
    %v5403 = vlaneseq
    %v5404 = vshrl.u32 %v5403, 7
    %v5405 = vsub.s32 3, %v5404
    %v5406 = vrot.slane %v5153, %v5405
    %v5407 = vlaneseq
    %v5408 = vshrl.u32 %v5407, 7
    %v5409 = vsub.s32 0, %v5408
    %v5410 = vrot.slane %v5167, %v5409
    %v5411 = vlaneseq
    %v5412 = vshrl.u32 %v5411, 7
    %v5413 = vsub.s32 1, %v5412
    %v5414 = vrot.slane %v5167, %v5413
    %v5415 = vlaneseq
    %v5416 = vshrl.u32 %v5415, 7
    %v5417 = vsub.s32 2, %v5416
    %v5418 = vrot.slane %v5167, %v5417
    %v5419 = vlaneseq
    %v5420 = vshrl.u32 %v5419, 7
    %v5421 = vsub.s32 3, %v5420
    %v5422 = vrot.slane %v5167, %v5421
    %v5423 = vlaneseq
    %v5424 = vshrl.u32 %v5423, 7
    %v5425 = vsub.s32 0, %v5424
    %v5426 = vrot.slane %v5175, %v5425
    %v5427 = vlaneseq
    %v5428 = vshrl.u32 %v5427, 7
    %v5429 = vsub.s32 1, %v5428
    %v5430 = vrot.slane %v5175, %v5429
    %v5431 = vlaneseq
    %v5432 = vshrl.u32 %v5431, 7
    %v5433 = vsub.s32 2, %v5432
    %v5434 = vrot.slane %v5175, %v5433
    %v5435 = vlaneseq
    %v5436 = vshrl.u32 %v5435, 7
    %v5437 = vsub.s32 3, %v5436
    %v5438 = vrot.slane %v5175, %v5437
    %v5439 = vlaneseq
    %v5440 = vshrl.u32 %v5439, 7
    %v5441 = vsub.s32 0, %v5440
    %v5442 = vrot.slane %v5177, %v5441
    %v5443 = vlaneseq
    %v5444 = vshrl.u32 %v5443, 7
    %v5445 = vsub.s32 1, %v5444
    %v5446 = vrot.slane %v5177, %v5445
    %v5447 = vlaneseq
    %v5448 = vshrl.u32 %v5447, 7
    %v5449 = vsub.s32 2, %v5448
    %v5450 = vrot.slane %v5177, %v5449
    %v5451 = vlaneseq
    %v5452 = vshrl.u32 %v5451, 7
    %v5453 = vsub.s32 3, %v5452
    %v5454 = vrot.slane %v5177, %v5453
    %v5455 = vlaneseq
    %v5456 = vshrl.u32 %v5455, 7
    %v5457 = vsub.s32 0, %v5456
    %v5458 = vrot.slane %v5160, %v5457
    %v5459 = vlaneseq
    %v5460 = vshrl.u32 %v5459, 7
    %v5461 = vsub.s32 1, %v5460
    %v5462 = vrot.slane %v5160, %v5461
    %v5463 = vlaneseq
    %v5464 = vshrl.u32 %v5463, 7
    %v5465 = vsub.s32 2, %v5464
    %v5466 = vrot.slane %v5160, %v5465
    %v5467 = vlaneseq
    %v5468 = vshrl.u32 %v5467, 7
    %v5469 = vsub.s32 3, %v5468
    %v5470 = vrot.slane %v5160, %v5469
    %v5471 = vlaneseq
    %v5472 = vshrl.u32 %v5471, 7
    %v5473 = vsub.s32 0, %v5472
    %v5474 = vrot.slane %v5174, %v5473
    %v5475 = vlaneseq
    %v5476 = vshrl.u32 %v5475, 7
    %v5477 = vsub.s32 1, %v5476
    %v5478 = vrot.slane %v5174, %v5477
    %v5479 = vlaneseq
    %v5480 = vshrl.u32 %v5479, 7
    %v5481 = vsub.s32 2, %v5480
    %v5482 = vrot.slane %v5174, %v5481
    %v5483 = vlaneseq
    %v5484 = vshrl.u32 %v5483, 7
    %v5485 = vsub.s32 3, %v5484
    %v5486 = vrot.slane %v5174, %v5485
    %v5487 = vlaneseq
    %v5488 = vshrl.u32 %v5487, 7
    %v5489 = vsub.s32 0, %v5488
    %v5490 = vrot.slane %v5176, %v5489
    %v5491 = vlaneseq
    %v5492 = vshrl.u32 %v5491, 7
    %v5493 = vsub.s32 1, %v5492
    %v5494 = vrot.slane %v5176, %v5493
    %v5495 = vlaneseq
    %v5496 = vshrl.u32 %v5495, 7
    %v5497 = vsub.s32 2, %v5496
    %v5498 = vrot.slane %v5176, %v5497
    %v5499 = vlaneseq
    %v5500 = vshrl.u32 %v5499, 7
    %v5501 = vsub.s32 3, %v5500
    %v5502 = vrot.slane %v5176, %v5501
    %v5503 = vlaneseq
    %v5504 = vshrl.u32 %v5503, 7
    %v5505 = vsub.s32 0, %v5504
    %v5506 = vrot.slane %v5178, %v5505
    %v5507 = vlaneseq
    %v5508 = vshrl.u32 %v5507, 7
    %v5509 = vsub.s32 1, %v5508
    %v5510 = vrot.slane %v5178, %v5509
    %v5511 = vlaneseq
    %v5512 = vshrl.u32 %v5511, 7
    %v5513 = vsub.s32 2, %v5512
    %v5514 = vrot.slane %v5178, %v5513
    %v5515 = vlaneseq
    %v5516 = vshrl.u32 %v5515, 7
    %v5517 = vsub.s32 3, %v5516
    %v5518 = vrot.slane %v5178, %v5517
    %v5519 = vlaneseq
    %v5520 = vshrl.u32 %v5519, 7
    %v5521 = vsub.s32 0, %v5520
    %v5522 = vrot.slane %v5221, %v5521
    %v5523 = vlaneseq
    %v5524 = vshrl.u32 %v5523, 7
    %v5525 = vsub.s32 1, %v5524
    %v5526 = vrot.slane %v5221, %v5525
    %v5527 = vlaneseq
    %v5528 = vshrl.u32 %v5527, 7
    %v5529 = vsub.s32 2, %v5528
    %v5530 = vrot.slane %v5221, %v5529
    %v5531 = vlaneseq
    %v5532 = vshrl.u32 %v5531, 7
    %v5533 = vsub.s32 3, %v5532
    %v5534 = vrot.slane %v5221, %v5533
    %v5535 = vlaneseq
    %v5536 = vshrl.u32 %v5535, 7
    %v5537 = vsub.s32 0, %v5536
    %v5538 = vrot.slane %v5235, %v5537
    %v5539 = vlaneseq
    %v5540 = vshrl.u32 %v5539, 7
    %v5541 = vsub.s32 1, %v5540
    %v5542 = vrot.slane %v5235, %v5541
    %v5543 = vlaneseq
    %v5544 = vshrl.u32 %v5543, 7
    %v5545 = vsub.s32 2, %v5544
    %v5546 = vrot.slane %v5235, %v5545
    %v5547 = vlaneseq
    %v5548 = vshrl.u32 %v5547, 7
    %v5549 = vsub.s32 3, %v5548
    %v5550 = vrot.slane %v5235, %v5549
    %v5551 = vlaneseq
    %v5552 = vshrl.u32 %v5551, 7
    %v5553 = vsub.s32 0, %v5552
    %v5554 = vrot.slane %v5243, %v5553
    %v5555 = vlaneseq
    %v5556 = vshrl.u32 %v5555, 7
    %v5557 = vsub.s32 1, %v5556
    %v5558 = vrot.slane %v5243, %v5557
    %v5559 = vlaneseq
    %v5560 = vshrl.u32 %v5559, 7
    %v5561 = vsub.s32 2, %v5560
    %v5562 = vrot.slane %v5243, %v5561
    %v5563 = vlaneseq
    %v5564 = vshrl.u32 %v5563, 7
    %v5565 = vsub.s32 3, %v5564
    %v5566 = vrot.slane %v5243, %v5565
    %v5567 = vlaneseq
    %v5568 = vshrl.u32 %v5567, 7
    %v5569 = vsub.s32 0, %v5568
    %v5570 = vrot.slane %v5245, %v5569
    %v5571 = vlaneseq
    %v5572 = vshrl.u32 %v5571, 7
    %v5573 = vsub.s32 1, %v5572
    %v5574 = vrot.slane %v5245, %v5573
    %v5575 = vlaneseq
    %v5576 = vshrl.u32 %v5575, 7
    %v5577 = vsub.s32 2, %v5576
    %v5578 = vrot.slane %v5245, %v5577
    %v5579 = vlaneseq
    %v5580 = vshrl.u32 %v5579, 7
    %v5581 = vsub.s32 3, %v5580
    %v5582 = vrot.slane %v5245, %v5581
    %v5583 = vlaneseq
    %v5584 = vshrl.u32 %v5583, 7
    %v5585 = vsub.s32 0, %v5584
    %v5586 = vrot.slane %v5228, %v5585
    %v5587 = vlaneseq
    %v5588 = vshrl.u32 %v5587, 7
    %v5589 = vsub.s32 1, %v5588
    %v5590 = vrot.slane %v5228, %v5589
    %v5591 = vlaneseq
    %v5592 = vshrl.u32 %v5591, 7
    %v5593 = vsub.s32 2, %v5592
    %v5594 = vrot.slane %v5228, %v5593
    %v5595 = vlaneseq
    %v5596 = vshrl.u32 %v5595, 7
    %v5597 = vsub.s32 3, %v5596
    %v5598 = vrot.slane %v5228, %v5597
    %v5599 = vlaneseq
    %v5600 = vshrl.u32 %v5599, 7
    %v5601 = vsub.s32 0, %v5600
    %v5602 = vrot.slane %v5242, %v5601
    %v5603 = vlaneseq
    %v5604 = vshrl.u32 %v5603, 7
    %v5605 = vsub.s32 1, %v5604
    %v5606 = vrot.slane %v5242, %v5605
    %v5607 = vlaneseq
    %v5608 = vshrl.u32 %v5607, 7
    %v5609 = vsub.s32 2, %v5608
    %v5610 = vrot.slane %v5242, %v5609
    %v5611 = vlaneseq
    %v5612 = vshrl.u32 %v5611, 7
    %v5613 = vsub.s32 3, %v5612
    %v5614 = vrot.slane %v5242, %v5613
    %v5615 = vlaneseq
    %v5616 = vshrl.u32 %v5615, 7
    %v5617 = vsub.s32 0, %v5616
    %v5618 = vrot.slane %v5244, %v5617
    %v5619 = vlaneseq
    %v5620 = vshrl.u32 %v5619, 7
    %v5621 = vsub.s32 1, %v5620
    %v5622 = vrot.slane %v5244, %v5621
    %v5623 = vlaneseq
    %v5624 = vshrl.u32 %v5623, 7
    %v5625 = vsub.s32 2, %v5624
    %v5626 = vrot.slane %v5244, %v5625
    %v5627 = vlaneseq
    %v5628 = vshrl.u32 %v5627, 7
    %v5629 = vsub.s32 3, %v5628
    %v5630 = vrot.slane %v5244, %v5629
    %v5631 = vlaneseq
    %v5632 = vshrl.u32 %v5631, 7
    %v5633 = vsub.s32 0, %v5632
    %v5634 = vrot.slane %v5246, %v5633
    %v5635 = vlaneseq
    %v5636 = vshrl.u32 %v5635, 7
    %v5637 = vsub.s32 1, %v5636
    %v5638 = vrot.slane %v5246, %v5637
    %v5639 = vlaneseq
    %v5640 = vshrl.u32 %v5639, 7
    %v5641 = vsub.s32 2, %v5640
    %v5642 = vrot.slane %v5246, %v5641
    %v5643 = vlaneseq
    %v5644 = vshrl.u32 %v5643, 7
    %v5645 = vsub.s32 3, %v5644
    %v5646 = vrot.slane %v5246, %v5645
    %v5711 = vlaneseq
    %v5712 = vshrl.u32 %v5711, 7
    %v5713 = vsub.s32 0, %v5712
    %v5714 = vrot.slane %v5297, %v5713
    %v5715 = vlaneseq
    %v5716 = vshrl.u32 %v5715, 7
    %v5717 = vsub.s32 1, %v5716
    %v5718 = vrot.slane %v5297, %v5717
    %v5719 = vlaneseq
    %v5720 = vshrl.u32 %v5719, 7
    %v5721 = vsub.s32 2, %v5720
    %v5722 = vrot.slane %v5297, %v5721
    %v5723 = vlaneseq
    %v5724 = vshrl.u32 %v5723, 7
    %v5725 = vsub.s32 3, %v5724
    %v5726 = vrot.slane %v5297, %v5725
    %v5727 = vlaneseq
    %v5728 = vshrl.u32 %v5727, 7
    %v5729 = vsub.s32 0, %v5728
    %v5730 = vrot.slane %v5311, %v5729
    %v5731 = vlaneseq
    %v5732 = vshrl.u32 %v5731, 7
    %v5733 = vsub.s32 1, %v5732
    %v5734 = vrot.slane %v5311, %v5733
    %v5735 = vlaneseq
    %v5736 = vshrl.u32 %v5735, 7
    %v5737 = vsub.s32 2, %v5736
    %v5738 = vrot.slane %v5311, %v5737
    %v5739 = vlaneseq
    %v5740 = vshrl.u32 %v5739, 7
    %v5741 = vsub.s32 3, %v5740
    %v5742 = vrot.slane %v5311, %v5741
    %v5743 = vlaneseq
    %v5744 = vshrl.u32 %v5743, 7
    %v5745 = vsub.s32 0, %v5744
    %v5746 = vrot.slane %v5319, %v5745
    %v5747 = vlaneseq
    %v5748 = vshrl.u32 %v5747, 7
    %v5749 = vsub.s32 1, %v5748
    %v5750 = vrot.slane %v5319, %v5749
    %v5751 = vlaneseq
    %v5752 = vshrl.u32 %v5751, 7
    %v5753 = vsub.s32 2, %v5752
    %v5754 = vrot.slane %v5319, %v5753
    %v5755 = vlaneseq
    %v5756 = vshrl.u32 %v5755, 7
    %v5757 = vsub.s32 3, %v5756
    %v5758 = vrot.slane %v5319, %v5757
    %v5759 = vlaneseq
    %v5760 = vshrl.u32 %v5759, 7
    %v5761 = vsub.s32 0, %v5760
    %v5762 = vrot.slane %v5321, %v5761
    %v5763 = vlaneseq
    %v5764 = vshrl.u32 %v5763, 7
    %v5765 = vsub.s32 1, %v5764
    %v5766 = vrot.slane %v5321, %v5765
    %v5767 = vlaneseq
    %v5768 = vshrl.u32 %v5767, 7
    %v5769 = vsub.s32 2, %v5768
    %v5770 = vrot.slane %v5321, %v5769
    %v5771 = vlaneseq
    %v5772 = vshrl.u32 %v5771, 7
    %v5773 = vsub.s32 3, %v5772
    %v5774 = vrot.slane %v5321, %v5773
    %v5775 = vlaneseq
    %v5776 = vshrl.u32 %v5775, 7
    %v5777 = vsub.s32 0, %v5776
    %v5778 = vrot.slane %v5304, %v5777
    %v5779 = vlaneseq
    %v5780 = vshrl.u32 %v5779, 7
    %v5781 = vsub.s32 1, %v5780
    %v5782 = vrot.slane %v5304, %v5781
    %v5783 = vlaneseq
    %v5784 = vshrl.u32 %v5783, 7
    %v5785 = vsub.s32 2, %v5784
    %v5786 = vrot.slane %v5304, %v5785
    %v5787 = vlaneseq
    %v5788 = vshrl.u32 %v5787, 7
    %v5789 = vsub.s32 3, %v5788
    %v5790 = vrot.slane %v5304, %v5789
    %v5791 = vlaneseq
    %v5792 = vshrl.u32 %v5791, 7
    %v5793 = vsub.s32 0, %v5792
    %v5794 = vrot.slane %v5318, %v5793
    %v5795 = vlaneseq
    %v5796 = vshrl.u32 %v5795, 7
    %v5797 = vsub.s32 1, %v5796
    %v5798 = vrot.slane %v5318, %v5797
    %v5799 = vlaneseq
    %v5800 = vshrl.u32 %v5799, 7
    %v5801 = vsub.s32 2, %v5800
    %v5802 = vrot.slane %v5318, %v5801
    %v5803 = vlaneseq
    %v5804 = vshrl.u32 %v5803, 7
    %v5805 = vsub.s32 3, %v5804
    %v5806 = vrot.slane %v5318, %v5805
    %v5807 = vlaneseq
    %v5808 = vshrl.u32 %v5807, 7
    %v5809 = vsub.s32 0, %v5808
    %v5810 = vrot.slane %v5320, %v5809
    %v5811 = vlaneseq
    %v5812 = vshrl.u32 %v5811, 7
    %v5813 = vsub.s32 1, %v5812
    %v5814 = vrot.slane %v5320, %v5813
    %v5815 = vlaneseq
    %v5816 = vshrl.u32 %v5815, 7
    %v5817 = vsub.s32 2, %v5816
    %v5818 = vrot.slane %v5320, %v5817
    %v5819 = vlaneseq
    %v5820 = vshrl.u32 %v5819, 7
    %v5821 = vsub.s32 3, %v5820
    %v5822 = vrot.slane %v5320, %v5821
    %v5823 = vlaneseq
    %v5824 = vshrl.u32 %v5823, 7
    %v5825 = vsub.s32 0, %v5824
    %v5826 = vrot.slane %v5322, %v5825
    %v5827 = vlaneseq
    %v5828 = vshrl.u32 %v5827, 7
    %v5829 = vsub.s32 1, %v5828
    %v5830 = vrot.slane %v5322, %v5829
    %v5831 = vlaneseq
    %v5832 = vshrl.u32 %v5831, 7
    %v5833 = vsub.s32 2, %v5832
    %v5834 = vrot.slane %v5322, %v5833
    %v5835 = vlaneseq
    %v5836 = vshrl.u32 %v5835, 7
    %v5837 = vsub.s32 3, %v5836
    %v5838 = vrot.slane %v5322, %v5837
    %v5839 = vlaneseq
    %v5840 = vshrl.u32 %v5839, 7
    %v5841 = vsub.s32 0, %v5840
    %v5842 = vrot.slane %v5365, %v5841
    %v5843 = vlaneseq
    %v5844 = vshrl.u32 %v5843, 7
    %v5845 = vsub.s32 1, %v5844
    %v5846 = vrot.slane %v5365, %v5845
    %v5847 = vlaneseq
    %v5848 = vshrl.u32 %v5847, 7
    %v5849 = vsub.s32 2, %v5848
    %v5850 = vrot.slane %v5365, %v5849
    %v5851 = vlaneseq
    %v5852 = vshrl.u32 %v5851, 7
    %v5853 = vsub.s32 3, %v5852
    %v5854 = vrot.slane %v5365, %v5853
    %v5855 = vlaneseq
    %v5856 = vshrl.u32 %v5855, 7
    %v5857 = vsub.s32 0, %v5856
    %v5858 = vrot.slane %v5379, %v5857
    %v5859 = vlaneseq
    %v5860 = vshrl.u32 %v5859, 7
    %v5861 = vsub.s32 1, %v5860
    %v5862 = vrot.slane %v5379, %v5861
    %v5863 = vlaneseq
    %v5864 = vshrl.u32 %v5863, 7
    %v5865 = vsub.s32 2, %v5864
    %v5866 = vrot.slane %v5379, %v5865
    %v5867 = vlaneseq
    %v5868 = vshrl.u32 %v5867, 7
    %v5869 = vsub.s32 3, %v5868
    %v5870 = vrot.slane %v5379, %v5869
    %v5871 = vlaneseq
    %v5872 = vshrl.u32 %v5871, 7
    %v5873 = vsub.s32 0, %v5872
    %v5874 = vrot.slane %v5387, %v5873
    %v5875 = vlaneseq
    %v5876 = vshrl.u32 %v5875, 7
    %v5877 = vsub.s32 1, %v5876
    %v5878 = vrot.slane %v5387, %v5877
    %v5879 = vlaneseq
    %v5880 = vshrl.u32 %v5879, 7
    %v5881 = vsub.s32 2, %v5880
    %v5882 = vrot.slane %v5387, %v5881
    %v5883 = vlaneseq
    %v5884 = vshrl.u32 %v5883, 7
    %v5885 = vsub.s32 3, %v5884
    %v5886 = vrot.slane %v5387, %v5885
    %v5887 = vlaneseq
    %v5888 = vshrl.u32 %v5887, 7
    %v5889 = vsub.s32 0, %v5888
    %v5890 = vrot.slane %v5389, %v5889
    %v5891 = vlaneseq
    %v5892 = vshrl.u32 %v5891, 7
    %v5893 = vsub.s32 1, %v5892
    %v5894 = vrot.slane %v5389, %v5893
    %v5895 = vlaneseq
    %v5896 = vshrl.u32 %v5895, 7
    %v5897 = vsub.s32 2, %v5896
    %v5898 = vrot.slane %v5389, %v5897
    %v5899 = vlaneseq
    %v5900 = vshrl.u32 %v5899, 7
    %v5901 = vsub.s32 3, %v5900
    %v5902 = vrot.slane %v5389, %v5901
    %v5903 = vlaneseq
    %v5904 = vshrl.u32 %v5903, 7
    %v5905 = vsub.s32 0, %v5904
    %v5906 = vrot.slane %v5372, %v5905
    %v5907 = vlaneseq
    %v5908 = vshrl.u32 %v5907, 7
    %v5909 = vsub.s32 1, %v5908
    %v5910 = vrot.slane %v5372, %v5909
    %v5911 = vlaneseq
    %v5912 = vshrl.u32 %v5911, 7
    %v5913 = vsub.s32 2, %v5912
    %v5914 = vrot.slane %v5372, %v5913
    %v5915 = vlaneseq
    %v5916 = vshrl.u32 %v5915, 7
    %v5917 = vsub.s32 3, %v5916
    %v5918 = vrot.slane %v5372, %v5917
    %v5919 = vlaneseq
    %v5920 = vshrl.u32 %v5919, 7
    %v5921 = vsub.s32 0, %v5920
    %v5922 = vrot.slane %v5386, %v5921
    %v5923 = vlaneseq
    %v5924 = vshrl.u32 %v5923, 7
    %v5925 = vsub.s32 1, %v5924
    %v5926 = vrot.slane %v5386, %v5925
    %v5927 = vlaneseq
    %v5928 = vshrl.u32 %v5927, 7
    %v5929 = vsub.s32 2, %v5928
    %v5930 = vrot.slane %v5386, %v5929
    %v5931 = vlaneseq
    %v5932 = vshrl.u32 %v5931, 7
    %v5933 = vsub.s32 3, %v5932
    %v5934 = vrot.slane %v5386, %v5933
    %v5935 = vlaneseq
    %v5936 = vshrl.u32 %v5935, 7
    %v5937 = vsub.s32 0, %v5936
    %v5938 = vrot.slane %v5388, %v5937
    %v5939 = vlaneseq
    %v5940 = vshrl.u32 %v5939, 7
    %v5941 = vsub.s32 1, %v5940
    %v5942 = vrot.slane %v5388, %v5941
    %v5943 = vlaneseq
    %v5944 = vshrl.u32 %v5943, 7
    %v5945 = vsub.s32 2, %v5944
    %v5946 = vrot.slane %v5388, %v5945
    %v5947 = vlaneseq
    %v5948 = vshrl.u32 %v5947, 7
    %v5949 = vsub.s32 3, %v5948
    %v5950 = vrot.slane %v5388, %v5949
    %v5951 = vlaneseq
    %v5952 = vshrl.u32 %v5951, 7
    %v5953 = vsub.s32 0, %v5952
    %v5954 = vrot.slane %v5390, %v5953
    %v5955 = vlaneseq
    %v5956 = vshrl.u32 %v5955, 7
    %v5957 = vsub.s32 1, %v5956
    %v5958 = vrot.slane %v5390, %v5957
    %v5959 = vlaneseq
    %v5960 = vshrl.u32 %v5959, 7
    %v5961 = vsub.s32 2, %v5960
    %v5962 = vrot.slane %v5390, %v5961
    %v5963 = vlaneseq
    %v5964 = vshrl.u32 %v5963, 7
    %v5965 = vsub.s32 3, %v5964
    %v5966 = vrot.slane %v5390, %v5965
    %v6031 = vsel %vm2002, %v5394, %v5714
    %v6032 = vsel %vm2002, %v5398, %v5718
    %v6033 = vsel %vm2002, %v5402, %v5722
    %v6034 = vsel %vm2002, %v5406, %v5726
    %v6035 = vsel %vm2002, %v5410, %v5730
    %v6036 = vsel %vm2002, %v5414, %v5734
    %v6037 = vsel %vm2002, %v5418, %v5738
    %v6038 = vsel %vm2002, %v5422, %v5742
    %v6039 = vsel %vm2002, %v5426, %v5746
    %v6040 = vsel %vm2002, %v5430, %v5750
    %v6041 = vsel %vm2002, %v5434, %v5754
    %v6042 = vsel %vm2002, %v5438, %v5758
    %v6043 = vsel %vm2002, %v5442, %v5762
    %v6044 = vsel %vm2002, %v5446, %v5766
    %v6045 = vsel %vm2002, %v5450, %v5770
    %v6046 = vsel %vm2002, %v5454, %v5774
    %v6047 = vsel %vm2002, %v5458, %v5778
    %v6048 = vsel %vm2002, %v5462, %v5782
    %v6049 = vsel %vm2002, %v5466, %v5786
    %v6050 = vsel %vm2002, %v5470, %v5790
    %v6051 = vsel %vm2002, %v5474, %v5794
    %v6052 = vsel %vm2002, %v5478, %v5798
    %v6053 = vsel %vm2002, %v5482, %v5802
    %v6054 = vsel %vm2002, %v5486, %v5806
    %v6055 = vsel %vm2002, %v5490, %v5810
    %v6056 = vsel %vm2002, %v5494, %v5814
    %v6057 = vsel %vm2002, %v5498, %v5818
    %v6058 = vsel %vm2002, %v5502, %v5822
    %v6059 = vsel %vm2002, %v5506, %v5826
    %v6060 = vsel %vm2002, %v5510, %v5830
    %v6061 = vsel %vm2002, %v5514, %v5834
    %v6062 = vsel %vm2002, %v5518, %v5838
    %v6063 = vsel %vm2002, %v5522, %v5842
    %v6064 = vsel %vm2002, %v5526, %v5846
    %v6065 = vsel %vm2002, %v5530, %v5850
    %v6066 = vsel %vm2002, %v5534, %v5854
    %v6067 = vsel %vm2002, %v5538, %v5858
    %v6068 = vsel %vm2002, %v5542, %v5862
    %v6069 = vsel %vm2002, %v5546, %v5866
    %v6070 = vsel %vm2002, %v5550, %v5870
    %v6071 = vsel %vm2002, %v5554, %v5874
    %v6072 = vsel %vm2002, %v5558, %v5878
    %v6073 = vsel %vm2002, %v5562, %v5882
    %v6074 = vsel %vm2002, %v5566, %v5886
    %v6075 = vsel %vm2002, %v5570, %v5890
    %v6076 = vsel %vm2002, %v5574, %v5894
    %v6077 = vsel %vm2002, %v5578, %v5898
    %v6078 = vsel %vm2002, %v5582, %v5902
    %v6079 = vsel %vm2002, %v5586, %v5906
    %v6080 = vsel %vm2002, %v5590, %v5910
    %v6081 = vsel %vm2002, %v5594, %v5914
    %v6082 = vsel %vm2002, %v5598, %v5918
    %v6083 = vsel %vm2002, %v5602, %v5922
    %v6084 = vsel %vm2002, %v5606, %v5926
    %v6085 = vsel %vm2002, %v5610, %v5930
    %v6086 = vsel %vm2002, %v5614, %v5934
    %v6087 = vsel %vm2002, %v5618, %v5938
    %v6088 = vsel %vm2002, %v5622, %v5942
    %v6089 = vsel %vm2002, %v5626, %v5946
    %v6090 = vsel %vm2002, %v5630, %v5950
    %v6091 = vsel %vm2002, %v5634, %v5954
    %v6092 = vsel %vm2002, %v5638, %v5958
    %v6093 = vsel %vm2002, %v5642, %v5962
    %v6094 = vsel %vm2002, %v5646, %v5966
    %v6159 = vcombine.low %v6031, %v6032
    %v6160 = vcombine.low %v6033, %v6034
    %v6162 = vunpack.c.l.s4 1983009808
    %v6163 = vunpack.c.0.s8 %v6162
    %v6164 = vlaneseq
    %v6165 = vshrl.u32 %v6164, 7
    %v6166 = vsub.s32 %v6163, %v6165
    %v6167 = vrot.slane %v6159, %v6166
    %v6169 = vunpack.c.l.s4 1983009808
    %v6170 = vunpack.c.0.s8 %v6169
    %v6171 = vlaneseq
    %v6172 = vshrl.u32 %v6171, 7
    %v6173 = vsub.s32 %v6170, %v6172
    %v6174 = vrot.slane %v6160, %v6173
    %v6175 = vcombine.low %v6167, %v6174
    %v6176 = vcombine.low %v6035, %v6036
    %v6177 = vcombine.low %v6037, %v6038
    %v6179 = vunpack.c.l.s4 1983009808
    %v6180 = vunpack.c.0.s8 %v6179
    %v6181 = vlaneseq
    %v6182 = vshrl.u32 %v6181, 7
    %v6183 = vsub.s32 %v6180, %v6182
    %v6184 = vrot.slane %v6176, %v6183
    %v6186 = vunpack.c.l.s4 1983009808
    %v6187 = vunpack.c.0.s8 %v6186
    %v6188 = vlaneseq
    %v6189 = vshrl.u32 %v6188, 7
    %v6190 = vsub.s32 %v6187, %v6189
    %v6191 = vrot.slane %v6177, %v6190
    %v6192 = vcombine.low %v6184, %v6191
    %v6193 = vcombine.low %v6039, %v6040
    %v6194 = vcombine.low %v6041, %v6042
    %v6196 = vunpack.c.l.s4 1983009808
    %v6197 = vunpack.c.0.s8 %v6196
    %v6198 = vlaneseq
    %v6199 = vshrl.u32 %v6198, 7
    %v6200 = vsub.s32 %v6197, %v6199
    %v6201 = vrot.slane %v6193, %v6200
    %v6203 = vunpack.c.l.s4 1983009808
    %v6204 = vunpack.c.0.s8 %v6203
    %v6205 = vlaneseq
    %v6206 = vshrl.u32 %v6205, 7
    %v6207 = vsub.s32 %v6204, %v6206
    %v6208 = vrot.slane %v6194, %v6207
    %v6209 = vcombine.low %v6201, %v6208
    %v6210 = vcombine.low %v6043, %v6044
    %v6211 = vcombine.low %v6045, %v6046
    %v6213 = vunpack.c.l.s4 1983009808
    %v6214 = vunpack.c.0.s8 %v6213
    %v6215 = vlaneseq
    %v6216 = vshrl.u32 %v6215, 7
    %v6217 = vsub.s32 %v6214, %v6216
    %v6218 = vrot.slane %v6210, %v6217
    %v6220 = vunpack.c.l.s4 1983009808
    %v6221 = vunpack.c.0.s8 %v6220
    %v6222 = vlaneseq
    %v6223 = vshrl.u32 %v6222, 7
    %v6224 = vsub.s32 %v6221, %v6223
    %v6225 = vrot.slane %v6211, %v6224
    %v6226 = vcombine.low %v6218, %v6225
    %v6227 = vcombine.low %v6047, %v6048
    %v6228 = vcombine.low %v6049, %v6050
    %v6230 = vunpack.c.l.s4 1983009808
    %v6231 = vunpack.c.0.s8 %v6230
    %v6232 = vlaneseq
    %v6233 = vshrl.u32 %v6232, 7
    %v6234 = vsub.s32 %v6231, %v6233
    %v6235 = vrot.slane %v6227, %v6234
    %v6237 = vunpack.c.l.s4 1983009808
    %v6238 = vunpack.c.0.s8 %v6237
    %v6239 = vlaneseq
    %v6240 = vshrl.u32 %v6239, 7
    %v6241 = vsub.s32 %v6238, %v6240
    %v6242 = vrot.slane %v6228, %v6241
    %v6243 = vcombine.low %v6235, %v6242
    %v6244 = vcombine.low %v6051, %v6052
    %v6245 = vcombine.low %v6053, %v6054
    %v6247 = vunpack.c.l.s4 1983009808
    %v6248 = vunpack.c.0.s8 %v6247
    %v6249 = vlaneseq
    %v6250 = vshrl.u32 %v6249, 7
    %v6251 = vsub.s32 %v6248, %v6250
    %v6252 = vrot.slane %v6244, %v6251
    %v6254 = vunpack.c.l.s4 1983009808
    %v6255 = vunpack.c.0.s8 %v6254
    %v6256 = vlaneseq
    %v6257 = vshrl.u32 %v6256, 7
    %v6258 = vsub.s32 %v6255, %v6257
    %v6259 = vrot.slane %v6245, %v6258
    %v6260 = vcombine.low %v6252, %v6259
    %v6261 = vcombine.low %v6055, %v6056
    %v6262 = vcombine.low %v6057, %v6058
    %v6264 = vunpack.c.l.s4 1983009808
    %v6265 = vunpack.c.0.s8 %v6264
    %v6266 = vlaneseq
    %v6267 = vshrl.u32 %v6266, 7
    %v6268 = vsub.s32 %v6265, %v6267
    %v6269 = vrot.slane %v6261, %v6268
    %v6271 = vunpack.c.l.s4 1983009808
    %v6272 = vunpack.c.0.s8 %v6271
    %v6273 = vlaneseq
    %v6274 = vshrl.u32 %v6273, 7
    %v6275 = vsub.s32 %v6272, %v6274
    %v6276 = vrot.slane %v6262, %v6275
    %v6277 = vcombine.low %v6269, %v6276
    %v6278 = vcombine.low %v6059, %v6060
    %v6279 = vcombine.low %v6061, %v6062
    %v6281 = vunpack.c.l.s4 1983009808
    %v6282 = vunpack.c.0.s8 %v6281
    %v6283 = vlaneseq
    %v6284 = vshrl.u32 %v6283, 7
    %v6285 = vsub.s32 %v6282, %v6284
    %v6286 = vrot.slane %v6278, %v6285
    %v6288 = vunpack.c.l.s4 1983009808
    %v6289 = vunpack.c.0.s8 %v6288
    %v6290 = vlaneseq
    %v6291 = vshrl.u32 %v6290, 7
    %v6292 = vsub.s32 %v6289, %v6291
    %v6293 = vrot.slane %v6279, %v6292
    %v6294 = vcombine.low %v6286, %v6293
    %v6295 = vcombine.low %v6063, %v6064
    %v6296 = vcombine.low %v6065, %v6066
    %v6298 = vunpack.c.l.s4 1983009808
    %v6299 = vunpack.c.0.s8 %v6298
    %v6300 = vlaneseq
    %v6301 = vshrl.u32 %v6300, 7
    %v6302 = vsub.s32 %v6299, %v6301
    %v6303 = vrot.slane %v6295, %v6302
    %v6305 = vunpack.c.l.s4 1983009808
    %v6306 = vunpack.c.0.s8 %v6305
    %v6307 = vlaneseq
    %v6308 = vshrl.u32 %v6307, 7
    %v6309 = vsub.s32 %v6306, %v6308
    %v6310 = vrot.slane %v6296, %v6309
    %v6311 = vcombine.low %v6303, %v6310
    %v6312 = vcombine.low %v6067, %v6068
    %v6313 = vcombine.low %v6069, %v6070
    %v6315 = vunpack.c.l.s4 1983009808
    %v6316 = vunpack.c.0.s8 %v6315
    %v6317 = vlaneseq
    %v6318 = vshrl.u32 %v6317, 7
    %v6319 = vsub.s32 %v6316, %v6318
    %v6320 = vrot.slane %v6312, %v6319
    %v6322 = vunpack.c.l.s4 1983009808
    %v6323 = vunpack.c.0.s8 %v6322
    %v6324 = vlaneseq
    %v6325 = vshrl.u32 %v6324, 7
    %v6326 = vsub.s32 %v6323, %v6325
    %v6327 = vrot.slane %v6313, %v6326
    %v6328 = vcombine.low %v6320, %v6327
    %v6329 = vcombine.low %v6071, %v6072
    %v6330 = vcombine.low %v6073, %v6074
    %v6332 = vunpack.c.l.s4 1983009808
    %v6333 = vunpack.c.0.s8 %v6332
    %v6334 = vlaneseq
    %v6335 = vshrl.u32 %v6334, 7
    %v6336 = vsub.s32 %v6333, %v6335
    %v6337 = vrot.slane %v6329, %v6336
    %v6339 = vunpack.c.l.s4 1983009808
    %v6340 = vunpack.c.0.s8 %v6339
    %v6341 = vlaneseq
    %v6342 = vshrl.u32 %v6341, 7
    %v6343 = vsub.s32 %v6340, %v6342
    %v6344 = vrot.slane %v6330, %v6343
    %v6345 = vcombine.low %v6337, %v6344
    %v6346 = vcombine.low %v6075, %v6076
    %v6347 = vcombine.low %v6077, %v6078
    %v6349 = vunpack.c.l.s4 1983009808
    %v6350 = vunpack.c.0.s8 %v6349
    %v6351 = vlaneseq
    %v6352 = vshrl.u32 %v6351, 7
    %v6353 = vsub.s32 %v6350, %v6352
    %v6354 = vrot.slane %v6346, %v6353
    %v6356 = vunpack.c.l.s4 1983009808
    %v6357 = vunpack.c.0.s8 %v6356
    %v6358 = vlaneseq
    %v6359 = vshrl.u32 %v6358, 7
    %v6360 = vsub.s32 %v6357, %v6359
    %v6361 = vrot.slane %v6347, %v6360
    %v6362 = vcombine.low %v6354, %v6361
    %v6363 = vcombine.low %v6079, %v6080
    %v6364 = vcombine.low %v6081, %v6082
    %v6366 = vunpack.c.l.s4 1983009808
    %v6367 = vunpack.c.0.s8 %v6366
    %v6368 = vlaneseq
    %v6369 = vshrl.u32 %v6368, 7
    %v6370 = vsub.s32 %v6367, %v6369
    %v6371 = vrot.slane %v6363, %v6370
    %v6373 = vunpack.c.l.s4 1983009808
    %v6374 = vunpack.c.0.s8 %v6373
    %v6375 = vlaneseq
    %v6376 = vshrl.u32 %v6375, 7
    %v6377 = vsub.s32 %v6374, %v6376
    %v6378 = vrot.slane %v6364, %v6377
    %v6379 = vcombine.low %v6371, %v6378
    %v6380 = vcombine.low %v6083, %v6084
    %v6381 = vcombine.low %v6085, %v6086
    %v6383 = vunpack.c.l.s4 1983009808
    %v6384 = vunpack.c.0.s8 %v6383
    %v6385 = vlaneseq
    %v6386 = vshrl.u32 %v6385, 7
    %v6387 = vsub.s32 %v6384, %v6386
    %v6388 = vrot.slane %v6380, %v6387
    %v6390 = vunpack.c.l.s4 1983009808
    %v6391 = vunpack.c.0.s8 %v6390
    %v6392 = vlaneseq
    %v6393 = vshrl.u32 %v6392, 7
    %v6394 = vsub.s32 %v6391, %v6393
    %v6395 = vrot.slane %v6381, %v6394
    %v6396 = vcombine.low %v6388, %v6395
    %v6397 = vcombine.low %v6087, %v6088
    %v6398 = vcombine.low %v6089, %v6090
    %v6400 = vunpack.c.l.s4 1983009808
    %v6401 = vunpack.c.0.s8 %v6400
    %v6402 = vlaneseq
    %v6403 = vshrl.u32 %v6402, 7
    %v6404 = vsub.s32 %v6401, %v6403
    %v6405 = vrot.slane %v6397, %v6404
    %v6407 = vunpack.c.l.s4 1983009808
    %v6408 = vunpack.c.0.s8 %v6407
    %v6409 = vlaneseq
    %v6410 = vshrl.u32 %v6409, 7
    %v6411 = vsub.s32 %v6408, %v6410
    %v6412 = vrot.slane %v6398, %v6411
    %v6413 = vcombine.low %v6405, %v6412
    %v6414 = vcombine.low %v6091, %v6092
    %v6415 = vcombine.low %v6093, %v6094
    %v6417 = vunpack.c.l.s4 1983009808
    %v6418 = vunpack.c.0.s8 %v6417
    %v6419 = vlaneseq
    %v6420 = vshrl.u32 %v6419, 7
    %v6421 = vsub.s32 %v6418, %v6420
    %v6422 = vrot.slane %v6414, %v6421
    %v6424 = vunpack.c.l.s4 1983009808
    %v6425 = vunpack.c.0.s8 %v6424
    %v6426 = vlaneseq
    %v6427 = vshrl.u32 %v6426, 7
    %v6428 = vsub.s32 %v6425, %v6427
    %v6429 = vrot.slane %v6415, %v6428
    %v6430 = vcombine.low %v6422, %v6429
    %v6463 = vcombine.low %v3326, %v3327
    %v6464 = vcombine.high %v3326, %v3327
    %v6465 = vcombine.low %v3328, %v3329
    %v6466 = vcombine.high %v3328, %v3329
    %v6468 = vunpack.c.l.s4 1983009808
    %v6469 = vunpack.c.0.s8 %v6468
    %v6470 = vlaneseq
    %v6471 = vshrl.u32 %v6470, 7
    %v6472 = vsub.s32 %v6469, %v6471
    %v6473 = vrot.slane %v6463, %v6472
    %v6475 = vunpack.c.l.s4 1983009808
    %v6476 = vunpack.c.0.s8 %v6475
    %v6477 = vlaneseq
    %v6478 = vshrl.u32 %v6477, 7
    %v6479 = vsub.s32 %v6476, %v6478
    %v6480 = vrot.slane %v6464, %v6479
    %v6482 = vunpack.c.l.s4 1983009808
    %v6483 = vunpack.c.0.s8 %v6482
    %v6484 = vlaneseq
    %v6485 = vshrl.u32 %v6484, 7
    %v6486 = vsub.s32 %v6483, %v6485
    %v6487 = vrot.slane %v6465, %v6486
    %v6489 = vunpack.c.l.s4 1983009808
    %v6490 = vunpack.c.0.s8 %v6489
    %v6491 = vlaneseq
    %v6492 = vshrl.u32 %v6491, 7
    %v6493 = vsub.s32 %v6490, %v6492
    %v6494 = vrot.slane %v6466, %v6493
    %v6495 = vcombine.low %v6473, %v6487
    %v6496 = vcombine.high %v6473, %v6487
    %v6497 = vcombine.low %v6480, %v6494
    %v6498 = vcombine.high %v6480, %v6494
    %v6499 = vcombine.low %v3330, %v3331
    %v6500 = vcombine.high %v3330, %v3331
    %v6501 = vcombine.low %v3332, %v3333
    %v6502 = vcombine.high %v3332, %v3333
    %v6504 = vunpack.c.l.s4 1983009808
    %v6505 = vunpack.c.0.s8 %v6504
    %v6506 = vlaneseq
    %v6507 = vshrl.u32 %v6506, 7
    %v6508 = vsub.s32 %v6505, %v6507
    %v6509 = vrot.slane %v6499, %v6508
    %v6511 = vunpack.c.l.s4 1983009808
    %v6512 = vunpack.c.0.s8 %v6511
    %v6513 = vlaneseq
    %v6514 = vshrl.u32 %v6513, 7
    %v6515 = vsub.s32 %v6512, %v6514
    %v6516 = vrot.slane %v6500, %v6515
    %v6518 = vunpack.c.l.s4 1983009808
    %v6519 = vunpack.c.0.s8 %v6518
    %v6520 = vlaneseq
    %v6521 = vshrl.u32 %v6520, 7
    %v6522 = vsub.s32 %v6519, %v6521
    %v6523 = vrot.slane %v6501, %v6522
    %v6525 = vunpack.c.l.s4 1983009808
    %v6526 = vunpack.c.0.s8 %v6525
    %v6527 = vlaneseq
    %v6528 = vshrl.u32 %v6527, 7
    %v6529 = vsub.s32 %v6526, %v6528
    %v6530 = vrot.slane %v6502, %v6529
    %v6531 = vcombine.low %v6509, %v6523
    %v6532 = vcombine.high %v6509, %v6523
    %v6533 = vcombine.low %v6516, %v6530
    %v6534 = vcombine.high %v6516, %v6530
    %v6535 = vcombine.low %v3334, %v3335
    %v6536 = vcombine.high %v3334, %v3335
    %v6537 = vcombine.low %v3336, %v3337
    %v6538 = vcombine.high %v3336, %v3337
    %v6540 = vunpack.c.l.s4 1983009808
    %v6541 = vunpack.c.0.s8 %v6540
    %v6542 = vlaneseq
    %v6543 = vshrl.u32 %v6542, 7
    %v6544 = vsub.s32 %v6541, %v6543
    %v6545 = vrot.slane %v6535, %v6544
    %v6547 = vunpack.c.l.s4 1983009808
    %v6548 = vunpack.c.0.s8 %v6547
    %v6549 = vlaneseq
    %v6550 = vshrl.u32 %v6549, 7
    %v6551 = vsub.s32 %v6548, %v6550
    %v6552 = vrot.slane %v6536, %v6551
    %v6554 = vunpack.c.l.s4 1983009808
    %v6555 = vunpack.c.0.s8 %v6554
    %v6556 = vlaneseq
    %v6557 = vshrl.u32 %v6556, 7
    %v6558 = vsub.s32 %v6555, %v6557
    %v6559 = vrot.slane %v6537, %v6558
    %v6561 = vunpack.c.l.s4 1983009808
    %v6562 = vunpack.c.0.s8 %v6561
    %v6563 = vlaneseq
    %v6564 = vshrl.u32 %v6563, 7
    %v6565 = vsub.s32 %v6562, %v6564
    %v6566 = vrot.slane %v6538, %v6565
    %v6567 = vcombine.low %v6545, %v6559
    %v6568 = vcombine.high %v6545, %v6559
    %v6569 = vcombine.low %v6552, %v6566
    %v6570 = vcombine.high %v6552, %v6566
    %v6571 = vcombine.low %v3338, %v3339
    %v6572 = vcombine.high %v3338, %v3339
    %v6573 = vcombine.low %v3340, %v3341
    %v6574 = vcombine.high %v3340, %v3341
    %v6576 = vunpack.c.l.s4 1983009808
    %v6577 = vunpack.c.0.s8 %v6576
    %v6578 = vlaneseq
    %v6579 = vshrl.u32 %v6578, 7
    %v6580 = vsub.s32 %v6577, %v6579
    %v6581 = vrot.slane %v6571, %v6580
    %v6583 = vunpack.c.l.s4 1983009808
    %v6584 = vunpack.c.0.s8 %v6583
    %v6585 = vlaneseq
    %v6586 = vshrl.u32 %v6585, 7
    %v6587 = vsub.s32 %v6584, %v6586
    %v6588 = vrot.slane %v6572, %v6587
    %v6590 = vunpack.c.l.s4 1983009808
    %v6591 = vunpack.c.0.s8 %v6590
    %v6592 = vlaneseq
    %v6593 = vshrl.u32 %v6592, 7
    %v6594 = vsub.s32 %v6591, %v6593
    %v6595 = vrot.slane %v6573, %v6594
    %v6597 = vunpack.c.l.s4 1983009808
    %v6598 = vunpack.c.0.s8 %v6597
    %v6599 = vlaneseq
    %v6600 = vshrl.u32 %v6599, 7
    %v6601 = vsub.s32 %v6598, %v6600
    %v6602 = vrot.slane %v6574, %v6601
    %v6603 = vcombine.low %v6581, %v6595
    %v6604 = vcombine.high %v6581, %v6595
    %v6605 = vcombine.low %v6588, %v6602
    %v6606 = vcombine.high %v6588, %v6602
    %v6623 = vadd.f32 %v6175, %v6495
    %v6624 = vadd.f32 %v6192, %v6496
    %v6625 = vadd.f32 %v6209, %v6497
    %v6626 = vadd.f32 %v6226, %v6498
    %v6627 = vadd.f32 %v6243, %v6531
    %v6628 = vadd.f32 %v6260, %v6532
    %v6629 = vadd.f32 %v6277, %v6533
    %v6630 = vadd.f32 %v6294, %v6534
    %v6631 = vadd.f32 %v6311, %v6567
    %v6632 = vadd.f32 %v6328, %v6568
    %v6633 = vadd.f32 %v6345, %v6569
    %v6634 = vadd.f32 %v6362, %v6570
    %v6635 = vadd.f32 %v6379, %v6603
    %v6636 = vadd.f32 %v6396, %v6604
    %v6637 = vadd.f32 %v6413, %v6605
    %v6638 = vadd.f32 %v6430, %v6606
    %v6640 = vlaneseq
    %v6641 = vshrl.u32 %v6640, 7
    %v6642 = vsub.s32 0, %v6641
    %v6643 = vrot.slane %v3342, %v6642
    %v6644 = vlaneseq
    %v6645 = vshrl.u32 %v6644, 7
    %v6646 = vsub.s32 1, %v6645
    %v6647 = vrot.slane %v3342, %v6646
    %v6648 = vlaneseq
    %v6649 = vshrl.u32 %v6648, 7
    %v6650 = vsub.s32 2, %v6649
    %v6651 = vrot.slane %v3342, %v6650
    %v6652 = vlaneseq
    %v6653 = vshrl.u32 %v6652, 7
    %v6654 = vsub.s32 3, %v6653
    %v6655 = vrot.slane %v3342, %v6654
    %v6656 = vcombine.low %v6643, %v6647
    %v6657 = vcombine.high %v6643, %v6647
    %v6658 = vcombine.low %v6651, %v6655
    %v6659 = vcombine.high %v6651, %v6655
    %v6661 = vunpack.c.l.s4 1983009808
    %v6662 = vunpack.c.0.s8 %v6661
    %v6663 = vlaneseq
    %v6664 = vshrl.u32 %v6663, 7
    %v6665 = vsub.s32 %v6662, %v6664
    %v6666 = vrot.slane %v6656, %v6665
    %v6668 = vunpack.c.l.s4 1983009808
    %v6669 = vunpack.c.0.s8 %v6668
    %v6670 = vlaneseq
    %v6671 = vshrl.u32 %v6670, 7
    %v6672 = vsub.s32 %v6669, %v6671
    %v6673 = vrot.slane %v6657, %v6672
    %v6675 = vunpack.c.l.s4 1983009808
    %v6676 = vunpack.c.0.s8 %v6675
    %v6677 = vlaneseq
    %v6678 = vshrl.u32 %v6677, 7
    %v6679 = vsub.s32 %v6676, %v6678
    %v6680 = vrot.slane %v6658, %v6679
    %v6682 = vunpack.c.l.s4 1983009808
    %v6683 = vunpack.c.0.s8 %v6682
    %v6684 = vlaneseq
    %v6685 = vshrl.u32 %v6684, 7
    %v6686 = vsub.s32 %v6683, %v6685
    %v6687 = vrot.slane %v6659, %v6686
    %v6688 = vcombine.low %v6666, %v6680
    %v6689 = vcombine.high %v6666, %v6680
    %v6690 = vcombine.low %v6673, %v6687
    %v6691 = vcombine.high %v6673, %v6687
    %v6696 = vadd.f32 %v6623, %v6688
    %v6697 = vadd.f32 %v6624, %v6689
    %v6698 = vadd.f32 %v6625, %v6690
    %v6699 = vadd.f32 %v6626, %v6691
    %v6700 = vadd.f32 %v6627, %v6688
    %v6701 = vadd.f32 %v6628, %v6689
    %v6702 = vadd.f32 %v6629, %v6690
    %v6703 = vadd.f32 %v6630, %v6691
    %v6704 = vadd.f32 %v6631, %v6688
    %v6705 = vadd.f32 %v6632, %v6689
    %v6706 = vadd.f32 %v6633, %v6690
    %v6707 = vadd.f32 %v6634, %v6691
    %v6708 = vadd.f32 %v6635, %v6688
    %v6709 = vadd.f32 %v6636, %v6689
    %v6710 = vadd.f32 %v6637, %v6690
    %v6711 = vadd.f32 %v6638, %v6691
    %v6712 = vmax.f32 %v6696, 0.0
    %v6713 = vmax.f32 %v6697, 0.0
    %v6714 = vmax.f32 %v6698, 0.0
    %v6715 = vmax.f32 %v6699, 0.0
    %v6716 = vmax.f32 %v6700, 0.0
    %v6717 = vmax.f32 %v6701, 0.0
    %v6718 = vmax.f32 %v6702, 0.0
    %v6719 = vmax.f32 %v6703, 0.0
    %v6720 = vmax.f32 %v6704, 0.0
    %v6721 = vmax.f32 %v6705, 0.0
    %v6722 = vmax.f32 %v6706, 0.0
    %v6723 = vmax.f32 %v6707, 0.0
    %v6724 = vmax.f32 %v6708, 0.0
    %v6725 = vmax.f32 %v6709, 0.0
    %v6726 = vmax.f32 %v6710, 0.0
    %v6727 = vmax.f32 %v6711, 0.0
    %v6744 = vcombine.low %v6712, %v6713
    %v6745 = vcombine.high %v6712, %v6713
    %v6746 = vcombine.low %v6714, %v6715
    %v6747 = vcombine.high %v6714, %v6715
    %v6749 = vunpack.c.l.s4 1983009808
    %v6750 = vunpack.c.0.s8 %v6749
    %v6751 = vlaneseq
    %v6752 = vshrl.u32 %v6751, 7
    %v6753 = vsub.s32 %v6750, %v6752
    %v6754 = vrot.slane %v6744, %v6753
    %v6756 = vunpack.c.l.s4 1983009808
    %v6757 = vunpack.c.0.s8 %v6756
    %v6758 = vlaneseq
    %v6759 = vshrl.u32 %v6758, 7
    %v6760 = vsub.s32 %v6757, %v6759
    %v6761 = vrot.slane %v6745, %v6760
    %v6763 = vunpack.c.l.s4 1983009808
    %v6764 = vunpack.c.0.s8 %v6763
    %v6765 = vlaneseq
    %v6766 = vshrl.u32 %v6765, 7
    %v6767 = vsub.s32 %v6764, %v6766
    %v6768 = vrot.slane %v6746, %v6767
    %v6770 = vunpack.c.l.s4 1983009808
    %v6771 = vunpack.c.0.s8 %v6770
    %v6772 = vlaneseq
    %v6773 = vshrl.u32 %v6772, 7
    %v6774 = vsub.s32 %v6771, %v6773
    %v6775 = vrot.slane %v6747, %v6774
    %v6776 = vcombine.low %v6754, %v6768
    %v6777 = vcombine.high %v6754, %v6768
    %v6778 = vcombine.low %v6761, %v6775
    %v6779 = vcombine.high %v6761, %v6775
    %v6780 = vcombine.low %v6716, %v6717
    %v6781 = vcombine.high %v6716, %v6717
    %v6782 = vcombine.low %v6718, %v6719
    %v6783 = vcombine.high %v6718, %v6719
    %v6785 = vunpack.c.l.s4 1983009808
    %v6786 = vunpack.c.0.s8 %v6785
    %v6787 = vlaneseq
    %v6788 = vshrl.u32 %v6787, 7
    %v6789 = vsub.s32 %v6786, %v6788
    %v6790 = vrot.slane %v6780, %v6789
    %v6792 = vunpack.c.l.s4 1983009808
    %v6793 = vunpack.c.0.s8 %v6792
    %v6794 = vlaneseq
    %v6795 = vshrl.u32 %v6794, 7
    %v6796 = vsub.s32 %v6793, %v6795
    %v6797 = vrot.slane %v6781, %v6796
    %v6799 = vunpack.c.l.s4 1983009808
    %v6800 = vunpack.c.0.s8 %v6799
    %v6801 = vlaneseq
    %v6802 = vshrl.u32 %v6801, 7
    %v6803 = vsub.s32 %v6800, %v6802
    %v6804 = vrot.slane %v6782, %v6803
    %v6806 = vunpack.c.l.s4 1983009808
    %v6807 = vunpack.c.0.s8 %v6806
    %v6808 = vlaneseq
    %v6809 = vshrl.u32 %v6808, 7
    %v6810 = vsub.s32 %v6807, %v6809
    %v6811 = vrot.slane %v6783, %v6810
    %v6812 = vcombine.low %v6790, %v6804
    %v6813 = vcombine.high %v6790, %v6804
    %v6814 = vcombine.low %v6797, %v6811
    %v6815 = vcombine.high %v6797, %v6811
    %v6816 = vcombine.low %v6720, %v6721
    %v6817 = vcombine.high %v6720, %v6721
    %v6818 = vcombine.low %v6722, %v6723
    %v6819 = vcombine.high %v6722, %v6723
    %v6821 = vunpack.c.l.s4 1983009808
    %v6822 = vunpack.c.0.s8 %v6821
    %v6823 = vlaneseq
    %v6824 = vshrl.u32 %v6823, 7
    %v6825 = vsub.s32 %v6822, %v6824
    %v6826 = vrot.slane %v6816, %v6825
    %v6828 = vunpack.c.l.s4 1983009808
    %v6829 = vunpack.c.0.s8 %v6828
    %v6830 = vlaneseq
    %v6831 = vshrl.u32 %v6830, 7
    %v6832 = vsub.s32 %v6829, %v6831
    %v6833 = vrot.slane %v6817, %v6832
    %v6835 = vunpack.c.l.s4 1983009808
    %v6836 = vunpack.c.0.s8 %v6835
    %v6837 = vlaneseq
    %v6838 = vshrl.u32 %v6837, 7
    %v6839 = vsub.s32 %v6836, %v6838
    %v6840 = vrot.slane %v6818, %v6839
    %v6842 = vunpack.c.l.s4 1983009808
    %v6843 = vunpack.c.0.s8 %v6842
    %v6844 = vlaneseq
    %v6845 = vshrl.u32 %v6844, 7
    %v6846 = vsub.s32 %v6843, %v6845
    %v6847 = vrot.slane %v6819, %v6846
    %v6848 = vcombine.low %v6826, %v6840
    %v6849 = vcombine.high %v6826, %v6840
    %v6850 = vcombine.low %v6833, %v6847
    %v6851 = vcombine.high %v6833, %v6847
    %v6852 = vcombine.low %v6724, %v6725
    %v6853 = vcombine.high %v6724, %v6725
    %v6854 = vcombine.low %v6726, %v6727
    %v6855 = vcombine.high %v6726, %v6727
    %v6857 = vunpack.c.l.s4 1983009808
    %v6858 = vunpack.c.0.s8 %v6857
    %v6859 = vlaneseq
    %v6860 = vshrl.u32 %v6859, 7
    %v6861 = vsub.s32 %v6858, %v6860
    %v6862 = vrot.slane %v6852, %v6861
    %v6864 = vunpack.c.l.s4 1983009808
    %v6865 = vunpack.c.0.s8 %v6864
    %v6866 = vlaneseq
    %v6867 = vshrl.u32 %v6866, 7
    %v6868 = vsub.s32 %v6865, %v6867
    %v6869 = vrot.slane %v6853, %v6868
    %v6871 = vunpack.c.l.s4 1983009808
    %v6872 = vunpack.c.0.s8 %v6871
    %v6873 = vlaneseq
    %v6874 = vshrl.u32 %v6873, 7
    %v6875 = vsub.s32 %v6872, %v6874
    %v6876 = vrot.slane %v6854, %v6875
    %v6878 = vunpack.c.l.s4 1983009808
    %v6879 = vunpack.c.0.s8 %v6878
    %v6880 = vlaneseq
    %v6881 = vshrl.u32 %v6880, 7
    %v6882 = vsub.s32 %v6879, %v6881
    %v6883 = vrot.slane %v6855, %v6882
    %v6884 = vcombine.low %v6862, %v6876
    %v6885 = vcombine.high %v6862, %v6876
    %v6886 = vcombine.low %v6869, %v6883
    %v6887 = vcombine.high %v6869, %v6883
    %6904 = vst [vmem:[%s13] sm:$0xff] %v6776
    %6905 = vst [vmem:[%s13 + $0x8] sm:$0xff] %v6777
    %6906 = vst [vmem:[%s13 + $0x10] sm:$0xff] %v6778
    %6907 = vst [vmem:[%s13 + $0x18] sm:$0xff] %v6779
    %6908 = vst [vmem:[%s13 + $0x20] sm:$0xff] %v6812
    %6909 = vst [vmem:[%s13 + $0x28] sm:$0xff] %v6813
    %6910 = vst [vmem:[%s13 + $0x30] sm:$0xff] %v6814
    %6911 = vst [vmem:[%s13 + $0x38] sm:$0xff] %v6815
    %6912 = vst [vmem:[%s13 + $0x40] sm:$0xff] %v6848
    %6913 = vst [vmem:[%s13 + $0x48] sm:$0xff] %v6849
    %6914 = vst [vmem:[%s13 + $0x50] sm:$0xff] %v6850
    %6915 = vst [vmem:[%s13 + $0x58] sm:$0xff] %v6851
    %6916 = vst [vmem:[%s13 + $0x60] sm:$0xff] %v6884
    %6917 = vst [vmem:[%s13 + $0x68] sm:$0xff] %v6885
    %6918 = vst [vmem:[%s13 + $0x70] sm:$0xff] %v6886
    %6919 = vst [vmem:[%s13 + $0x78] sm:$0xff] %v6887
    // Predicated region
    $region70: #{fpn_forward.1} parent=1 // pred_check
      _
    $region71: #{fpn_forward.1} parent=1 // pred_check_branch
      %6921 = sbr.rel (0) target = $region73
    $region72: #{fpn_forward.1} parent=1 // pred_region
      _
    $region73: #{fpn_forward.1} parent=1 // pred_fallthru
      _
    // Predicated region
    $region74: #{fpn_forward.1} parent=1 // pred_check
      _
    $region75: #{fpn_forward.1} parent=1 // pred_check_branch
      %6923 = sbr.rel (0) target = $region77
    $region76: #{fpn_forward.1} parent=1 // pred_region
      _
    $region77: #{fpn_forward.1} parent=1 // pred_fallthru
      _
    %6924 = vsyncpa [#allocation3], 1
    %6925 = vsyncpa [#allocation5], 1
    %6926 = vsyncpa [#allocation8], 1

</llo_original>
